<compile_context>
chip_gen: v7x
topology: tpu7x:2x2x1
jax: 0.10.0
libtpu: 0.0.40
codegen_flags: <defaults>
</compile_context>

<pallas_src>
import jax
import jax.numpy as jnp
from jax.experimental import pallas as pl
from jax.experimental.pallas import tpu as pltpu


def make_upsample_kernel(H, W, C):
    HW = H * W

    def kernel(xs_ref, wc_ref, b_ref, o_ref):
        # xs_ref: (3, H+2, W, C)   column-pre-shifted zero-padded input, one
        #                          sample: xs_ref[s, r, c, :] == x_pad[r, c+s, :]
        # wc_ref: (4, 4, C, C)     combined weights [phase, 2x2-term, C_in, C_out]
        # b_ref : (1, C)           conv bias
        # o_ref : (H, 2, W, 2*C)   o[r, pr, c, pc*C+ch] = y[2r+pr, 2c+pc, ch]
        bias = b_ref[...]                                   # (1, C), broadcasts
        for pr in range(2):
            for pc in range(2):
                phase = pr * 2 + pc
                acc = None                                  # first dot assigns
                for a in range(2):
                    for b2 in range(2):
                        # Aligned leading-dim row slice of a pre-shifted copy:
                        # sublane offset (pr+a)*W is a multiple of 8, and the
                        # (H, W, C) -> (HW, C) reshape is layout-free.
                        win = xs_ref[pc + b2, pr + a:pr + a + H, :, :]
                        term = jnp.dot(win.reshape(HW, C),
                                       wc_ref[phase, a * 2 + b2, :, :],
                                       preferred_element_type=jnp.float32)
                        acc = term if acc is None else acc + term
                # Full, unmasked, 128-lane-aligned store (pc*C = vreg boundary).
                o_ref[:, pr, :, pc * C:(pc + 1) * C] = (acc + bias).reshape(H, W, C)

    return kernel


def _combined_weights(w):
    """w: (C_out, C_in, 3, 3) torch-layout conv kernel -> (4, 4, C_in, C_out).

    For output phase (pr, pc) (row/col parity of the 2x-upsampled output) and
    2x2 term (a, b2) over the original-resolution (padded) input, the fused
    weight is the sum of the 3x3 taps in TAPS[parity][term].  Derivation: with
    nearest 2x upsampling, output row p = 2r+pr reads upsampled rows p-1,p,p+1,
    which map back to original rows {r-1 (tap 0), r (taps 1,2)} for pr=0 and
    {r (taps 0,1), r+1 (tap 2)} for pr=1 (identically for columns).
    """
    TAPS = {0: ((0,), (1, 2)), 1: ((0, 1), (2,))}
    phases = []
    for pr in range(2):
        for pc in range(2):
            terms = []
            for a in range(2):
                for b2 in range(2):
                    acc = None
                    for ki in TAPS[pr][a]:
                        for kj in TAPS[pc][b2]:
                            tap = w[:, :, ki, kj]           # (C_out, C_in)
                            acc = tap if acc is None else acc + tap
                    terms.append(jnp.transpose(acc))        # (C_in, C_out)
            phases.append(jnp.stack(terms, axis=0))         # (4, C, C)
    return jnp.stack(phases, axis=0)                        # (4, 4, C, C)


def prepare_upsample_params(w, b):
    """One-time parameter preparation (hoisted out of the per-call path)."""
    wcomb = _combined_weights(jnp.asarray(w, jnp.float32))   # (4, 4, C, C)
    bias2d = jnp.asarray(b, jnp.float32).reshape(1, -1)      # (1, C)
    return wcomb, bias2d


def _upsample_apply(x_nchw, wcomb, bias2d):
    """x_nchw: (B, C, H, W) f32. Returns (B, C, 2H, 2W) f32."""
    B, C, H, W = x_nchw.shape

    # NCHW -> channels-last, zero-pad once, build the 3 column-shifted copies.
    x_nhwc = jnp.transpose(x_nchw, (0, 2, 3, 1))
    x_pad = jnp.pad(x_nhwc, ((0, 0), (1, 1), (1, 1), (0, 0)))
    xs = jnp.stack([x_pad[:, :, s:s + W, :] for s in range(3)], axis=1)
    # xs: (B, 3, H+2, W, C)

    kernel = make_upsample_kernel(H, W, C)

    flops = 2 * 16 * H * W * C * C * B            # 16 (HW,C)x(C,C) matmuls/sample
    bytes_accessed = 4 * (B * 3 * (H + 2) * W * C       # pre-shifted input
                          + 4 * 4 * C * C + C           # weights + bias
                          + B * H * 2 * W * 2 * C)      # output

    out = pl.pallas_call(
        kernel,
        out_shape=jax.ShapeDtypeStruct((B, H, 2, W, 2 * C), jnp.float32),
        grid_spec=pltpu.PrefetchScalarGridSpec(
            num_scalar_prefetch=0,
            grid=(B,),
            in_specs=[
                pl.BlockSpec((None, 3, H + 2, W, C),
                             lambda i: (i, 0, 0, 0, 0)),       # pre-shifted x
                pl.BlockSpec((4, 4, C, C),
                             lambda i: (0, 0, 0, 0)),          # combined weights
                pl.BlockSpec((1, C), lambda i: (0, 0)),        # bias
            ],
            out_specs=pl.BlockSpec((None, H, 2, W, 2 * C),
                                   lambda i: (i, 0, 0, 0, 0)),
        ),
        compiler_params=pltpu.CompilerParams(
            dimension_semantics=("parallel",)),
        cost_estimate=pl.CostEstimate(flops=flops, transcendentals=0,
                                      bytes_accessed=bytes_accessed),
    )(xs, wcomb, bias2d)

    # Phase interleave is a FREE reshape; only NHWC -> NCHW remains.
    y_nhwc = out.reshape(B, 2 * H, 2 * W, C)
    return jnp.transpose(y_nhwc, (0, 3, 1, 2))


upsample_apply = jax.jit(_upsample_apply)


def upsample_ref(x, w, b):
    """Pure-JAX reference matching the PyTorch module."""
    u = jnp.repeat(jnp.repeat(x, 2, axis=2), 2, axis=3)          # nearest 2x
    y = jax.lax.conv_general_dilated(
        u, w, window_strides=(1, 1), padding=((1, 1), (1, 1)),
        dimension_numbers=("NCHW", "OIHW", "NCHW"),
        precision=jax.lax.Precision.HIGHEST)
    return y + b[None, :, None, None]


if __name__ == "__main__":
    # VQGAN-style channel count (C = 128 keeps every vreg lane-dense); small spatial.
    B, C, H, W = 2, 128, 16, 16

    key = jax.random.PRNGKey(0)
    kx, kw, kb = jax.random.split(key, 3)

    x = jax.random.normal(kx, (B, C, H, W), dtype=jnp.float32)
    w = 0.05 * jax.random.normal(kw, (C, C, 3, 3), dtype=jnp.float32)
    b = 0.10 * jax.random.normal(kb, (C,), dtype=jnp.float32)

    # Parameter prep happens once, not per call.
    wcomb, bias2d = jax.block_until_ready(prepare_upsample_params(w, b))

    out = jax.block_until_ready(upsample_apply(x, wcomb, bias2d))
    ref = jax.block_until_ready(upsample_ref(x, w, b))

    assert out.shape == (B, C, 2 * H, 2 * W)
    import numpy as np
    np.testing.assert_allclose(np.asarray(out), np.asarray(ref),
                               rtol=1e-4, atol=1e-4)
    print("KERNEL_OK")
</pallas_src>

<mosaic_0001>
module attributes {stable_mosaic.version = 11 : i64} {
  func.func @kernel(%arg0: i32, %arg1: memref<1x3x18x16x128xf32, #tpu.memory_space<vmem>>, %arg2: memref<4x4x128x128xf32, #tpu.memory_space<vmem>>, %arg3: memref<1x128xf32, #tpu.memory_space<vmem>>, %arg4: memref<1x16x2x16x256xf32, #tpu.memory_space<vmem>>) attributes {dimension_semantics = [#tpu.dimension_semantics<parallel>], iteration_bounds = array<i64: 2>, scalar_prefetch = 0 : i64, scratch_operands = 0 : i64, tpu.core_type = #tpu.core_type<tc>, window_params = [{transform_indices = @transform_0, window_bounds = array<i64: 1, 3, 18, 16, 128>}, {pipeline_mode = #tpu.pipeline_mode<synchronous>, transform_indices = @transform_1, window_bounds = array<i64: 4, 4, 128, 128>}, {pipeline_mode = #tpu.pipeline_mode<synchronous>, transform_indices = @transform_2, window_bounds = array<i64: 1, 128>}, {transform_indices = @transform_3, window_bounds = array<i64: 1, 16, 2, 16, 256>}]} {
    %c0 = arith.constant 0 : index
    %c0_0 = arith.constant 0 : index
    %0 = vector.load %arg3[%c0, %c0_0] : memref<1x128xf32, #tpu.memory_space<vmem>>, vector<1x128xf32>
    %c0_1 = arith.constant 0 : index
    %c0_2 = arith.constant 0 : index
    %c0_3 = arith.constant 0 : index
    %c0_4 = arith.constant 0 : index
    %c0_5 = arith.constant 0 : index
    %1 = vector.load %arg1[%c0_1, %c0_2, %c0_3, %c0_4, %c0_5] : memref<1x3x18x16x128xf32, #tpu.memory_space<vmem>>, vector<1x1x16x16x128xf32>
    %2 = vector.shape_cast %1 : vector<1x1x16x16x128xf32> to vector<16x16x128xf32>
    %3 = vector.shape_cast %2 : vector<16x16x128xf32> to vector<256x128xf32>
    %c0_6 = arith.constant 0 : index
    %c0_7 = arith.constant 0 : index
    %c0_8 = arith.constant 0 : index
    %c0_9 = arith.constant 0 : index
    %4 = vector.load %arg2[%c0_6, %c0_7, %c0_8, %c0_9] : memref<4x4x128x128xf32, #tpu.memory_space<vmem>>, vector<1x1x128x128xf32>
    %5 = vector.shape_cast %4 : vector<1x1x128x128xf32> to vector<128x128xf32>
    %cst = arith.constant dense<0.000000e+00> : vector<256x128xf32>
    %6 = tpu.matmul %3, %5, %cst {dimension_numbers = #tpu.dot_dimension_numbers<[1], [0], [0], [1], [0, 0, 1, 1], [], []>} : vector<256x128xf32>, vector<128x128xf32>, vector<256x128xf32> -> vector<256x128xf32>
    %c0_10 = arith.constant 0 : index
    %c1 = arith.constant 1 : index
    %c0_11 = arith.constant 0 : index
    %c0_12 = arith.constant 0 : index
    %c0_13 = arith.constant 0 : index
    %7 = vector.load %arg1[%c0_10, %c1, %c0_11, %c0_12, %c0_13] : memref<1x3x18x16x128xf32, #tpu.memory_space<vmem>>, vector<1x1x16x16x128xf32>
    %8 = vector.shape_cast %7 : vector<1x1x16x16x128xf32> to vector<16x16x128xf32>
    %9 = vector.shape_cast %8 : vector<16x16x128xf32> to vector<256x128xf32>
    %c0_14 = arith.constant 0 : index
    %c1_15 = arith.constant 1 : index
    %c0_16 = arith.constant 0 : index
    %c0_17 = arith.constant 0 : index
    %10 = vector.load %arg2[%c0_14, %c1_15, %c0_16, %c0_17] : memref<4x4x128x128xf32, #tpu.memory_space<vmem>>, vector<1x1x128x128xf32>
    %11 = vector.shape_cast %10 : vector<1x1x128x128xf32> to vector<128x128xf32>
    %cst_18 = arith.constant dense<0.000000e+00> : vector<256x128xf32>
    %12 = tpu.matmul %9, %11, %cst_18 {dimension_numbers = #tpu.dot_dimension_numbers<[1], [0], [0], [1], [0, 0, 1, 1], [], []>} : vector<256x128xf32>, vector<128x128xf32>, vector<256x128xf32> -> vector<256x128xf32>
    %13 = arith.addf %6, %12 : vector<256x128xf32>
    %c0_19 = arith.constant 0 : index
    %c0_20 = arith.constant 0 : index
    %c1_21 = arith.constant 1 : index
    %c0_22 = arith.constant 0 : index
    %c0_23 = arith.constant 0 : index
    %14 = vector.load %arg1[%c0_19, %c0_20, %c1_21, %c0_22, %c0_23] : memref<1x3x18x16x128xf32, #tpu.memory_space<vmem>>, vector<1x1x16x16x128xf32>
    %15 = vector.shape_cast %14 : vector<1x1x16x16x128xf32> to vector<16x16x128xf32>
    %16 = vector.shape_cast %15 : vector<16x16x128xf32> to vector<256x128xf32>
    %c0_24 = arith.constant 0 : index
    %c2 = arith.constant 2 : index
    %c0_25 = arith.constant 0 : index
    %c0_26 = arith.constant 0 : index
    %17 = vector.load %arg2[%c0_24, %c2, %c0_25, %c0_26] : memref<4x4x128x128xf32, #tpu.memory_space<vmem>>, vector<1x1x128x128xf32>
    %18 = vector.shape_cast %17 : vector<1x1x128x128xf32> to vector<128x128xf32>
    %cst_27 = arith.constant dense<0.000000e+00> : vector<256x128xf32>
    %19 = tpu.matmul %16, %18, %cst_27 {dimension_numbers = #tpu.dot_dimension_numbers<[1], [0], [0], [1], [0, 0, 1, 1], [], []>} : vector<256x128xf32>, vector<128x128xf32>, vector<256x128xf32> -> vector<256x128xf32>
    %20 = arith.addf %13, %19 : vector<256x128xf32>
    %c0_28 = arith.constant 0 : index
    %c1_29 = arith.constant 1 : index
    %c1_30 = arith.constant 1 : index
    %c0_31 = arith.constant 0 : index
    %c0_32 = arith.constant 0 : index
    %21 = vector.load %arg1[%c0_28, %c1_29, %c1_30, %c0_31, %c0_32] : memref<1x3x18x16x128xf32, #tpu.memory_space<vmem>>, vector<1x1x16x16x128xf32>
    %22 = vector.shape_cast %21 : vector<1x1x16x16x128xf32> to vector<16x16x128xf32>
    %23 = vector.shape_cast %22 : vector<16x16x128xf32> to vector<256x128xf32>
    %c0_33 = arith.constant 0 : index
    %c3 = arith.constant 3 : index
    %c0_34 = arith.constant 0 : index
    %c0_35 = arith.constant 0 : index
    %24 = vector.load %arg2[%c0_33, %c3, %c0_34, %c0_35] : memref<4x4x128x128xf32, #tpu.memory_space<vmem>>, vector<1x1x128x128xf32>
    %25 = vector.shape_cast %24 : vector<1x1x128x128xf32> to vector<128x128xf32>
    %cst_36 = arith.constant dense<0.000000e+00> : vector<256x128xf32>
    %26 = tpu.matmul %23, %25, %cst_36 {dimension_numbers = #tpu.dot_dimension_numbers<[1], [0], [0], [1], [0, 0, 1, 1], [], []>} : vector<256x128xf32>, vector<128x128xf32>, vector<256x128xf32> -> vector<256x128xf32>
    %27 = arith.addf %20, %26 : vector<256x128xf32>
    %28 = vector.broadcast %0 : vector<1x128xf32> to vector<256x128xf32>
    %29 = arith.addf %27, %28 : vector<256x128xf32>
    %30 = vector.shape_cast %29 : vector<256x128xf32> to vector<16x16x128xf32>
    %c0_37 = arith.constant 0 : index
    %c0_38 = arith.constant 0 : index
    %c0_39 = arith.constant 0 : index
    %c0_40 = arith.constant 0 : index
    %c0_41 = arith.constant 0 : index
    %31 = vector.load %arg4[%c0_37, %c0_38, %c0_39, %c0_40, %c0_41] : memref<1x16x2x16x256xf32, #tpu.memory_space<vmem>>, vector<1x16x1x16x128xf32>
    %32 = vector.shape_cast %31 : vector<1x16x1x16x128xf32> to vector<16x16x128xf32>
    %33 = vector.shape_cast %30 : vector<16x16x128xf32> to vector<1x16x1x16x128xf32>
    tpu.vector_store %arg4[%c0_37, %c0_38, %c0_39, %c0_40, %c0_41], %33 {strides = array<i32>} : memref<1x16x2x16x256xf32, #tpu.memory_space<vmem>>, vector<1x16x1x16x128xf32>,
    %c0_42 = arith.constant 0 : index
    %c1_43 = arith.constant 1 : index
    %c0_44 = arith.constant 0 : index
    %c0_45 = arith.constant 0 : index
    %c0_46 = arith.constant 0 : index
    %34 = vector.load %arg1[%c0_42, %c1_43, %c0_44, %c0_45, %c0_46] : memref<1x3x18x16x128xf32, #tpu.memory_space<vmem>>, vector<1x1x16x16x128xf32>
    %35 = vector.shape_cast %34 : vector<1x1x16x16x128xf32> to vector<16x16x128xf32>
    %36 = vector.shape_cast %35 : vector<16x16x128xf32> to vector<256x128xf32>
    %c1_47 = arith.constant 1 : index
    %c0_48 = arith.constant 0 : index
    %c0_49 = arith.constant 0 : index
    %c0_50 = arith.constant 0 : index
    %37 = vector.load %arg2[%c1_47, %c0_48, %c0_49, %c0_50] : memref<4x4x128x128xf32, #tpu.memory_space<vmem>>, vector<1x1x128x128xf32>
    %38 = vector.shape_cast %37 : vector<1x1x128x128xf32> to vector<128x128xf32>
    %cst_51 = arith.constant dense<0.000000e+00> : vector<256x128xf32>
    %39 = tpu.matmul %36, %38, %cst_51 {dimension_numbers = #tpu.dot_dimension_numbers<[1], [0], [0], [1], [0, 0, 1, 1], [], []>} : vector<256x128xf32>, vector<128x128xf32>, vector<256x128xf32> -> vector<256x128xf32>
    %c0_52 = arith.constant 0 : index
    %c2_53 = arith.constant 2 : index
    %c0_54 = arith.constant 0 : index
    %c0_55 = arith.constant 0 : index
    %c0_56 = arith.constant 0 : index
    %40 = vector.load %arg1[%c0_52, %c2_53, %c0_54, %c0_55, %c0_56] : memref<1x3x18x16x128xf32, #tpu.memory_space<vmem>>, vector<1x1x16x16x128xf32>
    %41 = vector.shape_cast %40 : vector<1x1x16x16x128xf32> to vector<16x16x128xf32>
    %42 = vector.shape_cast %41 : vector<16x16x128xf32> to vector<256x128xf32>
    %c1_57 = arith.constant 1 : index
    %c1_58 = arith.constant 1 : index
    %c0_59 = arith.constant 0 : index
    %c0_60 = arith.constant 0 : index
    %43 = vector.load %arg2[%c1_57, %c1_58, %c0_59, %c0_60] : memref<4x4x128x128xf32, #tpu.memory_space<vmem>>, vector<1x1x128x128xf32>
    %44 = vector.shape_cast %43 : vector<1x1x128x128xf32> to vector<128x128xf32>
    %cst_61 = arith.constant dense<0.000000e+00> : vector<256x128xf32>
    %45 = tpu.matmul %42, %44, %cst_61 {dimension_numbers = #tpu.dot_dimension_numbers<[1], [0], [0], [1], [0, 0, 1, 1], [], []>} : vector<256x128xf32>, vector<128x128xf32>, vector<256x128xf32> -> vector<256x128xf32>
    %46 = arith.addf %39, %45 : vector<256x128xf32>
    %c0_62 = arith.constant 0 : index
    %c1_63 = arith.constant 1 : index
    %c1_64 = arith.constant 1 : index
    %c0_65 = arith.constant 0 : index
    %c0_66 = arith.constant 0 : index
    %47 = vector.load %arg1[%c0_62, %c1_63, %c1_64, %c0_65, %c0_66] : memref<1x3x18x16x128xf32, #tpu.memory_space<vmem>>, vector<1x1x16x16x128xf32>
    %48 = vector.shape_cast %47 : vector<1x1x16x16x128xf32> to vector<16x16x128xf32>
    %49 = vector.shape_cast %48 : vector<16x16x128xf32> to vector<256x128xf32>
    %c1_67 = arith.constant 1 : index
    %c2_68 = arith.constant 2 : index
    %c0_69 = arith.constant 0 : index
    %c0_70 = arith.constant 0 : index
    %50 = vector.load %arg2[%c1_67, %c2_68, %c0_69, %c0_70] : memref<4x4x128x128xf32, #tpu.memory_space<vmem>>, vector<1x1x128x128xf32>
    %51 = vector.shape_cast %50 : vector<1x1x128x128xf32> to vector<128x128xf32>
    %cst_71 = arith.constant dense<0.000000e+00> : vector<256x128xf32>
    %52 = tpu.matmul %49, %51, %cst_71 {dimension_numbers = #tpu.dot_dimension_numbers<[1], [0], [0], [1], [0, 0, 1, 1], [], []>} : vector<256x128xf32>, vector<128x128xf32>, vector<256x128xf32> -> vector<256x128xf32>
    %53 = arith.addf %46, %52 : vector<256x128xf32>
    %c0_72 = arith.constant 0 : index
    %c2_73 = arith.constant 2 : index
    %c1_74 = arith.constant 1 : index
    %c0_75 = arith.constant 0 : index
    %c0_76 = arith.constant 0 : index
    %54 = vector.load %arg1[%c0_72, %c2_73, %c1_74, %c0_75, %c0_76] : memref<1x3x18x16x128xf32, #tpu.memory_space<vmem>>, vector<1x1x16x16x128xf32>
    %55 = vector.shape_cast %54 : vector<1x1x16x16x128xf32> to vector<16x16x128xf32>
    %56 = vector.shape_cast %55 : vector<16x16x128xf32> to vector<256x128xf32>
    %c1_77 = arith.constant 1 : index
    %c3_78 = arith.constant 3 : index
    %c0_79 = arith.constant 0 : index
    %c0_80 = arith.constant 0 : index
    %57 = vector.load %arg2[%c1_77, %c3_78, %c0_79, %c0_80] : memref<4x4x128x128xf32, #tpu.memory_space<vmem>>, vector<1x1x128x128xf32>
    %58 = vector.shape_cast %57 : vector<1x1x128x128xf32> to vector<128x128xf32>
    %cst_81 = arith.constant dense<0.000000e+00> : vector<256x128xf32>
    %59 = tpu.matmul %56, %58, %cst_81 {dimension_numbers = #tpu.dot_dimension_numbers<[1], [0], [0], [1], [0, 0, 1, 1], [], []>} : vector<256x128xf32>, vector<128x128xf32>, vector<256x128xf32> -> vector<256x128xf32>
    %60 = arith.addf %53, %59 : vector<256x128xf32>
    %61 = vector.broadcast %0 : vector<1x128xf32> to vector<256x128xf32>
    %62 = arith.addf %60, %61 : vector<256x128xf32>
    %63 = vector.shape_cast %62 : vector<256x128xf32> to vector<16x16x128xf32>
    %c0_82 = arith.constant 0 : index
    %c0_83 = arith.constant 0 : index
    %c0_84 = arith.constant 0 : index
    %c0_85 = arith.constant 0 : index
    %c128 = arith.constant 128 : index
    %64 = vector.load %arg4[%c0_82, %c0_83, %c0_84, %c0_85, %c128] : memref<1x16x2x16x256xf32, #tpu.memory_space<vmem>>, vector<1x16x1x16x128xf32>
    %65 = vector.shape_cast %64 : vector<1x16x1x16x128xf32> to vector<16x16x128xf32>
    %66 = vector.shape_cast %63 : vector<16x16x128xf32> to vector<1x16x1x16x128xf32>
    tpu.vector_store %arg4[%c0_82, %c0_83, %c0_84, %c0_85, %c128], %66 {strides = array<i32>} : memref<1x16x2x16x256xf32, #tpu.memory_space<vmem>>, vector<1x16x1x16x128xf32>,
    %c0_86 = arith.constant 0 : index
    %c0_87 = arith.constant 0 : index
    %c1_88 = arith.constant 1 : index
    %c0_89 = arith.constant 0 : index
    %c0_90 = arith.constant 0 : index
    %67 = vector.load %arg1[%c0_86, %c0_87, %c1_88, %c0_89, %c0_90] : memref<1x3x18x16x128xf32, #tpu.memory_space<vmem>>, vector<1x1x16x16x128xf32>
    %68 = vector.shape_cast %67 : vector<1x1x16x16x128xf32> to vector<16x16x128xf32>
    %69 = vector.shape_cast %68 : vector<16x16x128xf32> to vector<256x128xf32>
    %c2_91 = arith.constant 2 : index
    %c0_92 = arith.constant 0 : index
    %c0_93 = arith.constant 0 : index
    %c0_94 = arith.constant 0 : index
    %70 = vector.load %arg2[%c2_91, %c0_92, %c0_93, %c0_94] : memref<4x4x128x128xf32, #tpu.memory_space<vmem>>, vector<1x1x128x128xf32>
    %71 = vector.shape_cast %70 : vector<1x1x128x128xf32> to vector<128x128xf32>
    %cst_95 = arith.constant dense<0.000000e+00> : vector<256x128xf32>
    %72 = tpu.matmul %69, %71, %cst_95 {dimension_numbers = #tpu.dot_dimension_numbers<[1], [0], [0], [1], [0, 0, 1, 1], [], []>} : vector<256x128xf32>, vector<128x128xf32>, vector<256x128xf32> -> vector<256x128xf32>
    %c0_96 = arith.constant 0 : index
    %c1_97 = arith.constant 1 : index
    %c1_98 = arith.constant 1 : index
    %c0_99 = arith.constant 0 : index
    %c0_100 = arith.constant 0 : index
    %73 = vector.load %arg1[%c0_96, %c1_97, %c1_98, %c0_99, %c0_100] : memref<1x3x18x16x128xf32, #tpu.memory_space<vmem>>, vector<1x1x16x16x128xf32>
    %74 = vector.shape_cast %73 : vector<1x1x16x16x128xf32> to vector<16x16x128xf32>
    %75 = vector.shape_cast %74 : vector<16x16x128xf32> to vector<256x128xf32>
    %c2_101 = arith.constant 2 : index
    %c1_102 = arith.constant 1 : index
    %c0_103 = arith.constant 0 : index
    %c0_104 = arith.constant 0 : index
    %76 = vector.load %arg2[%c2_101, %c1_102, %c0_103, %c0_104] : memref<4x4x128x128xf32, #tpu.memory_space<vmem>>, vector<1x1x128x128xf32>
    %77 = vector.shape_cast %76 : vector<1x1x128x128xf32> to vector<128x128xf32>
    %cst_105 = arith.constant dense<0.000000e+00> : vector<256x128xf32>
    %78 = tpu.matmul %75, %77, %cst_105 {dimension_numbers = #tpu.dot_dimension_numbers<[1], [0], [0], [1], [0, 0, 1, 1], [], []>} : vector<256x128xf32>, vector<128x128xf32>, vector<256x128xf32> -> vector<256x128xf32>
    %79 = arith.addf %72, %78 : vector<256x128xf32>
    %c0_106 = arith.constant 0 : index
    %c0_107 = arith.constant 0 : index
    %c2_108 = arith.constant 2 : index
    %c0_109 = arith.constant 0 : index
    %c0_110 = arith.constant 0 : index
    %80 = vector.load %arg1[%c0_106, %c0_107, %c2_108, %c0_109, %c0_110] : memref<1x3x18x16x128xf32, #tpu.memory_space<vmem>>, vector<1x1x16x16x128xf32>
    %81 = vector.shape_cast %80 : vector<1x1x16x16x128xf32> to vector<16x16x128xf32>
    %82 = vector.shape_cast %81 : vector<16x16x128xf32> to vector<256x128xf32>
    %c2_111 = arith.constant 2 : index
    %c2_112 = arith.constant 2 : index
    %c0_113 = arith.constant 0 : index
    %c0_114 = arith.constant 0 : index
    %83 = vector.load %arg2[%c2_111, %c2_112, %c0_113, %c0_114] : memref<4x4x128x128xf32, #tpu.memory_space<vmem>>, vector<1x1x128x128xf32>
    %84 = vector.shape_cast %83 : vector<1x1x128x128xf32> to vector<128x128xf32>
    %cst_115 = arith.constant dense<0.000000e+00> : vector<256x128xf32>
    %85 = tpu.matmul %82, %84, %cst_115 {dimension_numbers = #tpu.dot_dimension_numbers<[1], [0], [0], [1], [0, 0, 1, 1], [], []>} : vector<256x128xf32>, vector<128x128xf32>, vector<256x128xf32> -> vector<256x128xf32>
    %86 = arith.addf %79, %85 : vector<256x128xf32>
    %c0_116 = arith.constant 0 : index
    %c1_117 = arith.constant 1 : index
    %c2_118 = arith.constant 2 : index
    %c0_119 = arith.constant 0 : index
    %c0_120 = arith.constant 0 : index
    %87 = vector.load %arg1[%c0_116, %c1_117, %c2_118, %c0_119, %c0_120] : memref<1x3x18x16x128xf32, #tpu.memory_space<vmem>>, vector<1x1x16x16x128xf32>
    %88 = vector.shape_cast %87 : vector<1x1x16x16x128xf32> to vector<16x16x128xf32>
    %89 = vector.shape_cast %88 : vector<16x16x128xf32> to vector<256x128xf32>
    %c2_121 = arith.constant 2 : index
    %c3_122 = arith.constant 3 : index
    %c0_123 = arith.constant 0 : index
    %c0_124 = arith.constant 0 : index
    %90 = vector.load %arg2[%c2_121, %c3_122, %c0_123, %c0_124] : memref<4x4x128x128xf32, #tpu.memory_space<vmem>>, vector<1x1x128x128xf32>
    %91 = vector.shape_cast %90 : vector<1x1x128x128xf32> to vector<128x128xf32>
    %cst_125 = arith.constant dense<0.000000e+00> : vector<256x128xf32>
    %92 = tpu.matmul %89, %91, %cst_125 {dimension_numbers = #tpu.dot_dimension_numbers<[1], [0], [0], [1], [0, 0, 1, 1], [], []>} : vector<256x128xf32>, vector<128x128xf32>, vector<256x128xf32> -> vector<256x128xf32>
    %93 = arith.addf %86, %92 : vector<256x128xf32>
    %94 = vector.broadcast %0 : vector<1x128xf32> to vector<256x128xf32>
    %95 = arith.addf %93, %94 : vector<256x128xf32>
    %96 = vector.shape_cast %95 : vector<256x128xf32> to vector<16x16x128xf32>
    %c0_126 = arith.constant 0 : index
    %c0_127 = arith.constant 0 : index
    %c1_128 = arith.constant 1 : index
    %c0_129 = arith.constant 0 : index
    %c0_130 = arith.constant 0 : index
    %97 = vector.load %arg4[%c0_126, %c0_127, %c1_128, %c0_129, %c0_130] : memref<1x16x2x16x256xf32, #tpu.memory_space<vmem>>, vector<1x16x1x16x128xf32>
    %98 = vector.shape_cast %97 : vector<1x16x1x16x128xf32> to vector<16x16x128xf32>
    %99 = vector.shape_cast %96 : vector<16x16x128xf32> to vector<1x16x1x16x128xf32>
    tpu.vector_store %arg4[%c0_126, %c0_127, %c1_128, %c0_129, %c0_130], %99 {strides = array<i32>} : memref<1x16x2x16x256xf32, #tpu.memory_space<vmem>>, vector<1x16x1x16x128xf32>,
    %c0_131 = arith.constant 0 : index
    %c1_132 = arith.constant 1 : index
    %c1_133 = arith.constant 1 : index
    %c0_134 = arith.constant 0 : index
    %c0_135 = arith.constant 0 : index
    %100 = vector.load %arg1[%c0_131, %c1_132, %c1_133, %c0_134, %c0_135] : memref<1x3x18x16x128xf32, #tpu.memory_space<vmem>>, vector<1x1x16x16x128xf32>
    %101 = vector.shape_cast %100 : vector<1x1x16x16x128xf32> to vector<16x16x128xf32>
    %102 = vector.shape_cast %101 : vector<16x16x128xf32> to vector<256x128xf32>
    %c3_136 = arith.constant 3 : index
    %c0_137 = arith.constant 0 : index
    %c0_138 = arith.constant 0 : index
    %c0_139 = arith.constant 0 : index
    %103 = vector.load %arg2[%c3_136, %c0_137, %c0_138, %c0_139] : memref<4x4x128x128xf32, #tpu.memory_space<vmem>>, vector<1x1x128x128xf32>
    %104 = vector.shape_cast %103 : vector<1x1x128x128xf32> to vector<128x128xf32>
    %cst_140 = arith.constant dense<0.000000e+00> : vector<256x128xf32>
    %105 = tpu.matmul %102, %104, %cst_140 {dimension_numbers = #tpu.dot_dimension_numbers<[1], [0], [0], [1], [0, 0, 1, 1], [], []>} : vector<256x128xf32>, vector<128x128xf32>, vector<256x128xf32> -> vector<256x128xf32>
    %c0_141 = arith.constant 0 : index
    %c2_142 = arith.constant 2 : index
    %c1_143 = arith.constant 1 : index
    %c0_144 = arith.constant 0 : index
    %c0_145 = arith.constant 0 : index
    %106 = vector.load %arg1[%c0_141, %c2_142, %c1_143, %c0_144, %c0_145] : memref<1x3x18x16x128xf32, #tpu.memory_space<vmem>>, vector<1x1x16x16x128xf32>
    %107 = vector.shape_cast %106 : vector<1x1x16x16x128xf32> to vector<16x16x128xf32>
    %108 = vector.shape_cast %107 : vector<16x16x128xf32> to vector<256x128xf32>
    %c3_146 = arith.constant 3 : index
    %c1_147 = arith.constant 1 : index
    %c0_148 = arith.constant 0 : index
    %c0_149 = arith.constant 0 : index
    %109 = vector.load %arg2[%c3_146, %c1_147, %c0_148, %c0_149] : memref<4x4x128x128xf32, #tpu.memory_space<vmem>>, vector<1x1x128x128xf32>
    %110 = vector.shape_cast %109 : vector<1x1x128x128xf32> to vector<128x128xf32>
    %cst_150 = arith.constant dense<0.000000e+00> : vector<256x128xf32>
    %111 = tpu.matmul %108, %110, %cst_150 {dimension_numbers = #tpu.dot_dimension_numbers<[1], [0], [0], [1], [0, 0, 1, 1], [], []>} : vector<256x128xf32>, vector<128x128xf32>, vector<256x128xf32> -> vector<256x128xf32>
    %112 = arith.addf %105, %111 : vector<256x128xf32>
    %c0_151 = arith.constant 0 : index
    %c1_152 = arith.constant 1 : index
    %c2_153 = arith.constant 2 : index
    %c0_154 = arith.constant 0 : index
    %c0_155 = arith.constant 0 : index
    %113 = vector.load %arg1[%c0_151, %c1_152, %c2_153, %c0_154, %c0_155] : memref<1x3x18x16x128xf32, #tpu.memory_space<vmem>>, vector<1x1x16x16x128xf32>
    %114 = vector.shape_cast %113 : vector<1x1x16x16x128xf32> to vector<16x16x128xf32>
    %115 = vector.shape_cast %114 : vector<16x16x128xf32> to vector<256x128xf32>
    %c3_156 = arith.constant 3 : index
    %c2_157 = arith.constant 2 : index
    %c0_158 = arith.constant 0 : index
    %c0_159 = arith.constant 0 : index
    %116 = vector.load %arg2[%c3_156, %c2_157, %c0_158, %c0_159] : memref<4x4x128x128xf32, #tpu.memory_space<vmem>>, vector<1x1x128x128xf32>
    %117 = vector.shape_cast %116 : vector<1x1x128x128xf32> to vector<128x128xf32>
    %cst_160 = arith.constant dense<0.000000e+00> : vector<256x128xf32>
    %118 = tpu.matmul %115, %117, %cst_160 {dimension_numbers = #tpu.dot_dimension_numbers<[1], [0], [0], [1], [0, 0, 1, 1], [], []>} : vector<256x128xf32>, vector<128x128xf32>, vector<256x128xf32> -> vector<256x128xf32>
    %119 = arith.addf %112, %118 : vector<256x128xf32>
    %c0_161 = arith.constant 0 : index
    %c2_162 = arith.constant 2 : index
    %c2_163 = arith.constant 2 : index
    %c0_164 = arith.constant 0 : index
    %c0_165 = arith.constant 0 : index
    %120 = vector.load %arg1[%c0_161, %c2_162, %c2_163, %c0_164, %c0_165] : memref<1x3x18x16x128xf32, #tpu.memory_space<vmem>>, vector<1x1x16x16x128xf32>
    %121 = vector.shape_cast %120 : vector<1x1x16x16x128xf32> to vector<16x16x128xf32>
    %122 = vector.shape_cast %121 : vector<16x16x128xf32> to vector<256x128xf32>
    %c3_166 = arith.constant 3 : index
    %c3_167 = arith.constant 3 : index
    %c0_168 = arith.constant 0 : index
    %c0_169 = arith.constant 0 : index
    %123 = vector.load %arg2[%c3_166, %c3_167, %c0_168, %c0_169] : memref<4x4x128x128xf32, #tpu.memory_space<vmem>>, vector<1x1x128x128xf32>
    %124 = vector.shape_cast %123 : vector<1x1x128x128xf32> to vector<128x128xf32>
    %cst_170 = arith.constant dense<0.000000e+00> : vector<256x128xf32>
    %125 = tpu.matmul %122, %124, %cst_170 {dimension_numbers = #tpu.dot_dimension_numbers<[1], [0], [0], [1], [0, 0, 1, 1], [], []>} : vector<256x128xf32>, vector<128x128xf32>, vector<256x128xf32> -> vector<256x128xf32>
    %126 = arith.addf %119, %125 : vector<256x128xf32>
    %127 = vector.broadcast %0 : vector<1x128xf32> to vector<256x128xf32>
    %128 = arith.addf %126, %127 : vector<256x128xf32>
    %129 = vector.shape_cast %128 : vector<256x128xf32> to vector<16x16x128xf32>
    %c0_171 = arith.constant 0 : index
    %c0_172 = arith.constant 0 : index
    %c1_173 = arith.constant 1 : index
    %c0_174 = arith.constant 0 : index
    %c128_175 = arith.constant 128 : index
    %130 = vector.load %arg4[%c0_171, %c0_172, %c1_173, %c0_174, %c128_175] : memref<1x16x2x16x256xf32, #tpu.memory_space<vmem>>, vector<1x16x1x16x128xf32>
    %131 = vector.shape_cast %130 : vector<1x16x1x16x128xf32> to vector<16x16x128xf32>
    %132 = vector.shape_cast %129 : vector<16x16x128xf32> to vector<1x16x1x16x128xf32>
    tpu.vector_store %arg4[%c0_171, %c0_172, %c1_173, %c0_174, %c128_175], %132 {strides = array<i32>} : memref<1x16x2x16x256xf32, #tpu.memory_space<vmem>>, vector<1x16x1x16x128xf32>,
    return
  }
  func.func @transform_0(%arg0: i32) -> (i32, i32, i32, i32, i32) {
    %c0_i32 = arith.constant 0 : i32
    %c0_i32_0 = arith.constant 0 : i32
    %c0_i32_1 = arith.constant 0 : i32
    %c0_i32_2 = arith.constant 0 : i32
    %c0_i32_3 = arith.constant 0 : i32
    return %arg0, %c0_i32, %c0_i32_0, %c0_i32_1, %c0_i32_2 : i32, i32, i32, i32, i32
  }
  func.func @transform_1(%arg0: i32) -> (i32, i32, i32, i32) {
    %c0_i32 = arith.constant 0 : i32
    %c0_i32_0 = arith.constant 0 : i32
    %c0_i32_1 = arith.constant 0 : i32
    %c0_i32_2 = arith.constant 0 : i32
    %c0_i32_3 = arith.constant 0 : i32
    return %c0_i32, %c0_i32_0, %c0_i32_1, %c0_i32_2 : i32, i32, i32, i32
  }
  func.func @transform_2(%arg0: i32) -> (i32, i32) {
    %c0_i32 = arith.constant 0 : i32
    %c0_i32_0 = arith.constant 0 : i32
    %c0_i32_1 = arith.constant 0 : i32
    return %c0_i32, %c0_i32_0 : i32, i32
  }
  func.func @transform_3(%arg0: i32) -> (i32, i32, i32, i32, i32) {
    %c0_i32 = arith.constant 0 : i32
    %c0_i32_0 = arith.constant 0 : i32
    %c0_i32_1 = arith.constant 0 : i32
    %c0_i32_2 = arith.constant 0 : i32
    %c0_i32_3 = arith.constant 0 : i32
    return %arg0, %c0_i32, %c0_i32_0, %c0_i32_1, %c0_i32_2 : i32, i32, i32, i32, i32
  }
}

</mosaic_0001>

<llo_original>
// kernel: _upsample_apply.1
$region0: #{_upsample_apply.1}
  #allocation0 [shape = 'u32[]', space=smem, size = 0x4, offset = 0x4, fixed_abs, tag = 'smem constant byte address 0x4 - core index']
  #allocation1 [shape = 'u32[144,128]{1,0:T(1,128)}', space=vmem, size = 0x12000, scoped, tag = 'internal scratch']
  %s0 = inlined_call_operand.vmem [shape: f32[2,3,18,16,128], index: 0, kind: input, shape index: {}]
  %s1 = inlined_call_operand.vmem [shape: f32[4,4,128,128], index: 1, kind: input, shape index: {}]
  %s2 = inlined_call_operand.vmem [shape: f32[1,128], index: 2, kind: input, shape index: {}]
  %s3 = inlined_call_operand.vmem [shape: f32[2,16,2,16,256], index: 3, kind: output, shape index: {}]
  %s4 = sld [smem:[#allocation0]]
  $region45: #{_upsample_apply.1} parent=0
    _
  %s6 = ssub.s32 1, %s4
  %s7 = scalar_select 0, %s6, %s4
  loop: start=0, step=1, limit=4
  $region2: #{_upsample_apply.1} parent=0 // loop_pre_header
    _
  $region3: #{_upsample_apply.1} parent=0 // loop_header
    %s9 = sphi 0, %s13
    %p10 = scmp.ge.s32.totalorder %s9, 4
    %s19 = sphi 0, %s21
    %s22 = sphi 0, %s19
    %s23 = sphi 0, %s22
    %s39 = sphi 0, %s23
    %s43 = sphi 0, %s43
    %s45 = sphi 0, %s43
    %s46 = sphi 0, %s45
    %s60 = sphi 0, %s46
    %s64 = sphi 0, %s64
    %s66 = sphi 0, %s64
    %s67 = sphi 0, %s66
    %s81 = sphi 0, %s67
    %s87 = sphi 0, %s89
    %s90 = sphi 0, %s87
    %s91 = sphi 0, %s90
    %s107 = sphi 0, %s91
  $region4: #{_upsample_apply.1} parent=0 // loop_header_branch
    %12 = sbr.rel (%p10) target = $region8
  $region5: #{_upsample_apply.1} parent=0 // loop_body
    %s14 = ssub.s32 %s9, 1
    %s15 = ssub.s32 %s9, 2
    %s16 = sadd.s32 %s9, 1
    %s17 = ssub.s32 %s9, %s16
    %p18 = scmp.eq.s32.totalorder %s17, 0
    %s20 = sadd.s32 %s19, 1
    %s21 = scalar_select %p18, %s19, %s20
    %p24 = pneg %p18
    %p25 = scmp.eq.s32.totalorder %s9, 1
    %p26 = por %p24, %p25
    %p27 = scmp.ne.s32.totalorder %s19, %s22
    %p28 = scmp.eq.s32.totalorder %s9, 0
    %p29 = por %p27, %p28
    %p30 = scmp.ne.s32.totalorder %s19, %s22
    %p31 = scmp.eq.s32.totalorder %s14, 1
    %p32 = por %p30, %p31
    %p33 = scmp.ne.s32.totalorder %s22, %s23
    %p34 = scmp.eq.s32.totalorder %s14, 0
    %p35 = por %p33, %p34
    %p36 = scmp.ne.s32.totalorder %s22, %s23
    %p37 = scmp.eq.s32.totalorder %s15, 1
    %p38 = por %p36, %p37
    %p40 = scmp.ne.s32.totalorder %s23, %s39
    %p41 = scmp.eq.s32.totalorder %s15, 0
    %p42 = por %p40, %p41
    %s44 = sadd.s32 %s43, 1
    %p47 = scmp.eq.s32.totalorder %s9, 1
    %p48 = scmp.ne.s32.totalorder %s43, %s45
    %p49 = scmp.eq.s32.totalorder %s9, 0
    %p50 = por %p48, %p49
    %p51 = scmp.ne.s32.totalorder %s43, %s45
    %p52 = scmp.eq.s32.totalorder %s14, 1
    %p53 = por %p51, %p52
    %p54 = scmp.ne.s32.totalorder %s45, %s46
    %p55 = scmp.eq.s32.totalorder %s14, 0
    %p56 = por %p54, %p55
    %p57 = scmp.ne.s32.totalorder %s45, %s46
    %p58 = scmp.eq.s32.totalorder %s15, 1
    %p59 = por %p57, %p58
    %p61 = scmp.ne.s32.totalorder %s46, %s60
    %p62 = scmp.eq.s32.totalorder %s15, 0
    %p63 = por %p61, %p62
    %s65 = sadd.s32 %s64, 1
    %p68 = scmp.eq.s32.totalorder %s9, 1
    %p69 = scmp.ne.s32.totalorder %s64, %s66
    %p70 = scmp.eq.s32.totalorder %s9, 0
    %p71 = por %p69, %p70
    %p72 = scmp.ne.s32.totalorder %s64, %s66
    %p73 = scmp.eq.s32.totalorder %s14, 1
    %p74 = por %p72, %p73
    %p75 = scmp.ne.s32.totalorder %s66, %s67
    %p76 = scmp.eq.s32.totalorder %s14, 0
    %p77 = por %p75, %p76
    %p78 = scmp.ne.s32.totalorder %s66, %s67
    %p79 = scmp.eq.s32.totalorder %s15, 1
    %p80 = por %p78, %p79
    %p82 = scmp.ne.s32.totalorder %s67, %s81
    %p83 = scmp.eq.s32.totalorder %s15, 0
    %p84 = por %p82, %p83
    %s85 = ssub.s32 %s9, %s16
    %p86 = scmp.eq.s32.totalorder %s85, 0
    %s88 = sadd.s32 %s87, 1
    %s89 = scalar_select %p86, %s87, %s88
    %p92 = pneg %p86
    %p93 = scmp.eq.s32.totalorder %s9, 1
    %p94 = por %p92, %p93
    %p95 = scmp.ne.s32.totalorder %s87, %s90
    %p96 = scmp.eq.s32.totalorder %s9, 0
    %p97 = por %p95, %p96
    %p98 = scmp.ne.s32.totalorder %s87, %s90
    %p99 = scmp.eq.s32.totalorder %s14, 1
    %p100 = por %p98, %p99
    %p101 = scmp.ne.s32.totalorder %s90, %s91
    %p102 = scmp.eq.s32.totalorder %s14, 0
    %p103 = por %p101, %p102
    %p104 = scmp.ne.s32.totalorder %s90, %s91
    %p105 = scmp.eq.s32.totalorder %s15, 1
    %p106 = por %p104, %p105
    %p108 = scmp.ne.s32.totalorder %s91, %s107
    %p109 = scmp.eq.s32.totalorder %s15, 0
    %p110 = por %p108, %p109
    %p111 = scmp.le.s32.totalorder 1, %s9
    %p112 = scmp.lt.s32.totalorder %s9, 3
    %p113 = pnand %p111, %p112
    %p114 = pneg %p113
    // Predicated region
    $region9: #{_upsample_apply.1} parent=5 // pred_check
      _
    $region10: #{_upsample_apply.1} parent=5 // pred_check_branch
      %116 = sbr.rel (%p113) target = $region12
    $region11: #{_upsample_apply.1} parent=5 // pred_region
      %s117 = ssub.s32 %s9, 1
      // Predicated region
      $region13: #{_upsample_apply.1} parent=11 // pred_check
        %p118 = pneg %p56
      $region14: #{_upsample_apply.1} parent=11 // pred_check_branch
        %120 = sbr.rel (%p118) target = $region16
      $region15: #{_upsample_apply.1} parent=11 // pred_region
        _
      $region16: #{_upsample_apply.1} parent=11 // pred_fallthru
        _
      // Predicated region
      $region17: #{_upsample_apply.1} parent=11 // pred_check
        %p121 = pneg %p77
      $region18: #{_upsample_apply.1} parent=11 // pred_check_branch
        %123 = sbr.rel (%p121) target = $region20
      $region19: #{_upsample_apply.1} parent=11 // pred_region
        _
      $region20: #{_upsample_apply.1} parent=11 // pred_fallthru
        _
    $region12: #{_upsample_apply.1} parent=5 // pred_fallthru
      _
    %p124 = scmp.lt.s32.totalorder %s9, 2
    // Predicated region
    $region21: #{_upsample_apply.1} parent=5 // pred_check
      %p125 = pneg %p124
    $region22: #{_upsample_apply.1} parent=5 // pred_check_branch
      %127 = sbr.rel (%p125) target = $region24
    $region23: #{_upsample_apply.1} parent=5 // pred_region
      // Predicated region
      $region25: #{_upsample_apply.1} parent=23 // pred_check
        %p128 = pneg %p29
      $region26: #{_upsample_apply.1} parent=23 // pred_check_branch
        %130 = sbr.rel (%p128) target = $region28
      $region27: #{_upsample_apply.1} parent=23 // pred_region
        %p131 = scmp.lt.s32.totalorder %s9, 1
        %s132 = scalar_select %p131, %s9, 1
        %s133 = smul.addr %s132, 108
        %s134 = smul.addr %s133, 8
        %s135 = scalar_lea.vmem %s0, %s134
      $region28: #{_upsample_apply.1} parent=23 // pred_fallthru
        _
    $region24: #{_upsample_apply.1} parent=5 // pred_fallthru
      _
    %p136 = scmp.le.s32.totalorder 1, %s9
    %p137 = scmp.lt.s32.totalorder %s9, 3
    %p138 = pnand %p136, %p137
    %p139 = pneg %p138
    // Predicated region
    $region29: #{_upsample_apply.1} parent=5 // pred_check
      _
    $region30: #{_upsample_apply.1} parent=5 // pred_check_branch
      %141 = sbr.rel (%p138) target = $region32
    $region31: #{_upsample_apply.1} parent=5 // pred_region
      %s142 = ssub.s32 %s9, 1
      %p143 = scmp.lt.s32.totalorder %s14, 1
      %s144 = scalar_select %p143, %s14, 1
      %s145 = smul.addr %s144, 108
      %s146 = smul.addr %s145, 8
      %s147 = scalar_lea.vmem %s0, %s146
      %p148 = pneg %p35
      %p149 = pneg %p32
      %p150 = pneg %p56
      %p151 = pneg %p53
      %p152 = pneg %p77
      %p153 = pneg %p74
      %p154 = pneg %p103
      %p155 = pneg %p100
      %p156 = scmp.lt.s32.totalorder %s14, 1
      %s157 = scalar_select %p156, %s14, 1
      %s158 = smul.addr %s157, 128
      %s159 = smul.addr %s158, 8
      %s160 = scalar_lea.vmem %s3, %s159
      %p161 = scmp.lt.s32.totalorder %s14, 1
      %s162 = scalar_select %p161, %s14, 1
      %s163 = smul.addr %s162, 108
      %s164 = smul.addr %s163, 8
      %s165 = scalar_lea.vmem %s0, %s164
      %p166 = scmp.lt.s32.totalorder %s14, 1
      %s167 = scalar_select %p166, %s14, 1
      %s168 = smul.addr %s167, 128
      %s169 = smul.addr %s168, 8
      %s170 = scalar_lea.vmem %s3, %s169
      %v171 = vld [vmem:[%s2] sm:$0x1]
      %v172 = vld [vmem:[%s165] sm:$0xff]
      %v173 = vld [vmem:[%s165 + $0x8] sm:$0xff]
      %v174 = vld [vmem:[%s165 + $0x10] sm:$0xff]
      %v175 = vld [vmem:[%s165 + $0x18] sm:$0xff]
      %v176 = vld [vmem:[%s165 + $0x20] sm:$0xff]
      %v177 = vld [vmem:[%s165 + $0x28] sm:$0xff]
      %v178 = vld [vmem:[%s165 + $0x30] sm:$0xff]
      %v179 = vld [vmem:[%s165 + $0x38] sm:$0xff]
      %v180 = vld [vmem:[%s165 + $0x40] sm:$0xff]
      %v181 = vld [vmem:[%s165 + $0x48] sm:$0xff]
      %v182 = vld [vmem:[%s165 + $0x50] sm:$0xff]
      %v183 = vld [vmem:[%s165 + $0x58] sm:$0xff]
      %v184 = vld [vmem:[%s165 + $0x60] sm:$0xff]
      %v185 = vld [vmem:[%s165 + $0x68] sm:$0xff]
      %v186 = vld [vmem:[%s165 + $0x70] sm:$0xff]
      %v187 = vld [vmem:[%s165 + $0x78] sm:$0xff]
      %v188 = vld [vmem:[%s165 + $0x80] sm:$0xff]
      %v189 = vld [vmem:[%s165 + $0x88] sm:$0xff]
      %v190 = vld [vmem:[%s165 + $0x90] sm:$0xff]
      %v191 = vld [vmem:[%s165 + $0x98] sm:$0xff]
      %v192 = vld [vmem:[%s165 + $0xa0] sm:$0xff]
      %v193 = vld [vmem:[%s165 + $0xa8] sm:$0xff]
      %v194 = vld [vmem:[%s165 + $0xb0] sm:$0xff]
      %v195 = vld [vmem:[%s165 + $0xb8] sm:$0xff]
      %v196 = vld [vmem:[%s165 + $0xc0] sm:$0xff]
      %v197 = vld [vmem:[%s165 + $0xc8] sm:$0xff]
      %v198 = vld [vmem:[%s165 + $0xd0] sm:$0xff]
      %v199 = vld [vmem:[%s165 + $0xd8] sm:$0xff]
      %v200 = vld [vmem:[%s165 + $0xe0] sm:$0xff]
      %v201 = vld [vmem:[%s165 + $0xe8] sm:$0xff]
      %v202 = vld [vmem:[%s165 + $0xf0] sm:$0xff]
      %v203 = vld [vmem:[%s165 + $0xf8] sm:$0xff]
      %v204 = vld [vmem:[%s1] sm:$0xff]
      %v205 = vld [vmem:[%s1 + $0x8] sm:$0xff]
      %v206 = vld [vmem:[%s1 + $0x10] sm:$0xff]
      %v207 = vld [vmem:[%s1 + $0x18] sm:$0xff]
      %v208 = vld [vmem:[%s1 + $0x20] sm:$0xff]
      %v209 = vld [vmem:[%s1 + $0x28] sm:$0xff]
      %v210 = vld [vmem:[%s1 + $0x30] sm:$0xff]
      %v211 = vld [vmem:[%s1 + $0x38] sm:$0xff]
      %v212 = vld [vmem:[%s1 + $0x40] sm:$0xff]
      %v213 = vld [vmem:[%s1 + $0x48] sm:$0xff]
      %v214 = vld [vmem:[%s1 + $0x50] sm:$0xff]
      %v215 = vld [vmem:[%s1 + $0x58] sm:$0xff]
      %v216 = vld [vmem:[%s1 + $0x60] sm:$0xff]
      %v217 = vld [vmem:[%s1 + $0x68] sm:$0xff]
      %v218 = vld [vmem:[%s1 + $0x70] sm:$0xff]
      %v219 = vld [vmem:[%s1 + $0x78] sm:$0xff]
      %s220 = scalar_lea.vmem %s165, 288
      %v221 = vld [vmem:[%s220] sm:$0xff]
      %v222 = vld [vmem:[%s220 + $0x8] sm:$0xff]
      %v223 = vld [vmem:[%s220 + $0x10] sm:$0xff]
      %v224 = vld [vmem:[%s220 + $0x18] sm:$0xff]
      %v225 = vld [vmem:[%s220 + $0x20] sm:$0xff]
      %v226 = vld [vmem:[%s220 + $0x28] sm:$0xff]
      %v227 = vld [vmem:[%s220 + $0x30] sm:$0xff]
      %v228 = vld [vmem:[%s220 + $0x38] sm:$0xff]
      %v229 = vld [vmem:[%s220 + $0x40] sm:$0xff]
      %v230 = vld [vmem:[%s220 + $0x48] sm:$0xff]
      %v231 = vld [vmem:[%s220 + $0x50] sm:$0xff]
      %v232 = vld [vmem:[%s220 + $0x58] sm:$0xff]
      %v233 = vld [vmem:[%s220 + $0x60] sm:$0xff]
      %v234 = vld [vmem:[%s220 + $0x68] sm:$0xff]
      %v235 = vld [vmem:[%s220 + $0x70] sm:$0xff]
      %v236 = vld [vmem:[%s220 + $0x78] sm:$0xff]
      %v237 = vld [vmem:[%s220 + $0x80] sm:$0xff]
      %v238 = vld [vmem:[%s220 + $0x88] sm:$0xff]
      %v239 = vld [vmem:[%s220 + $0x90] sm:$0xff]
      %v240 = vld [vmem:[%s220 + $0x98] sm:$0xff]
      %v241 = vld [vmem:[%s220 + $0xa0] sm:$0xff]
      %v242 = vld [vmem:[%s220 + $0xa8] sm:$0xff]
      %v243 = vld [vmem:[%s220 + $0xb0] sm:$0xff]
      %v244 = vld [vmem:[%s220 + $0xb8] sm:$0xff]
      %v245 = vld [vmem:[%s220 + $0xc0] sm:$0xff]
      %v246 = vld [vmem:[%s220 + $0xc8] sm:$0xff]
      %v247 = vld [vmem:[%s220 + $0xd0] sm:$0xff]
      %v248 = vld [vmem:[%s220 + $0xd8] sm:$0xff]
      %v249 = vld [vmem:[%s220 + $0xe0] sm:$0xff]
      %v250 = vld [vmem:[%s220 + $0xe8] sm:$0xff]
      %v251 = vld [vmem:[%s220 + $0xf0] sm:$0xff]
      %v252 = vld [vmem:[%s220 + $0xf8] sm:$0xff]
      %s253 = scalar_lea.vmem %s1, 128
      %v254 = vld [vmem:[%s253] sm:$0xff]
      %v255 = vld [vmem:[%s253 + $0x8] sm:$0xff]
      %v256 = vld [vmem:[%s253 + $0x10] sm:$0xff]
      %v257 = vld [vmem:[%s253 + $0x18] sm:$0xff]
      %v258 = vld [vmem:[%s253 + $0x20] sm:$0xff]
      %v259 = vld [vmem:[%s253 + $0x28] sm:$0xff]
      %v260 = vld [vmem:[%s253 + $0x30] sm:$0xff]
      %v261 = vld [vmem:[%s253 + $0x38] sm:$0xff]
      %v262 = vld [vmem:[%s253 + $0x40] sm:$0xff]
      %v263 = vld [vmem:[%s253 + $0x48] sm:$0xff]
      %v264 = vld [vmem:[%s253 + $0x50] sm:$0xff]
      %v265 = vld [vmem:[%s253 + $0x58] sm:$0xff]
      %v266 = vld [vmem:[%s253 + $0x60] sm:$0xff]
      %v267 = vld [vmem:[%s253 + $0x68] sm:$0xff]
      %v268 = vld [vmem:[%s253 + $0x70] sm:$0xff]
      %v269 = vld [vmem:[%s253 + $0x78] sm:$0xff]
      %270 = vmatprep.subr.mxu0 0.0
      %271 = vmatpush1.msra.mxu0 %v254
      %272 = vmatprep.subr.mxu0 0.0
      %273 = vmatpush1.msra.mxu0 %v255
      %274 = vmatprep.subr.mxu0 0.0
      %275 = vmatpush1.msra.mxu0 %v256
      %276 = vmatprep.subr.mxu0 0.0
      %277 = vmatpush1.msra.mxu0 %v257
      %278 = vmatprep.subr.mxu0 0.0
      %279 = vmatpush1.msra.mxu0 %v258
      %280 = vmatprep.subr.mxu0 0.0
      %281 = vmatpush1.msra.mxu0 %v259
      %282 = vmatprep.subr.mxu0 0.0
      %283 = vmatpush1.msra.mxu0 %v260
      %284 = vmatprep.subr.mxu0 0.0
      %285 = vmatpush1.msra.mxu0 %v261
      %286 = vmatprep.subr.mxu0 0.0
      %287 = vmatpush1.msra.mxu0 %v262
      %288 = vmatprep.subr.mxu0 0.0
      %289 = vmatpush1.msra.mxu0 %v263
      %290 = vmatprep.subr.mxu0 0.0
      %291 = vmatpush1.msra.mxu0 %v264
      %292 = vmatprep.subr.mxu0 0.0
      %293 = vmatpush1.msra.mxu0 %v265
      %294 = vmatprep.subr.mxu0 0.0
      %295 = vmatpush1.msra.mxu0 %v266
      %296 = vmatprep.subr.mxu0 0.0
      %297 = vmatpush1.msra.mxu0 %v267
      %298 = vmatprep.subr.mxu0 0.0
      %299 = vmatpush1.msra.mxu0 %v268
      %300 = vmatprep.subr.mxu0 0.0
      %301 = vmatpush1.msra.mxu0 %v269
      %302 = vmatprep.subr.mxu0 0.0
      %303 = vmatpush1.msra.mxu0 0.0
      %304 = vmatprep.subr.mxu0 0.0
      %305 = vmatpush1.msra.mxu0 0.0
      %306 = vmatprep.subr.mxu0 0.0
      %307 = vmatpush1.msra.mxu0 0.0
      %308 = vmatprep.subr.mxu0 0.0
      %309 = vmatpush1.msra.mxu0 0.0
      %310 = vmatprep.subr.mxu0 0.0
      %311 = vmatpush1.msra.mxu0 0.0
      %312 = vmatprep.subr.mxu0 0.0
      %313 = vmatpush1.msra.mxu0 0.0
      %314 = vmatprep.subr.mxu0 0.0
      %315 = vmatpush1.msra.mxu0 0.0
      %316 = vmatprep.subr.mxu0 0.0
      %317 = vmatpush1.msra.mxu0 0.0
      %318 = vmatprep.subr.mxu0 0.0
      %319 = vmatpush1.msra.mxu0 0.0
      %320 = vmatprep.subr.mxu0 0.0
      %321 = vmatpush1.msra.mxu0 0.0
      %322 = vmatprep.subr.mxu0 0.0
      %323 = vmatpush1.msra.mxu0 0.0
      %324 = vmatprep.subr.mxu0 0.0
      %325 = vmatpush1.msra.mxu0 0.0
      %326 = vmatprep.subr.mxu0 0.0
      %327 = vmatpush1.msra.mxu0 0.0
      %328 = vmatprep.subr.mxu0 0.0
      %329 = vmatpush1.msra.mxu0 0.0
      %330 = vmatprep.subr.mxu0 0.0
      %331 = vmatpush1.msra.mxu0 0.0
      %332 = vmatprep.subr.mxu0 0.0
      %333 = vmatpush1.msra.mxu0 0.0
      %334 = vmatprep.mubr.f32.mxu0 0.0
      %335 = vmatmul.mubr.f32.gmra.mrb[0].mxu0 %v221
      %v336 = vpop.f32.mrb[0].mxu0
      %v337 = vadd.f32 0.0, %v336
      %v338 = vpop.f32.mrb[0].mxu0
      %339 = vmatprep.mubr.f32.mxu0 0.0
      %340 = vmatmul.mubr.f32.gmra.mrb[0].mxu0 %v222
      %v341 = vpop.f32.mrb[0].mxu0
      %v342 = vadd.f32 0.0, %v341
      %v343 = vpop.f32.mrb[0].mxu0
      %344 = vmatprep.mubr.f32.mxu0 0.0
      %345 = vmatmul.mubr.f32.gmra.mrb[0].mxu0 %v223
      %v346 = vpop.f32.mrb[0].mxu0
      %v347 = vadd.f32 0.0, %v346
      %v348 = vpop.f32.mrb[0].mxu0
      %349 = vmatprep.mubr.f32.mxu0 0.0
      %350 = vmatmul.mubr.f32.gmra.mrb[0].mxu0 %v224
      %v351 = vpop.f32.mrb[0].mxu0
      %v352 = vadd.f32 0.0, %v351
      %v353 = vpop.f32.mrb[0].mxu0
      %354 = vmatprep.mubr.f32.mxu0 0.0
      %355 = vmatmul.mubr.f32.gmra.mrb[0].mxu0 %v225
      %v356 = vpop.f32.mrb[0].mxu0
      %v357 = vadd.f32 0.0, %v356
      %v358 = vpop.f32.mrb[0].mxu0
      %359 = vmatprep.mubr.f32.mxu0 0.0
      %360 = vmatmul.mubr.f32.gmra.mrb[0].mxu0 %v226
      %v361 = vpop.f32.mrb[0].mxu0
      %v362 = vadd.f32 0.0, %v361
      %v363 = vpop.f32.mrb[0].mxu0
      %364 = vmatprep.mubr.f32.mxu0 0.0
      %365 = vmatmul.mubr.f32.gmra.mrb[0].mxu0 %v227
      %v366 = vpop.f32.mrb[0].mxu0
      %v367 = vadd.f32 0.0, %v366
      %v368 = vpop.f32.mrb[0].mxu0
      %369 = vmatprep.mubr.f32.mxu0 0.0
      %370 = vmatmul.mubr.f32.gmra.mrb[0].mxu0 %v228
      %v371 = vpop.f32.mrb[0].mxu0
      %v372 = vadd.f32 0.0, %v371
      %v373 = vpop.f32.mrb[0].mxu0
      %374 = vmatprep.mubr.f32.mxu0 0.0
      %375 = vmatmul.mubr.f32.gmra.mrb[0].mxu0 %v229
      %v376 = vpop.f32.mrb[0].mxu0
      %v377 = vadd.f32 0.0, %v376
      %v378 = vpop.f32.mrb[0].mxu0
      %379 = vmatprep.mubr.f32.mxu0 0.0
      %380 = vmatmul.mubr.f32.gmra.mrb[0].mxu0 %v230
      %v381 = vpop.f32.mrb[0].mxu0
      %v382 = vadd.f32 0.0, %v381
      %v383 = vpop.f32.mrb[0].mxu0
      %384 = vmatprep.mubr.f32.mxu0 0.0
      %385 = vmatmul.mubr.f32.gmra.mrb[0].mxu0 %v231
      %v386 = vpop.f32.mrb[0].mxu0
      %v387 = vadd.f32 0.0, %v386
      %v388 = vpop.f32.mrb[0].mxu0
      %389 = vmatprep.mubr.f32.mxu0 0.0
      %390 = vmatmul.mubr.f32.gmra.mrb[0].mxu0 %v232
      %v391 = vpop.f32.mrb[0].mxu0
      %v392 = vadd.f32 0.0, %v391
      %v393 = vpop.f32.mrb[0].mxu0
      %394 = vmatprep.mubr.f32.mxu0 0.0
      %395 = vmatmul.mubr.f32.gmra.mrb[0].mxu0 %v233
      %v396 = vpop.f32.mrb[0].mxu0
      %v397 = vadd.f32 0.0, %v396
      %v398 = vpop.f32.mrb[0].mxu0
      %399 = vmatprep.mubr.f32.mxu0 0.0
      %400 = vmatmul.mubr.f32.gmra.mrb[0].mxu0 %v234
      %v401 = vpop.f32.mrb[0].mxu0
      %v402 = vadd.f32 0.0, %v401
      %v403 = vpop.f32.mrb[0].mxu0
      %404 = vmatprep.mubr.f32.mxu0 0.0
      %405 = vmatmul.mubr.f32.gmra.mrb[0].mxu0 %v235
      %v406 = vpop.f32.mrb[0].mxu0
      %v407 = vadd.f32 0.0, %v406
      %v408 = vpop.f32.mrb[0].mxu0
      %409 = vmatprep.mubr.f32.mxu0 0.0
      %410 = vmatmul.mubr.f32.gmra.mrb[0].mxu0 %v236
      %v411 = vpop.f32.mrb[0].mxu0
      %v412 = vadd.f32 0.0, %v411
      %v413 = vpop.f32.mrb[0].mxu0
      %414 = vmatprep.mubr.f32.mxu0 0.0
      %415 = vmatmul.mubr.f32.gmra.mrb[0].mxu0 %v237
      %v416 = vpop.f32.mrb[0].mxu0
      %v417 = vadd.f32 0.0, %v416
      %v418 = vpop.f32.mrb[0].mxu0
      %419 = vmatprep.mubr.f32.mxu0 0.0
      %420 = vmatmul.mubr.f32.gmra.mrb[0].mxu0 %v238
      %v421 = vpop.f32.mrb[0].mxu0
      %v422 = vadd.f32 0.0, %v421
      %v423 = vpop.f32.mrb[0].mxu0
      %424 = vmatprep.mubr.f32.mxu0 0.0
      %425 = vmatmul.mubr.f32.gmra.mrb[0].mxu0 %v239
      %v426 = vpop.f32.mrb[0].mxu0
      %v427 = vadd.f32 0.0, %v426
      %v428 = vpop.f32.mrb[0].mxu0
      %429 = vmatprep.mubr.f32.mxu0 0.0
      %430 = vmatmul.mubr.f32.gmra.mrb[0].mxu0 %v240
      %v431 = vpop.f32.mrb[0].mxu0
      %v432 = vadd.f32 0.0, %v431
      %v433 = vpop.f32.mrb[0].mxu0
      %434 = vmatprep.mubr.f32.mxu0 0.0
      %435 = vmatmul.mubr.f32.gmra.mrb[0].mxu0 %v241
      %v436 = vpop.f32.mrb[0].mxu0
      %v437 = vadd.f32 0.0, %v436
      %v438 = vpop.f32.mrb[0].mxu0
      %439 = vmatprep.mubr.f32.mxu0 0.0
      %440 = vmatmul.mubr.f32.gmra.mrb[0].mxu0 %v242
      %v441 = vpop.f32.mrb[0].mxu0
      %v442 = vadd.f32 0.0, %v441
      %v443 = vpop.f32.mrb[0].mxu0
      %444 = vmatprep.mubr.f32.mxu0 0.0
      %445 = vmatmul.mubr.f32.gmra.mrb[0].mxu0 %v243
      %v446 = vpop.f32.mrb[0].mxu0
      %v447 = vadd.f32 0.0, %v446
      %v448 = vpop.f32.mrb[0].mxu0
      %449 = vmatprep.mubr.f32.mxu0 0.0
      %450 = vmatmul.mubr.f32.gmra.mrb[0].mxu0 %v244
      %v451 = vpop.f32.mrb[0].mxu0
      %v452 = vadd.f32 0.0, %v451
      %v453 = vpop.f32.mrb[0].mxu0
      %454 = vmatprep.mubr.f32.mxu0 0.0
      %455 = vmatmul.mubr.f32.gmra.mrb[0].mxu0 %v245
      %v456 = vpop.f32.mrb[0].mxu0
      %v457 = vadd.f32 0.0, %v456
      %v458 = vpop.f32.mrb[0].mxu0
      %459 = vmatprep.mubr.f32.mxu0 0.0
      %460 = vmatmul.mubr.f32.gmra.mrb[0].mxu0 %v246
      %v461 = vpop.f32.mrb[0].mxu0
      %v462 = vadd.f32 0.0, %v461
      %v463 = vpop.f32.mrb[0].mxu0
      %464 = vmatprep.mubr.f32.mxu0 0.0
      %465 = vmatmul.mubr.f32.gmra.mrb[0].mxu0 %v247
      %v466 = vpop.f32.mrb[0].mxu0
      %v467 = vadd.f32 0.0, %v466
      %v468 = vpop.f32.mrb[0].mxu0
      %469 = vmatprep.mubr.f32.mxu0 0.0
      %470 = vmatmul.mubr.f32.gmra.mrb[0].mxu0 %v248
      %v471 = vpop.f32.mrb[0].mxu0
      %v472 = vadd.f32 0.0, %v471
      %v473 = vpop.f32.mrb[0].mxu0
      %474 = vmatprep.mubr.f32.mxu0 0.0
      %475 = vmatmul.mubr.f32.gmra.mrb[0].mxu0 %v249
      %v476 = vpop.f32.mrb[0].mxu0
      %v477 = vadd.f32 0.0, %v476
      %v478 = vpop.f32.mrb[0].mxu0
      %479 = vmatprep.mubr.f32.mxu0 0.0
      %480 = vmatmul.mubr.f32.gmra.mrb[0].mxu0 %v250
      %v481 = vpop.f32.mrb[0].mxu0
      %v482 = vadd.f32 0.0, %v481
      %v483 = vpop.f32.mrb[0].mxu0
      %484 = vmatprep.mubr.f32.mxu0 0.0
      %485 = vmatmul.mubr.f32.gmra.mrb[0].mxu0 %v251
      %v486 = vpop.f32.mrb[0].mxu0
      %v487 = vadd.f32 0.0, %v486
      %v488 = vpop.f32.mrb[0].mxu0
      %489 = vmatprep.mubr.f32.mxu0 0.0
      %490 = vmatmul.mubr.f32.gmra.mrb[0].mxu0 %v252
      %v491 = vpop.f32.mrb[0].mxu0
      %v492 = vadd.f32 0.0, %v491
      %v493 = vpop.f32.mrb[0].mxu0
      %494 = vdwg.mxu0
      %495 = vmatprep.subr.mxu0 0.0
      %496 = vmatpush1.msra.mxu0 %v204
      %497 = vmatprep.subr.mxu0 0.0
      %498 = vmatpush1.msra.mxu0 %v205
      %499 = vmatprep.subr.mxu0 0.0
      %500 = vmatpush1.msra.mxu0 %v206
      %501 = vmatprep.subr.mxu0 0.0
      %502 = vmatpush1.msra.mxu0 %v207
      %503 = vmatprep.subr.mxu0 0.0
      %504 = vmatpush1.msra.mxu0 %v208
      %505 = vmatprep.subr.mxu0 0.0
      %506 = vmatpush1.msra.mxu0 %v209
      %507 = vmatprep.subr.mxu0 0.0
      %508 = vmatpush1.msra.mxu0 %v210
      %509 = vmatprep.subr.mxu0 0.0
      %510 = vmatpush1.msra.mxu0 %v211
      %511 = vmatprep.subr.mxu0 0.0
      %512 = vmatpush1.msra.mxu0 %v212
      %513 = vmatprep.subr.mxu0 0.0
      %514 = vmatpush1.msra.mxu0 %v213
      %515 = vmatprep.subr.mxu0 0.0
      %516 = vmatpush1.msra.mxu0 %v214
      %517 = vmatprep.subr.mxu0 0.0
      %518 = vmatpush1.msra.mxu0 %v215
      %519 = vmatprep.subr.mxu0 0.0
      %520 = vmatpush1.msra.mxu0 %v216
      %521 = vmatprep.subr.mxu0 0.0
      %522 = vmatpush1.msra.mxu0 %v217
      %523 = vmatprep.subr.mxu0 0.0
      %524 = vmatpush1.msra.mxu0 %v218
      %525 = vmatprep.subr.mxu0 0.0
      %526 = vmatpush1.msra.mxu0 %v219
      %527 = vmatprep.subr.mxu0 0.0
      %528 = vmatpush1.msra.mxu0 0.0
      %529 = vmatprep.subr.mxu0 0.0
      %530 = vmatpush1.msra.mxu0 0.0
      %531 = vmatprep.subr.mxu0 0.0
      %532 = vmatpush1.msra.mxu0 0.0
      %533 = vmatprep.subr.mxu0 0.0
      %534 = vmatpush1.msra.mxu0 0.0
      %535 = vmatprep.subr.mxu0 0.0
      %536 = vmatpush1.msra.mxu0 0.0
      %537 = vmatprep.subr.mxu0 0.0
      %538 = vmatpush1.msra.mxu0 0.0
      %539 = vmatprep.subr.mxu0 0.0
      %540 = vmatpush1.msra.mxu0 0.0
      %541 = vmatprep.subr.mxu0 0.0
      %542 = vmatpush1.msra.mxu0 0.0
      %543 = vmatprep.subr.mxu0 0.0
      %544 = vmatpush1.msra.mxu0 0.0
      %545 = vmatprep.subr.mxu0 0.0
      %546 = vmatpush1.msra.mxu0 0.0
      %547 = vmatprep.subr.mxu0 0.0
      %548 = vmatpush1.msra.mxu0 0.0
      %549 = vmatprep.subr.mxu0 0.0
      %550 = vmatpush1.msra.mxu0 0.0
      %551 = vmatprep.subr.mxu0 0.0
      %552 = vmatpush1.msra.mxu0 0.0
      %553 = vmatprep.subr.mxu0 0.0
      %554 = vmatpush1.msra.mxu0 0.0
      %555 = vmatprep.subr.mxu0 0.0
      %556 = vmatpush1.msra.mxu0 0.0
      %557 = vmatprep.subr.mxu0 0.0
      %558 = vmatpush1.msra.mxu0 0.0
      %559 = vmatprep.mubr.f32.mxu0 0.0
      %560 = vmatmul.mubr.f32.gmra.mrb[0].mxu0 %v172
      %v561 = vpop.f32.mrb[0].mxu0
      %v562 = vadd.f32 %v337, %v561
      %v563 = vpop.f32.mrb[0].mxu0
      %564 = vmatprep.mubr.f32.mxu0 0.0
      %565 = vmatmul.mubr.f32.gmra.mrb[0].mxu0 %v173
      %v566 = vpop.f32.mrb[0].mxu0
      %v567 = vadd.f32 %v342, %v566
      %v568 = vpop.f32.mrb[0].mxu0
      %569 = vmatprep.mubr.f32.mxu0 0.0
      %570 = vmatmul.mubr.f32.gmra.mrb[0].mxu0 %v174
      %v571 = vpop.f32.mrb[0].mxu0
      %v572 = vadd.f32 %v347, %v571
      %v573 = vpop.f32.mrb[0].mxu0
      %574 = vmatprep.mubr.f32.mxu0 0.0
      %575 = vmatmul.mubr.f32.gmra.mrb[0].mxu0 %v175
      %v576 = vpop.f32.mrb[0].mxu0
      %v577 = vadd.f32 %v352, %v576
      %v578 = vpop.f32.mrb[0].mxu0
      %579 = vmatprep.mubr.f32.mxu0 0.0
      %580 = vmatmul.mubr.f32.gmra.mrb[0].mxu0 %v176
      %v581 = vpop.f32.mrb[0].mxu0
      %v582 = vadd.f32 %v357, %v581
      %v583 = vpop.f32.mrb[0].mxu0
      %584 = vmatprep.mubr.f32.mxu0 0.0
      %585 = vmatmul.mubr.f32.gmra.mrb[0].mxu0 %v177
      %v586 = vpop.f32.mrb[0].mxu0
      %v587 = vadd.f32 %v362, %v586
      %v588 = vpop.f32.mrb[0].mxu0
      %589 = vmatprep.mubr.f32.mxu0 0.0
      %590 = vmatmul.mubr.f32.gmra.mrb[0].mxu0 %v178
      %v591 = vpop.f32.mrb[0].mxu0
      %v592 = vadd.f32 %v367, %v591
      %v593 = vpop.f32.mrb[0].mxu0
      %594 = vmatprep.mubr.f32.mxu0 0.0
      %595 = vmatmul.mubr.f32.gmra.mrb[0].mxu0 %v179
      %v596 = vpop.f32.mrb[0].mxu0
      %v597 = vadd.f32 %v372, %v596
      %v598 = vpop.f32.mrb[0].mxu0
      %599 = vmatprep.mubr.f32.mxu0 0.0
      %600 = vmatmul.mubr.f32.gmra.mrb[0].mxu0 %v180
      %v601 = vpop.f32.mrb[0].mxu0
      %v602 = vadd.f32 %v377, %v601
      %v603 = vpop.f32.mrb[0].mxu0
      %604 = vmatprep.mubr.f32.mxu0 0.0
      %605 = vmatmul.mubr.f32.gmra.mrb[0].mxu0 %v181
      %v606 = vpop.f32.mrb[0].mxu0
      %v607 = vadd.f32 %v382, %v606
      %v608 = vpop.f32.mrb[0].mxu0
      %609 = vmatprep.mubr.f32.mxu0 0.0
      %610 = vmatmul.mubr.f32.gmra.mrb[0].mxu0 %v182
      %v611 = vpop.f32.mrb[0].mxu0
      %v612 = vadd.f32 %v387, %v611
      %v613 = vpop.f32.mrb[0].mxu0
      %614 = vmatprep.mubr.f32.mxu0 0.0
      %615 = vmatmul.mubr.f32.gmra.mrb[0].mxu0 %v183
      %v616 = vpop.f32.mrb[0].mxu0
      %v617 = vadd.f32 %v392, %v616
      %v618 = vpop.f32.mrb[0].mxu0
      %619 = vmatprep.mubr.f32.mxu0 0.0
      %620 = vmatmul.mubr.f32.gmra.mrb[0].mxu0 %v184
      %v621 = vpop.f32.mrb[0].mxu0
      %v622 = vadd.f32 %v397, %v621
      %v623 = vpop.f32.mrb[0].mxu0
      %624 = vmatprep.mubr.f32.mxu0 0.0
      %625 = vmatmul.mubr.f32.gmra.mrb[0].mxu0 %v185
      %v626 = vpop.f32.mrb[0].mxu0
      %v627 = vadd.f32 %v402, %v626
      %v628 = vpop.f32.mrb[0].mxu0
      %629 = vmatprep.mubr.f32.mxu0 0.0
      %630 = vmatmul.mubr.f32.gmra.mrb[0].mxu0 %v186
      %v631 = vpop.f32.mrb[0].mxu0
      %v632 = vadd.f32 %v407, %v631
      %v633 = vpop.f32.mrb[0].mxu0
      %634 = vmatprep.mubr.f32.mxu0 0.0
      %635 = vmatmul.mubr.f32.gmra.mrb[0].mxu0 %v187
      %v636 = vpop.f32.mrb[0].mxu0
      %v637 = vadd.f32 %v412, %v636
      %v638 = vpop.f32.mrb[0].mxu0
      %639 = vmatprep.mubr.f32.mxu0 0.0
      %640 = vmatmul.mubr.f32.gmra.mrb[0].mxu0 %v188
      %v641 = vpop.f32.mrb[0].mxu0
      %v642 = vadd.f32 %v417, %v641
      %v643 = vpop.f32.mrb[0].mxu0
      %644 = vmatprep.mubr.f32.mxu0 0.0
      %645 = vmatmul.mubr.f32.gmra.mrb[0].mxu0 %v189
      %v646 = vpop.f32.mrb[0].mxu0
      %v647 = vadd.f32 %v422, %v646
      %v648 = vpop.f32.mrb[0].mxu0
      %649 = vmatprep.mubr.f32.mxu0 0.0
      %650 = vmatmul.mubr.f32.gmra.mrb[0].mxu0 %v190
      %v651 = vpop.f32.mrb[0].mxu0
      %v652 = vadd.f32 %v427, %v651
      %v653 = vpop.f32.mrb[0].mxu0
      %654 = vmatprep.mubr.f32.mxu0 0.0
      %655 = vmatmul.mubr.f32.gmra.mrb[0].mxu0 %v191
      %v656 = vpop.f32.mrb[0].mxu0
      %v657 = vadd.f32 %v432, %v656
      %v658 = vpop.f32.mrb[0].mxu0
      %659 = vmatprep.mubr.f32.mxu0 0.0
      %660 = vmatmul.mubr.f32.gmra.mrb[0].mxu0 %v192
      %v661 = vpop.f32.mrb[0].mxu0
      %v662 = vadd.f32 %v437, %v661
      %v663 = vpop.f32.mrb[0].mxu0
      %664 = vmatprep.mubr.f32.mxu0 0.0
      %665 = vmatmul.mubr.f32.gmra.mrb[0].mxu0 %v193
      %v666 = vpop.f32.mrb[0].mxu0
      %v667 = vadd.f32 %v442, %v666
      %v668 = vpop.f32.mrb[0].mxu0
      %669 = vmatprep.mubr.f32.mxu0 0.0
      %670 = vmatmul.mubr.f32.gmra.mrb[0].mxu0 %v194
      %v671 = vpop.f32.mrb[0].mxu0
      %v672 = vadd.f32 %v447, %v671
      %v673 = vpop.f32.mrb[0].mxu0
      %674 = vmatprep.mubr.f32.mxu0 0.0
      %675 = vmatmul.mubr.f32.gmra.mrb[0].mxu0 %v195
      %v676 = vpop.f32.mrb[0].mxu0
      %v677 = vadd.f32 %v452, %v676
      %v678 = vpop.f32.mrb[0].mxu0
      %679 = vmatprep.mubr.f32.mxu0 0.0
      %680 = vmatmul.mubr.f32.gmra.mrb[0].mxu0 %v196
      %v681 = vpop.f32.mrb[0].mxu0
      %v682 = vadd.f32 %v457, %v681
      %v683 = vpop.f32.mrb[0].mxu0
      %684 = vmatprep.mubr.f32.mxu0 0.0
      %685 = vmatmul.mubr.f32.gmra.mrb[0].mxu0 %v197
      %v686 = vpop.f32.mrb[0].mxu0
      %v687 = vadd.f32 %v462, %v686
      %v688 = vpop.f32.mrb[0].mxu0
      %689 = vmatprep.mubr.f32.mxu0 0.0
      %690 = vmatmul.mubr.f32.gmra.mrb[0].mxu0 %v198
      %v691 = vpop.f32.mrb[0].mxu0
      %v692 = vadd.f32 %v467, %v691
      %v693 = vpop.f32.mrb[0].mxu0
      %694 = vmatprep.mubr.f32.mxu0 0.0
      %695 = vmatmul.mubr.f32.gmra.mrb[0].mxu0 %v199
      %v696 = vpop.f32.mrb[0].mxu0
      %v697 = vadd.f32 %v472, %v696
      %v698 = vpop.f32.mrb[0].mxu0
      %699 = vmatprep.mubr.f32.mxu0 0.0
      %700 = vmatmul.mubr.f32.gmra.mrb[0].mxu0 %v200
      %v701 = vpop.f32.mrb[0].mxu0
      %v702 = vadd.f32 %v477, %v701
      %v703 = vpop.f32.mrb[0].mxu0
      %704 = vmatprep.mubr.f32.mxu0 0.0
      %705 = vmatmul.mubr.f32.gmra.mrb[0].mxu0 %v201
      %v706 = vpop.f32.mrb[0].mxu0
      %v707 = vadd.f32 %v482, %v706
      %v708 = vpop.f32.mrb[0].mxu0
      %709 = vmatprep.mubr.f32.mxu0 0.0
      %710 = vmatmul.mubr.f32.gmra.mrb[0].mxu0 %v202
      %v711 = vpop.f32.mrb[0].mxu0
      %v712 = vadd.f32 %v487, %v711
      %v713 = vpop.f32.mrb[0].mxu0
      %714 = vmatprep.mubr.f32.mxu0 0.0
      %715 = vmatmul.mubr.f32.gmra.mrb[0].mxu0 %v203
      %v716 = vpop.f32.mrb[0].mxu0
      %v717 = vadd.f32 %v492, %v716
      %v718 = vpop.f32.mrb[0].mxu0
      %719 = vdwg.mxu0
      %s720 = scalar_lea.vmem %s165, 16
      %v721 = vld [vmem:[%s720] sm:$0xff]
      %v722 = vld [vmem:[%s720 + $0x8] sm:$0xff]
      %v723 = vld [vmem:[%s720 + $0x10] sm:$0xff]
      %v724 = vld [vmem:[%s720 + $0x18] sm:$0xff]
      %v725 = vld [vmem:[%s720 + $0x20] sm:$0xff]
      %v726 = vld [vmem:[%s720 + $0x28] sm:$0xff]
      %v727 = vld [vmem:[%s720 + $0x30] sm:$0xff]
      %v728 = vld [vmem:[%s720 + $0x38] sm:$0xff]
      %v729 = vld [vmem:[%s720 + $0x40] sm:$0xff]
      %v730 = vld [vmem:[%s720 + $0x48] sm:$0xff]
      %v731 = vld [vmem:[%s720 + $0x50] sm:$0xff]
      %v732 = vld [vmem:[%s720 + $0x58] sm:$0xff]
      %v733 = vld [vmem:[%s720 + $0x60] sm:$0xff]
      %v734 = vld [vmem:[%s720 + $0x68] sm:$0xff]
      %v735 = vld [vmem:[%s720 + $0x70] sm:$0xff]
      %v736 = vld [vmem:[%s720 + $0x78] sm:$0xff]
      %v737 = vld [vmem:[%s720 + $0x80] sm:$0xff]
      %v738 = vld [vmem:[%s720 + $0x88] sm:$0xff]
      %v739 = vld [vmem:[%s720 + $0x90] sm:$0xff]
      %v740 = vld [vmem:[%s720 + $0x98] sm:$0xff]
      %v741 = vld [vmem:[%s720 + $0xa0] sm:$0xff]
      %v742 = vld [vmem:[%s720 + $0xa8] sm:$0xff]
      %v743 = vld [vmem:[%s720 + $0xb0] sm:$0xff]
      %v744 = vld [vmem:[%s720 + $0xb8] sm:$0xff]
      %v745 = vld [vmem:[%s720 + $0xc0] sm:$0xff]
      %v746 = vld [vmem:[%s720 + $0xc8] sm:$0xff]
      %v747 = vld [vmem:[%s720 + $0xd0] sm:$0xff]
      %v748 = vld [vmem:[%s720 + $0xd8] sm:$0xff]
      %v749 = vld [vmem:[%s720 + $0xe0] sm:$0xff]
      %v750 = vld [vmem:[%s720 + $0xe8] sm:$0xff]
      %v751 = vld [vmem:[%s720 + $0xf0] sm:$0xff]
      %v752 = vld [vmem:[%s720 + $0xf8] sm:$0xff]
      %s753 = scalar_lea.vmem %s1, 256
      %v754 = vld [vmem:[%s753] sm:$0xff]
      %v755 = vld [vmem:[%s753 + $0x8] sm:$0xff]
      %v756 = vld [vmem:[%s753 + $0x10] sm:$0xff]
      %v757 = vld [vmem:[%s753 + $0x18] sm:$0xff]
      %v758 = vld [vmem:[%s753 + $0x20] sm:$0xff]
      %v759 = vld [vmem:[%s753 + $0x28] sm:$0xff]
      %v760 = vld [vmem:[%s753 + $0x30] sm:$0xff]
      %v761 = vld [vmem:[%s753 + $0x38] sm:$0xff]
      %v762 = vld [vmem:[%s753 + $0x40] sm:$0xff]
      %v763 = vld [vmem:[%s753 + $0x48] sm:$0xff]
      %v764 = vld [vmem:[%s753 + $0x50] sm:$0xff]
      %v765 = vld [vmem:[%s753 + $0x58] sm:$0xff]
      %v766 = vld [vmem:[%s753 + $0x60] sm:$0xff]
      %v767 = vld [vmem:[%s753 + $0x68] sm:$0xff]
      %v768 = vld [vmem:[%s753 + $0x70] sm:$0xff]
      %v769 = vld [vmem:[%s753 + $0x78] sm:$0xff]
      %770 = vmatprep.subr.mxu0 0.0
      %771 = vmatpush1.msra.mxu0 %v754
      %772 = vmatprep.subr.mxu0 0.0
      %773 = vmatpush1.msra.mxu0 %v755
      %774 = vmatprep.subr.mxu0 0.0
      %775 = vmatpush1.msra.mxu0 %v756
      %776 = vmatprep.subr.mxu0 0.0
      %777 = vmatpush1.msra.mxu0 %v757
      %778 = vmatprep.subr.mxu0 0.0
      %779 = vmatpush1.msra.mxu0 %v758
      %780 = vmatprep.subr.mxu0 0.0
      %781 = vmatpush1.msra.mxu0 %v759
      %782 = vmatprep.subr.mxu0 0.0
      %783 = vmatpush1.msra.mxu0 %v760
      %784 = vmatprep.subr.mxu0 0.0
      %785 = vmatpush1.msra.mxu0 %v761
      %786 = vmatprep.subr.mxu0 0.0
      %787 = vmatpush1.msra.mxu0 %v762
      %788 = vmatprep.subr.mxu0 0.0
      %789 = vmatpush1.msra.mxu0 %v763
      %790 = vmatprep.subr.mxu0 0.0
      %791 = vmatpush1.msra.mxu0 %v764
      %792 = vmatprep.subr.mxu0 0.0
      %793 = vmatpush1.msra.mxu0 %v765
      %794 = vmatprep.subr.mxu0 0.0
      %795 = vmatpush1.msra.mxu0 %v766
      %796 = vmatprep.subr.mxu0 0.0
      %797 = vmatpush1.msra.mxu0 %v767
      %798 = vmatprep.subr.mxu0 0.0
      %799 = vmatpush1.msra.mxu0 %v768
      %800 = vmatprep.subr.mxu0 0.0
      %801 = vmatpush1.msra.mxu0 %v769
      %802 = vmatprep.subr.mxu0 0.0
      %803 = vmatpush1.msra.mxu0 0.0
      %804 = vmatprep.subr.mxu0 0.0
      %805 = vmatpush1.msra.mxu0 0.0
      %806 = vmatprep.subr.mxu0 0.0
      %807 = vmatpush1.msra.mxu0 0.0
      %808 = vmatprep.subr.mxu0 0.0
      %809 = vmatpush1.msra.mxu0 0.0
      %810 = vmatprep.subr.mxu0 0.0
      %811 = vmatpush1.msra.mxu0 0.0
      %812 = vmatprep.subr.mxu0 0.0
      %813 = vmatpush1.msra.mxu0 0.0
      %814 = vmatprep.subr.mxu0 0.0
      %815 = vmatpush1.msra.mxu0 0.0
      %816 = vmatprep.subr.mxu0 0.0
      %817 = vmatpush1.msra.mxu0 0.0
      %818 = vmatprep.subr.mxu0 0.0
      %819 = vmatpush1.msra.mxu0 0.0
      %820 = vmatprep.subr.mxu0 0.0
      %821 = vmatpush1.msra.mxu0 0.0
      %822 = vmatprep.subr.mxu0 0.0
      %823 = vmatpush1.msra.mxu0 0.0
      %824 = vmatprep.subr.mxu0 0.0
      %825 = vmatpush1.msra.mxu0 0.0
      %826 = vmatprep.subr.mxu0 0.0
      %827 = vmatpush1.msra.mxu0 0.0
      %828 = vmatprep.subr.mxu0 0.0
      %829 = vmatpush1.msra.mxu0 0.0
      %830 = vmatprep.subr.mxu0 0.0
      %831 = vmatpush1.msra.mxu0 0.0
      %832 = vmatprep.subr.mxu0 0.0
      %833 = vmatpush1.msra.mxu0 0.0
      %834 = vmatprep.mubr.f32.mxu0 0.0
      %835 = vmatmul.mubr.f32.gmra.mrb[0].mxu0 %v721
      %v836 = vpop.f32.mrb[0].mxu0
      %v837 = vadd.f32 0.0, %v836
      %v838 = vpop.f32.mrb[0].mxu0
      %839 = vmatprep.mubr.f32.mxu0 0.0
      %840 = vmatmul.mubr.f32.gmra.mrb[0].mxu0 %v722
      %v841 = vpop.f32.mrb[0].mxu0
      %v842 = vadd.f32 0.0, %v841
      %v843 = vpop.f32.mrb[0].mxu0
      %844 = vmatprep.mubr.f32.mxu0 0.0
      %845 = vmatmul.mubr.f32.gmra.mrb[0].mxu0 %v723
      %v846 = vpop.f32.mrb[0].mxu0
      %v847 = vadd.f32 0.0, %v846
      %v848 = vpop.f32.mrb[0].mxu0
      %849 = vmatprep.mubr.f32.mxu0 0.0
      %850 = vmatmul.mubr.f32.gmra.mrb[0].mxu0 %v724
      %v851 = vpop.f32.mrb[0].mxu0
      %v852 = vadd.f32 0.0, %v851
      %v853 = vpop.f32.mrb[0].mxu0
      %854 = vmatprep.mubr.f32.mxu0 0.0
      %855 = vmatmul.mubr.f32.gmra.mrb[0].mxu0 %v725
      %v856 = vpop.f32.mrb[0].mxu0
      %v857 = vadd.f32 0.0, %v856
      %v858 = vpop.f32.mrb[0].mxu0
      %859 = vmatprep.mubr.f32.mxu0 0.0
      %860 = vmatmul.mubr.f32.gmra.mrb[0].mxu0 %v726
      %v861 = vpop.f32.mrb[0].mxu0
      %v862 = vadd.f32 0.0, %v861
      %v863 = vpop.f32.mrb[0].mxu0
      %864 = vmatprep.mubr.f32.mxu0 0.0
      %865 = vmatmul.mubr.f32.gmra.mrb[0].mxu0 %v727
      %v866 = vpop.f32.mrb[0].mxu0
      %v867 = vadd.f32 0.0, %v866
      %v868 = vpop.f32.mrb[0].mxu0
      %869 = vmatprep.mubr.f32.mxu0 0.0
      %870 = vmatmul.mubr.f32.gmra.mrb[0].mxu0 %v728
      %v871 = vpop.f32.mrb[0].mxu0
      %v872 = vadd.f32 0.0, %v871
      %v873 = vpop.f32.mrb[0].mxu0
      %874 = vmatprep.mubr.f32.mxu0 0.0
      %875 = vmatmul.mubr.f32.gmra.mrb[0].mxu0 %v729
      %v876 = vpop.f32.mrb[0].mxu0
      %v877 = vadd.f32 0.0, %v876
      %v878 = vpop.f32.mrb[0].mxu0
      %879 = vmatprep.mubr.f32.mxu0 0.0
      %880 = vmatmul.mubr.f32.gmra.mrb[0].mxu0 %v730
      %v881 = vpop.f32.mrb[0].mxu0
      %v882 = vadd.f32 0.0, %v881
      %v883 = vpop.f32.mrb[0].mxu0
      %884 = vmatprep.mubr.f32.mxu0 0.0
      %885 = vmatmul.mubr.f32.gmra.mrb[0].mxu0 %v731
      %v886 = vpop.f32.mrb[0].mxu0
      %v887 = vadd.f32 0.0, %v886
      %v888 = vpop.f32.mrb[0].mxu0
      %889 = vmatprep.mubr.f32.mxu0 0.0
      %890 = vmatmul.mubr.f32.gmra.mrb[0].mxu0 %v732
      %v891 = vpop.f32.mrb[0].mxu0
      %v892 = vadd.f32 0.0, %v891
      %v893 = vpop.f32.mrb[0].mxu0
      %894 = vmatprep.mubr.f32.mxu0 0.0
      %895 = vmatmul.mubr.f32.gmra.mrb[0].mxu0 %v733
      %v896 = vpop.f32.mrb[0].mxu0
      %v897 = vadd.f32 0.0, %v896
      %v898 = vpop.f32.mrb[0].mxu0
      %899 = vmatprep.mubr.f32.mxu0 0.0
      %900 = vmatmul.mubr.f32.gmra.mrb[0].mxu0 %v734
      %v901 = vpop.f32.mrb[0].mxu0
      %v902 = vadd.f32 0.0, %v901
      %v903 = vpop.f32.mrb[0].mxu0
      %904 = vmatprep.mubr.f32.mxu0 0.0
      %905 = vmatmul.mubr.f32.gmra.mrb[0].mxu0 %v735
      %v906 = vpop.f32.mrb[0].mxu0
      %v907 = vadd.f32 0.0, %v906
      %v908 = vpop.f32.mrb[0].mxu0
      %909 = vmatprep.mubr.f32.mxu0 0.0
      %910 = vmatmul.mubr.f32.gmra.mrb[0].mxu0 %v736
      %v911 = vpop.f32.mrb[0].mxu0
      %v912 = vadd.f32 0.0, %v911
      %v913 = vpop.f32.mrb[0].mxu0
      %914 = vmatprep.mubr.f32.mxu0 0.0
      %915 = vmatmul.mubr.f32.gmra.mrb[0].mxu0 %v737
      %v916 = vpop.f32.mrb[0].mxu0
      %v917 = vadd.f32 0.0, %v916
      %v918 = vpop.f32.mrb[0].mxu0
      %919 = vmatprep.mubr.f32.mxu0 0.0
      %920 = vmatmul.mubr.f32.gmra.mrb[0].mxu0 %v738
      %v921 = vpop.f32.mrb[0].mxu0
      %v922 = vadd.f32 0.0, %v921
      %v923 = vpop.f32.mrb[0].mxu0
      %924 = vmatprep.mubr.f32.mxu0 0.0
      %925 = vmatmul.mubr.f32.gmra.mrb[0].mxu0 %v739
      %v926 = vpop.f32.mrb[0].mxu0
      %v927 = vadd.f32 0.0, %v926
      %v928 = vpop.f32.mrb[0].mxu0
      %929 = vmatprep.mubr.f32.mxu0 0.0
      %930 = vmatmul.mubr.f32.gmra.mrb[0].mxu0 %v740
      %v931 = vpop.f32.mrb[0].mxu0
      %v932 = vadd.f32 0.0, %v931
      %v933 = vpop.f32.mrb[0].mxu0
      %934 = vmatprep.mubr.f32.mxu0 0.0
      %935 = vmatmul.mubr.f32.gmra.mrb[0].mxu0 %v741
      %v936 = vpop.f32.mrb[0].mxu0
      %v937 = vadd.f32 0.0, %v936
      %v938 = vpop.f32.mrb[0].mxu0
      %939 = vmatprep.mubr.f32.mxu0 0.0
      %940 = vmatmul.mubr.f32.gmra.mrb[0].mxu0 %v742
      %v941 = vpop.f32.mrb[0].mxu0
      %v942 = vadd.f32 0.0, %v941
      %v943 = vpop.f32.mrb[0].mxu0
      %944 = vmatprep.mubr.f32.mxu0 0.0
      %945 = vmatmul.mubr.f32.gmra.mrb[0].mxu0 %v743
      %v946 = vpop.f32.mrb[0].mxu0
      %v947 = vadd.f32 0.0, %v946
      %v948 = vpop.f32.mrb[0].mxu0
      %949 = vmatprep.mubr.f32.mxu0 0.0
      %950 = vmatmul.mubr.f32.gmra.mrb[0].mxu0 %v744
      %v951 = vpop.f32.mrb[0].mxu0
      %v952 = vadd.f32 0.0, %v951
      %v953 = vpop.f32.mrb[0].mxu0
      %954 = vmatprep.mubr.f32.mxu0 0.0
      %955 = vmatmul.mubr.f32.gmra.mrb[0].mxu0 %v745
      %v956 = vpop.f32.mrb[0].mxu0
      %v957 = vadd.f32 0.0, %v956
      %v958 = vpop.f32.mrb[0].mxu0
      %959 = vmatprep.mubr.f32.mxu0 0.0
      %960 = vmatmul.mubr.f32.gmra.mrb[0].mxu0 %v746
      %v961 = vpop.f32.mrb[0].mxu0
      %v962 = vadd.f32 0.0, %v961
      %v963 = vpop.f32.mrb[0].mxu0
      %964 = vmatprep.mubr.f32.mxu0 0.0
      %965 = vmatmul.mubr.f32.gmra.mrb[0].mxu0 %v747
      %v966 = vpop.f32.mrb[0].mxu0
      %v967 = vadd.f32 0.0, %v966
      %v968 = vpop.f32.mrb[0].mxu0
      %969 = vmatprep.mubr.f32.mxu0 0.0
      %970 = vmatmul.mubr.f32.gmra.mrb[0].mxu0 %v748
      %v971 = vpop.f32.mrb[0].mxu0
      %v972 = vadd.f32 0.0, %v971
      %v973 = vpop.f32.mrb[0].mxu0
      %974 = vmatprep.mubr.f32.mxu0 0.0
      %975 = vmatmul.mubr.f32.gmra.mrb[0].mxu0 %v749
      %v976 = vpop.f32.mrb[0].mxu0
      %v977 = vadd.f32 0.0, %v976
      %v978 = vpop.f32.mrb[0].mxu0
      %979 = vmatprep.mubr.f32.mxu0 0.0
      %980 = vmatmul.mubr.f32.gmra.mrb[0].mxu0 %v750
      %v981 = vpop.f32.mrb[0].mxu0
      %v982 = vadd.f32 0.0, %v981
      %v983 = vpop.f32.mrb[0].mxu0
      %984 = vmatprep.mubr.f32.mxu0 0.0
      %985 = vmatmul.mubr.f32.gmra.mrb[0].mxu0 %v751
      %v986 = vpop.f32.mrb[0].mxu0
      %v987 = vadd.f32 0.0, %v986
      %v988 = vpop.f32.mrb[0].mxu0
      %989 = vmatprep.mubr.f32.mxu0 0.0
      %990 = vmatmul.mubr.f32.gmra.mrb[0].mxu0 %v752
      %v991 = vpop.f32.mrb[0].mxu0
      %v992 = vadd.f32 0.0, %v991
      %v993 = vpop.f32.mrb[0].mxu0
      %994 = vdwg.mxu0
      %v995 = vadd.f32 %v562, %v837
      %v996 = vadd.f32 %v567, %v842
      %v997 = vadd.f32 %v572, %v847
      %v998 = vadd.f32 %v577, %v852
      %v999 = vadd.f32 %v582, %v857
      %v1000 = vadd.f32 %v587, %v862
      %v1001 = vadd.f32 %v592, %v867
      %v1002 = vadd.f32 %v597, %v872
      %v1003 = vadd.f32 %v602, %v877
      %v1004 = vadd.f32 %v607, %v882
      %v1005 = vadd.f32 %v612, %v887
      %v1006 = vadd.f32 %v617, %v892
      %v1007 = vadd.f32 %v622, %v897
      %v1008 = vadd.f32 %v627, %v902
      %v1009 = vadd.f32 %v632, %v907
      %v1010 = vadd.f32 %v637, %v912
      %v1011 = vadd.f32 %v642, %v917
      %v1012 = vadd.f32 %v647, %v922
      %v1013 = vadd.f32 %v652, %v927
      %v1014 = vadd.f32 %v657, %v932
      %v1015 = vadd.f32 %v662, %v937
      %v1016 = vadd.f32 %v667, %v942
      %v1017 = vadd.f32 %v672, %v947
      %v1018 = vadd.f32 %v677, %v952
      %v1019 = vadd.f32 %v682, %v957
      %v1020 = vadd.f32 %v687, %v962
      %v1021 = vadd.f32 %v692, %v967
      %v1022 = vadd.f32 %v697, %v972
      %v1023 = vadd.f32 %v702, %v977
      %v1024 = vadd.f32 %v707, %v982
      %v1025 = vadd.f32 %v712, %v987
      %v1026 = vadd.f32 %v717, %v992
      %s1027 = scalar_lea.vmem %s165, 304
      %v1028 = vld [vmem:[%s1027] sm:$0xff]
      %v1029 = vld [vmem:[%s1027 + $0x8] sm:$0xff]
      %v1030 = vld [vmem:[%s1027 + $0x10] sm:$0xff]
      %v1031 = vld [vmem:[%s1027 + $0x18] sm:$0xff]
      %v1032 = vld [vmem:[%s1027 + $0x20] sm:$0xff]
      %v1033 = vld [vmem:[%s1027 + $0x28] sm:$0xff]
      %v1034 = vld [vmem:[%s1027 + $0x30] sm:$0xff]
      %v1035 = vld [vmem:[%s1027 + $0x38] sm:$0xff]
      %v1036 = vld [vmem:[%s1027 + $0x40] sm:$0xff]
      %v1037 = vld [vmem:[%s1027 + $0x48] sm:$0xff]
      %v1038 = vld [vmem:[%s1027 + $0x50] sm:$0xff]
      %v1039 = vld [vmem:[%s1027 + $0x58] sm:$0xff]
      %v1040 = vld [vmem:[%s1027 + $0x60] sm:$0xff]
      %v1041 = vld [vmem:[%s1027 + $0x68] sm:$0xff]
      %v1042 = vld [vmem:[%s1027 + $0x70] sm:$0xff]
      %v1043 = vld [vmem:[%s1027 + $0x78] sm:$0xff]
      %v1044 = vld [vmem:[%s1027 + $0x80] sm:$0xff]
      %v1045 = vld [vmem:[%s1027 + $0x88] sm:$0xff]
      %v1046 = vld [vmem:[%s1027 + $0x90] sm:$0xff]
      %v1047 = vld [vmem:[%s1027 + $0x98] sm:$0xff]
      %v1048 = vld [vmem:[%s1027 + $0xa0] sm:$0xff]
      %v1049 = vld [vmem:[%s1027 + $0xa8] sm:$0xff]
      %v1050 = vld [vmem:[%s1027 + $0xb0] sm:$0xff]
      %v1051 = vld [vmem:[%s1027 + $0xb8] sm:$0xff]
      %v1052 = vld [vmem:[%s1027 + $0xc0] sm:$0xff]
      %v1053 = vld [vmem:[%s1027 + $0xc8] sm:$0xff]
      %v1054 = vld [vmem:[%s1027 + $0xd0] sm:$0xff]
      %v1055 = vld [vmem:[%s1027 + $0xd8] sm:$0xff]
      %v1056 = vld [vmem:[%s1027 + $0xe0] sm:$0xff]
      %v1057 = vld [vmem:[%s1027 + $0xe8] sm:$0xff]
      %v1058 = vld [vmem:[%s1027 + $0xf0] sm:$0xff]
      %v1059 = vld [vmem:[%s1027 + $0xf8] sm:$0xff]
      %s1060 = scalar_lea.vmem %s1, 384
      %v1061 = vld [vmem:[%s1060] sm:$0xff]
      %v1062 = vld [vmem:[%s1060 + $0x8] sm:$0xff]
      %v1063 = vld [vmem:[%s1060 + $0x10] sm:$0xff]
      %v1064 = vld [vmem:[%s1060 + $0x18] sm:$0xff]
      %v1065 = vld [vmem:[%s1060 + $0x20] sm:$0xff]
      %v1066 = vld [vmem:[%s1060 + $0x28] sm:$0xff]
      %v1067 = vld [vmem:[%s1060 + $0x30] sm:$0xff]
      %v1068 = vld [vmem:[%s1060 + $0x38] sm:$0xff]
      %v1069 = vld [vmem:[%s1060 + $0x40] sm:$0xff]
      %v1070 = vld [vmem:[%s1060 + $0x48] sm:$0xff]
      %v1071 = vld [vmem:[%s1060 + $0x50] sm:$0xff]
      %v1072 = vld [vmem:[%s1060 + $0x58] sm:$0xff]
      %v1073 = vld [vmem:[%s1060 + $0x60] sm:$0xff]
      %v1074 = vld [vmem:[%s1060 + $0x68] sm:$0xff]
      %v1075 = vld [vmem:[%s1060 + $0x70] sm:$0xff]
      %v1076 = vld [vmem:[%s1060 + $0x78] sm:$0xff]
      %1077 = vmatprep.subr.mxu0 0.0
      %1078 = vmatpush1.msra.mxu0 %v1061
      %1079 = vmatprep.subr.mxu0 0.0
      %1080 = vmatpush1.msra.mxu0 %v1062
      %1081 = vmatprep.subr.mxu0 0.0
      %1082 = vmatpush1.msra.mxu0 %v1063
      %1083 = vmatprep.subr.mxu0 0.0
      %1084 = vmatpush1.msra.mxu0 %v1064
      %1085 = vmatprep.subr.mxu0 0.0
      %1086 = vmatpush1.msra.mxu0 %v1065
      %1087 = vmatprep.subr.mxu0 0.0
      %1088 = vmatpush1.msra.mxu0 %v1066
      %1089 = vmatprep.subr.mxu0 0.0
      %1090 = vmatpush1.msra.mxu0 %v1067
      %1091 = vmatprep.subr.mxu0 0.0
      %1092 = vmatpush1.msra.mxu0 %v1068
      %1093 = vmatprep.subr.mxu0 0.0
      %1094 = vmatpush1.msra.mxu0 %v1069
      %1095 = vmatprep.subr.mxu0 0.0
      %1096 = vmatpush1.msra.mxu0 %v1070
      %1097 = vmatprep.subr.mxu0 0.0
      %1098 = vmatpush1.msra.mxu0 %v1071
      %1099 = vmatprep.subr.mxu0 0.0
      %1100 = vmatpush1.msra.mxu0 %v1072
      %1101 = vmatprep.subr.mxu0 0.0
      %1102 = vmatpush1.msra.mxu0 %v1073
      %1103 = vmatprep.subr.mxu0 0.0
      %1104 = vmatpush1.msra.mxu0 %v1074
      %1105 = vmatprep.subr.mxu0 0.0
      %1106 = vmatpush1.msra.mxu0 %v1075
      %1107 = vmatprep.subr.mxu0 0.0
      %1108 = vmatpush1.msra.mxu0 %v1076
      %1109 = vmatprep.subr.mxu0 0.0
      %1110 = vmatpush1.msra.mxu0 0.0
      %1111 = vmatprep.subr.mxu0 0.0
      %1112 = vmatpush1.msra.mxu0 0.0
      %1113 = vmatprep.subr.mxu0 0.0
      %1114 = vmatpush1.msra.mxu0 0.0
      %1115 = vmatprep.subr.mxu0 0.0
      %1116 = vmatpush1.msra.mxu0 0.0
      %1117 = vmatprep.subr.mxu0 0.0
      %1118 = vmatpush1.msra.mxu0 0.0
      %1119 = vmatprep.subr.mxu0 0.0
      %1120 = vmatpush1.msra.mxu0 0.0
      %1121 = vmatprep.subr.mxu0 0.0
      %1122 = vmatpush1.msra.mxu0 0.0
      %1123 = vmatprep.subr.mxu0 0.0
      %1124 = vmatpush1.msra.mxu0 0.0
      %1125 = vmatprep.subr.mxu0 0.0
      %1126 = vmatpush1.msra.mxu0 0.0
      %1127 = vmatprep.subr.mxu0 0.0
      %1128 = vmatpush1.msra.mxu0 0.0
      %1129 = vmatprep.subr.mxu0 0.0
      %1130 = vmatpush1.msra.mxu0 0.0
      %1131 = vmatprep.subr.mxu0 0.0
      %1132 = vmatpush1.msra.mxu0 0.0
      %1133 = vmatprep.subr.mxu0 0.0
      %1134 = vmatpush1.msra.mxu0 0.0
      %1135 = vmatprep.subr.mxu0 0.0
      %1136 = vmatpush1.msra.mxu0 0.0
      %1137 = vmatprep.subr.mxu0 0.0
      %1138 = vmatpush1.msra.mxu0 0.0
      %1139 = vmatprep.subr.mxu0 0.0
      %1140 = vmatpush1.msra.mxu0 0.0
      %1141 = vmatprep.mubr.f32.mxu0 0.0
      %1142 = vmatmul.mubr.f32.gmra.mrb[0].mxu0 %v1028
      %v1143 = vpop.f32.mrb[0].mxu0
      %v1144 = vadd.f32 0.0, %v1143
      %v1145 = vpop.f32.mrb[0].mxu0
      %1146 = vmatprep.mubr.f32.mxu0 0.0
      %1147 = vmatmul.mubr.f32.gmra.mrb[0].mxu0 %v1029
      %v1148 = vpop.f32.mrb[0].mxu0
      %v1149 = vadd.f32 0.0, %v1148
      %v1150 = vpop.f32.mrb[0].mxu0
      %1151 = vmatprep.mubr.f32.mxu0 0.0
      %1152 = vmatmul.mubr.f32.gmra.mrb[0].mxu0 %v1030
      %v1153 = vpop.f32.mrb[0].mxu0
      %v1154 = vadd.f32 0.0, %v1153
      %v1155 = vpop.f32.mrb[0].mxu0
      %1156 = vmatprep.mubr.f32.mxu0 0.0
      %1157 = vmatmul.mubr.f32.gmra.mrb[0].mxu0 %v1031
      %v1158 = vpop.f32.mrb[0].mxu0
      %v1159 = vadd.f32 0.0, %v1158
      %v1160 = vpop.f32.mrb[0].mxu0
      %1161 = vmatprep.mubr.f32.mxu0 0.0
      %1162 = vmatmul.mubr.f32.gmra.mrb[0].mxu0 %v1032
      %v1163 = vpop.f32.mrb[0].mxu0
      %v1164 = vadd.f32 0.0, %v1163
      %v1165 = vpop.f32.mrb[0].mxu0
      %1166 = vmatprep.mubr.f32.mxu0 0.0
      %1167 = vmatmul.mubr.f32.gmra.mrb[0].mxu0 %v1033
      %v1168 = vpop.f32.mrb[0].mxu0
      %v1169 = vadd.f32 0.0, %v1168
      %v1170 = vpop.f32.mrb[0].mxu0
      %1171 = vmatprep.mubr.f32.mxu0 0.0
      %1172 = vmatmul.mubr.f32.gmra.mrb[0].mxu0 %v1034
      %v1173 = vpop.f32.mrb[0].mxu0
      %v1174 = vadd.f32 0.0, %v1173
      %v1175 = vpop.f32.mrb[0].mxu0
      %1176 = vmatprep.mubr.f32.mxu0 0.0
      %1177 = vmatmul.mubr.f32.gmra.mrb[0].mxu0 %v1035
      %v1178 = vpop.f32.mrb[0].mxu0
      %v1179 = vadd.f32 0.0, %v1178
      %v1180 = vpop.f32.mrb[0].mxu0
      %1181 = vmatprep.mubr.f32.mxu0 0.0
      %1182 = vmatmul.mubr.f32.gmra.mrb[0].mxu0 %v1036
      %v1183 = vpop.f32.mrb[0].mxu0
      %v1184 = vadd.f32 0.0, %v1183
      %v1185 = vpop.f32.mrb[0].mxu0
      %1186 = vmatprep.mubr.f32.mxu0 0.0
      %1187 = vmatmul.mubr.f32.gmra.mrb[0].mxu0 %v1037
      %v1188 = vpop.f32.mrb[0].mxu0
      %v1189 = vadd.f32 0.0, %v1188
      %v1190 = vpop.f32.mrb[0].mxu0
      %1191 = vmatprep.mubr.f32.mxu0 0.0
      %1192 = vmatmul.mubr.f32.gmra.mrb[0].mxu0 %v1038
      %v1193 = vpop.f32.mrb[0].mxu0
      %v1194 = vadd.f32 0.0, %v1193
      %v1195 = vpop.f32.mrb[0].mxu0
      %1196 = vmatprep.mubr.f32.mxu0 0.0
      %1197 = vmatmul.mubr.f32.gmra.mrb[0].mxu0 %v1039
      %v1198 = vpop.f32.mrb[0].mxu0
      %v1199 = vadd.f32 0.0, %v1198
      %v1200 = vpop.f32.mrb[0].mxu0
      %1201 = vmatprep.mubr.f32.mxu0 0.0
      %1202 = vmatmul.mubr.f32.gmra.mrb[0].mxu0 %v1040
      %v1203 = vpop.f32.mrb[0].mxu0
      %v1204 = vadd.f32 0.0, %v1203
      %v1205 = vpop.f32.mrb[0].mxu0
      %1206 = vmatprep.mubr.f32.mxu0 0.0
      %1207 = vmatmul.mubr.f32.gmra.mrb[0].mxu0 %v1041
      %v1208 = vpop.f32.mrb[0].mxu0
      %v1209 = vadd.f32 0.0, %v1208
      %v1210 = vpop.f32.mrb[0].mxu0
      %1211 = vmatprep.mubr.f32.mxu0 0.0
      %1212 = vmatmul.mubr.f32.gmra.mrb[0].mxu0 %v1042
      %v1213 = vpop.f32.mrb[0].mxu0
      %v1214 = vadd.f32 0.0, %v1213
      %v1215 = vpop.f32.mrb[0].mxu0
      %1216 = vmatprep.mubr.f32.mxu0 0.0
      %1217 = vmatmul.mubr.f32.gmra.mrb[0].mxu0 %v1043
      %v1218 = vpop.f32.mrb[0].mxu0
      %v1219 = vadd.f32 0.0, %v1218
      %v1220 = vpop.f32.mrb[0].mxu0
      %1221 = vmatprep.mubr.f32.mxu0 0.0
      %1222 = vmatmul.mubr.f32.gmra.mrb[0].mxu0 %v1044
      %v1223 = vpop.f32.mrb[0].mxu0
      %v1224 = vadd.f32 0.0, %v1223
      %v1225 = vpop.f32.mrb[0].mxu0
      %1226 = vmatprep.mubr.f32.mxu0 0.0
      %1227 = vmatmul.mubr.f32.gmra.mrb[0].mxu0 %v1045
      %v1228 = vpop.f32.mrb[0].mxu0
      %v1229 = vadd.f32 0.0, %v1228
      %v1230 = vpop.f32.mrb[0].mxu0
      %1231 = vmatprep.mubr.f32.mxu0 0.0
      %1232 = vmatmul.mubr.f32.gmra.mrb[0].mxu0 %v1046
      %v1233 = vpop.f32.mrb[0].mxu0
      %v1234 = vadd.f32 0.0, %v1233
      %v1235 = vpop.f32.mrb[0].mxu0
      %1236 = vmatprep.mubr.f32.mxu0 0.0
      %1237 = vmatmul.mubr.f32.gmra.mrb[0].mxu0 %v1047
      %v1238 = vpop.f32.mrb[0].mxu0
      %v1239 = vadd.f32 0.0, %v1238
      %v1240 = vpop.f32.mrb[0].mxu0
      %1241 = vmatprep.mubr.f32.mxu0 0.0
      %1242 = vmatmul.mubr.f32.gmra.mrb[0].mxu0 %v1048
      %v1243 = vpop.f32.mrb[0].mxu0
      %v1244 = vadd.f32 0.0, %v1243
      %v1245 = vpop.f32.mrb[0].mxu0
      %1246 = vmatprep.mubr.f32.mxu0 0.0
      %1247 = vmatmul.mubr.f32.gmra.mrb[0].mxu0 %v1049
      %v1248 = vpop.f32.mrb[0].mxu0
      %v1249 = vadd.f32 0.0, %v1248
      %v1250 = vpop.f32.mrb[0].mxu0
      %1251 = vmatprep.mubr.f32.mxu0 0.0
      %1252 = vmatmul.mubr.f32.gmra.mrb[0].mxu0 %v1050
      %v1253 = vpop.f32.mrb[0].mxu0
      %v1254 = vadd.f32 0.0, %v1253
      %v1255 = vpop.f32.mrb[0].mxu0
      %1256 = vmatprep.mubr.f32.mxu0 0.0
      %1257 = vmatmul.mubr.f32.gmra.mrb[0].mxu0 %v1051
      %v1258 = vpop.f32.mrb[0].mxu0
      %v1259 = vadd.f32 0.0, %v1258
      %v1260 = vpop.f32.mrb[0].mxu0
      %1261 = vmatprep.mubr.f32.mxu0 0.0
      %1262 = vmatmul.mubr.f32.gmra.mrb[0].mxu0 %v1052
      %v1263 = vpop.f32.mrb[0].mxu0
      %v1264 = vadd.f32 0.0, %v1263
      %v1265 = vpop.f32.mrb[0].mxu0
      %1266 = vmatprep.mubr.f32.mxu0 0.0
      %1267 = vmatmul.mubr.f32.gmra.mrb[0].mxu0 %v1053
      %v1268 = vpop.f32.mrb[0].mxu0
      %v1269 = vadd.f32 0.0, %v1268
      %v1270 = vpop.f32.mrb[0].mxu0
      %1271 = vmatprep.mubr.f32.mxu0 0.0
      %1272 = vmatmul.mubr.f32.gmra.mrb[0].mxu0 %v1054
      %v1273 = vpop.f32.mrb[0].mxu0
      %v1274 = vadd.f32 0.0, %v1273
      %v1275 = vpop.f32.mrb[0].mxu0
      %1276 = vmatprep.mubr.f32.mxu0 0.0
      %1277 = vmatmul.mubr.f32.gmra.mrb[0].mxu0 %v1055
      %v1278 = vpop.f32.mrb[0].mxu0
      %v1279 = vadd.f32 0.0, %v1278
      %v1280 = vpop.f32.mrb[0].mxu0
      %1281 = vmatprep.mubr.f32.mxu0 0.0
      %1282 = vmatmul.mubr.f32.gmra.mrb[0].mxu0 %v1056
      %v1283 = vpop.f32.mrb[0].mxu0
      %v1284 = vadd.f32 0.0, %v1283
      %v1285 = vpop.f32.mrb[0].mxu0
      %1286 = vmatprep.mubr.f32.mxu0 0.0
      %1287 = vmatmul.mubr.f32.gmra.mrb[0].mxu0 %v1057
      %v1288 = vpop.f32.mrb[0].mxu0
      %v1289 = vadd.f32 0.0, %v1288
      %v1290 = vpop.f32.mrb[0].mxu0
      %1291 = vmatprep.mubr.f32.mxu0 0.0
      %1292 = vmatmul.mubr.f32.gmra.mrb[0].mxu0 %v1058
      %v1293 = vpop.f32.mrb[0].mxu0
      %v1294 = vadd.f32 0.0, %v1293
      %v1295 = vpop.f32.mrb[0].mxu0
      %1296 = vmatprep.mubr.f32.mxu0 0.0
      %1297 = vmatmul.mubr.f32.gmra.mrb[0].mxu0 %v1059
      %v1298 = vpop.f32.mrb[0].mxu0
      %v1299 = vadd.f32 0.0, %v1298
      %v1300 = vpop.f32.mrb[0].mxu0
      %1301 = vdwg.mxu0
      %v1302 = vadd.f32 %v995, %v1144
      %v1303 = vadd.f32 %v996, %v1149
      %v1304 = vadd.f32 %v997, %v1154
      %v1305 = vadd.f32 %v998, %v1159
      %v1306 = vadd.f32 %v999, %v1164
      %v1307 = vadd.f32 %v1000, %v1169
      %v1308 = vadd.f32 %v1001, %v1174
      %v1309 = vadd.f32 %v1002, %v1179
      %v1310 = vadd.f32 %v1003, %v1184
      %v1311 = vadd.f32 %v1004, %v1189
      %v1312 = vadd.f32 %v1005, %v1194
      %v1313 = vadd.f32 %v1006, %v1199
      %v1314 = vadd.f32 %v1007, %v1204
      %v1315 = vadd.f32 %v1008, %v1209
      %v1316 = vadd.f32 %v1009, %v1214
      %v1317 = vadd.f32 %v1010, %v1219
      %v1318 = vadd.f32 %v1011, %v1224
      %v1319 = vadd.f32 %v1012, %v1229
      %v1320 = vadd.f32 %v1013, %v1234
      %v1321 = vadd.f32 %v1014, %v1239
      %v1322 = vadd.f32 %v1015, %v1244
      %v1323 = vadd.f32 %v1016, %v1249
      %v1324 = vadd.f32 %v1017, %v1254
      %v1325 = vadd.f32 %v1018, %v1259
      %v1326 = vadd.f32 %v1019, %v1264
      %v1327 = vadd.f32 %v1020, %v1269
      %v1328 = vadd.f32 %v1021, %v1274
      %v1329 = vadd.f32 %v1022, %v1279
      %v1330 = vadd.f32 %v1023, %v1284
      %v1331 = vadd.f32 %v1024, %v1289
      %v1332 = vadd.f32 %v1025, %v1294
      %v1333 = vadd.f32 %v1026, %v1299
      %v1335 = vlaneseq
      %v1336 = vshrl.u32 %v1335, 7
      %v1337 = vsub.s32 0, %v1336
      %v1338 = vrot.slane %v171, %v1337
      %v1340 = vadd.f32 %v1302, %v1338
      %v1341 = vadd.f32 %v1303, %v1338
      %v1342 = vadd.f32 %v1304, %v1338
      %v1343 = vadd.f32 %v1305, %v1338
      %v1344 = vadd.f32 %v1306, %v1338
      %v1345 = vadd.f32 %v1307, %v1338
      %v1346 = vadd.f32 %v1308, %v1338
      %v1347 = vadd.f32 %v1309, %v1338
      %v1348 = vadd.f32 %v1310, %v1338
      %v1349 = vadd.f32 %v1311, %v1338
      %v1350 = vadd.f32 %v1312, %v1338
      %v1351 = vadd.f32 %v1313, %v1338
      %v1352 = vadd.f32 %v1314, %v1338
      %v1353 = vadd.f32 %v1315, %v1338
      %v1354 = vadd.f32 %v1316, %v1338
      %v1355 = vadd.f32 %v1317, %v1338
      %v1356 = vadd.f32 %v1318, %v1338
      %v1357 = vadd.f32 %v1319, %v1338
      %v1358 = vadd.f32 %v1320, %v1338
      %v1359 = vadd.f32 %v1321, %v1338
      %v1360 = vadd.f32 %v1322, %v1338
      %v1361 = vadd.f32 %v1323, %v1338
      %v1362 = vadd.f32 %v1324, %v1338
      %v1363 = vadd.f32 %v1325, %v1338
      %v1364 = vadd.f32 %v1326, %v1338
      %v1365 = vadd.f32 %v1327, %v1338
      %v1366 = vadd.f32 %v1328, %v1338
      %v1367 = vadd.f32 %v1329, %v1338
      %v1368 = vadd.f32 %v1330, %v1338
      %v1369 = vadd.f32 %v1331, %v1338
      %v1370 = vadd.f32 %v1332, %v1338
      %v1371 = vadd.f32 %v1333, %v1338
      %1372 = vst [vmem:[%s170] sm:$0xff] %v1340
      %1373 = vst [vmem:[%s170 + $0x10] sm:$0xff] %v1341
      %1374 = vst [vmem:[%s170 + $0x40] sm:$0xff] %v1342
      %1375 = vst [vmem:[%s170 + $0x50] sm:$0xff] %v1343
      %1376 = vst [vmem:[%s170 + $0x80] sm:$0xff] %v1344
      %1377 = vst [vmem:[%s170 + $0x90] sm:$0xff] %v1345
      %1378 = vst [vmem:[%s170 + $0xc0] sm:$0xff] %v1346
      %1379 = vst [vmem:[%s170 + $0xd0] sm:$0xff] %v1347
      %1380 = vst [vmem:[%s170 + $0x100] sm:$0xff] %v1348
      %1381 = vst [vmem:[%s170 + $0x110] sm:$0xff] %v1349
      %1382 = vst [vmem:[%s170 + $0x140] sm:$0xff] %v1350
      %1383 = vst [vmem:[%s170 + $0x150] sm:$0xff] %v1351
      %1384 = vst [vmem:[%s170 + $0x180] sm:$0xff] %v1352
      %1385 = vst [vmem:[%s170 + $0x190] sm:$0xff] %v1353
      %1386 = vst [vmem:[%s170 + $0x1c0] sm:$0xff] %v1354
      %1387 = vst [vmem:[%s170 + $0x1d0] sm:$0xff] %v1355
      %1388 = vst [vmem:[%s170 + $0x200] sm:$0xff] %v1356
      %1389 = vst [vmem:[%s170 + $0x210] sm:$0xff] %v1357
      %1390 = vst [vmem:[%s170 + $0x240] sm:$0xff] %v1358
      %1391 = vst [vmem:[%s170 + $0x250] sm:$0xff] %v1359
      %1392 = vst [vmem:[%s170 + $0x280] sm:$0xff] %v1360
      %1393 = vst [vmem:[%s170 + $0x290] sm:$0xff] %v1361
      %1394 = vst [vmem:[%s170 + $0x2c0] sm:$0xff] %v1362
      %1395 = vst [vmem:[%s170 + $0x2d0] sm:$0xff] %v1363
      %1396 = vst [vmem:[%s170 + $0x300] sm:$0xff] %v1364
      %1397 = vst [vmem:[%s170 + $0x310] sm:$0xff] %v1365
      %1398 = vst [vmem:[%s170 + $0x340] sm:$0xff] %v1366
      %1399 = vst [vmem:[%s170 + $0x350] sm:$0xff] %v1367
      %1400 = vst [vmem:[%s170 + $0x380] sm:$0xff] %v1368
      %1401 = vst [vmem:[%s170 + $0x390] sm:$0xff] %v1369
      %1402 = vst [vmem:[%s170 + $0x3c0] sm:$0xff] %v1370
      %1403 = vst [vmem:[%s170 + $0x3d0] sm:$0xff] %v1371
      %v1404 = vld [vmem:[%s220] sm:$0xff]
      %v1405 = vld [vmem:[%s220 + $0x8] sm:$0xff]
      %v1406 = vld [vmem:[%s220 + $0x10] sm:$0xff]
      %v1407 = vld [vmem:[%s220 + $0x18] sm:$0xff]
      %v1408 = vld [vmem:[%s220 + $0x20] sm:$0xff]
      %v1409 = vld [vmem:[%s220 + $0x28] sm:$0xff]
      %v1410 = vld [vmem:[%s220 + $0x30] sm:$0xff]
      %v1411 = vld [vmem:[%s220 + $0x38] sm:$0xff]
      %v1412 = vld [vmem:[%s220 + $0x40] sm:$0xff]
      %v1413 = vld [vmem:[%s220 + $0x48] sm:$0xff]
      %v1414 = vld [vmem:[%s220 + $0x50] sm:$0xff]
      %v1415 = vld [vmem:[%s220 + $0x58] sm:$0xff]
      %v1416 = vld [vmem:[%s220 + $0x60] sm:$0xff]
      %v1417 = vld [vmem:[%s220 + $0x68] sm:$0xff]
      %v1418 = vld [vmem:[%s220 + $0x70] sm:$0xff]
      %v1419 = vld [vmem:[%s220 + $0x78] sm:$0xff]
      %v1420 = vld [vmem:[%s220 + $0x80] sm:$0xff]
      %v1421 = vld [vmem:[%s220 + $0x88] sm:$0xff]
      %v1422 = vld [vmem:[%s220 + $0x90] sm:$0xff]
      %v1423 = vld [vmem:[%s220 + $0x98] sm:$0xff]
      %v1424 = vld [vmem:[%s220 + $0xa0] sm:$0xff]
      %v1425 = vld [vmem:[%s220 + $0xa8] sm:$0xff]
      %v1426 = vld [vmem:[%s220 + $0xb0] sm:$0xff]
      %v1427 = vld [vmem:[%s220 + $0xb8] sm:$0xff]
      %v1428 = vld [vmem:[%s220 + $0xc0] sm:$0xff]
      %v1429 = vld [vmem:[%s220 + $0xc8] sm:$0xff]
      %v1430 = vld [vmem:[%s220 + $0xd0] sm:$0xff]
      %v1431 = vld [vmem:[%s220 + $0xd8] sm:$0xff]
      %v1432 = vld [vmem:[%s220 + $0xe0] sm:$0xff]
      %v1433 = vld [vmem:[%s220 + $0xe8] sm:$0xff]
      %v1434 = vld [vmem:[%s220 + $0xf0] sm:$0xff]
      %v1435 = vld [vmem:[%s220 + $0xf8] sm:$0xff]
      %s1436 = scalar_lea.vmem %s1, 512
      %v1437 = vld [vmem:[%s1436] sm:$0xff]
      %v1438 = vld [vmem:[%s1436 + $0x8] sm:$0xff]
      %v1439 = vld [vmem:[%s1436 + $0x10] sm:$0xff]
      %v1440 = vld [vmem:[%s1436 + $0x18] sm:$0xff]
      %v1441 = vld [vmem:[%s1436 + $0x20] sm:$0xff]
      %v1442 = vld [vmem:[%s1436 + $0x28] sm:$0xff]
      %v1443 = vld [vmem:[%s1436 + $0x30] sm:$0xff]
      %v1444 = vld [vmem:[%s1436 + $0x38] sm:$0xff]
      %v1445 = vld [vmem:[%s1436 + $0x40] sm:$0xff]
      %v1446 = vld [vmem:[%s1436 + $0x48] sm:$0xff]
      %v1447 = vld [vmem:[%s1436 + $0x50] sm:$0xff]
      %v1448 = vld [vmem:[%s1436 + $0x58] sm:$0xff]
      %v1449 = vld [vmem:[%s1436 + $0x60] sm:$0xff]
      %v1450 = vld [vmem:[%s1436 + $0x68] sm:$0xff]
      %v1451 = vld [vmem:[%s1436 + $0x70] sm:$0xff]
      %v1452 = vld [vmem:[%s1436 + $0x78] sm:$0xff]
      %s1453 = scalar_lea.vmem %s165, 576
      %v1454 = vld [vmem:[%s1453] sm:$0xff]
      %v1455 = vld [vmem:[%s1453 + $0x8] sm:$0xff]
      %v1456 = vld [vmem:[%s1453 + $0x10] sm:$0xff]
      %v1457 = vld [vmem:[%s1453 + $0x18] sm:$0xff]
      %v1458 = vld [vmem:[%s1453 + $0x20] sm:$0xff]
      %v1459 = vld [vmem:[%s1453 + $0x28] sm:$0xff]
      %v1460 = vld [vmem:[%s1453 + $0x30] sm:$0xff]
      %v1461 = vld [vmem:[%s1453 + $0x38] sm:$0xff]
      %v1462 = vld [vmem:[%s1453 + $0x40] sm:$0xff]
      %v1463 = vld [vmem:[%s1453 + $0x48] sm:$0xff]
      %v1464 = vld [vmem:[%s1453 + $0x50] sm:$0xff]
      %v1465 = vld [vmem:[%s1453 + $0x58] sm:$0xff]
      %v1466 = vld [vmem:[%s1453 + $0x60] sm:$0xff]
      %v1467 = vld [vmem:[%s1453 + $0x68] sm:$0xff]
      %v1468 = vld [vmem:[%s1453 + $0x70] sm:$0xff]
      %v1469 = vld [vmem:[%s1453 + $0x78] sm:$0xff]
      %v1470 = vld [vmem:[%s1453 + $0x80] sm:$0xff]
      %v1471 = vld [vmem:[%s1453 + $0x88] sm:$0xff]
      %v1472 = vld [vmem:[%s1453 + $0x90] sm:$0xff]
      %v1473 = vld [vmem:[%s1453 + $0x98] sm:$0xff]
      %v1474 = vld [vmem:[%s1453 + $0xa0] sm:$0xff]
      %v1475 = vld [vmem:[%s1453 + $0xa8] sm:$0xff]
      %v1476 = vld [vmem:[%s1453 + $0xb0] sm:$0xff]
      %v1477 = vld [vmem:[%s1453 + $0xb8] sm:$0xff]
      %v1478 = vld [vmem:[%s1453 + $0xc0] sm:$0xff]
      %v1479 = vld [vmem:[%s1453 + $0xc8] sm:$0xff]
      %v1480 = vld [vmem:[%s1453 + $0xd0] sm:$0xff]
      %v1481 = vld [vmem:[%s1453 + $0xd8] sm:$0xff]
      %v1482 = vld [vmem:[%s1453 + $0xe0] sm:$0xff]
      %v1483 = vld [vmem:[%s1453 + $0xe8] sm:$0xff]
      %v1484 = vld [vmem:[%s1453 + $0xf0] sm:$0xff]
      %v1485 = vld [vmem:[%s1453 + $0xf8] sm:$0xff]
      %s1486 = scalar_lea.vmem %s1, 640
      %v1487 = vld [vmem:[%s1486] sm:$0xff]
      %v1488 = vld [vmem:[%s1486 + $0x8] sm:$0xff]
      %v1489 = vld [vmem:[%s1486 + $0x10] sm:$0xff]
      %v1490 = vld [vmem:[%s1486 + $0x18] sm:$0xff]
      %v1491 = vld [vmem:[%s1486 + $0x20] sm:$0xff]
      %v1492 = vld [vmem:[%s1486 + $0x28] sm:$0xff]
      %v1493 = vld [vmem:[%s1486 + $0x30] sm:$0xff]
      %v1494 = vld [vmem:[%s1486 + $0x38] sm:$0xff]
      %v1495 = vld [vmem:[%s1486 + $0x40] sm:$0xff]
      %v1496 = vld [vmem:[%s1486 + $0x48] sm:$0xff]
      %v1497 = vld [vmem:[%s1486 + $0x50] sm:$0xff]
      %v1498 = vld [vmem:[%s1486 + $0x58] sm:$0xff]
      %v1499 = vld [vmem:[%s1486 + $0x60] sm:$0xff]
      %v1500 = vld [vmem:[%s1486 + $0x68] sm:$0xff]
      %v1501 = vld [vmem:[%s1486 + $0x70] sm:$0xff]
      %v1502 = vld [vmem:[%s1486 + $0x78] sm:$0xff]
      %1503 = vmatprep.subr.mxu0 0.0
      %1504 = vmatpush1.msra.mxu0 %v1487
      %1505 = vmatprep.subr.mxu0 0.0
      %1506 = vmatpush1.msra.mxu0 %v1488
      %1507 = vmatprep.subr.mxu0 0.0
      %1508 = vmatpush1.msra.mxu0 %v1489
      %1509 = vmatprep.subr.mxu0 0.0
      %1510 = vmatpush1.msra.mxu0 %v1490
      %1511 = vmatprep.subr.mxu0 0.0
      %1512 = vmatpush1.msra.mxu0 %v1491
      %1513 = vmatprep.subr.mxu0 0.0
      %1514 = vmatpush1.msra.mxu0 %v1492
      %1515 = vmatprep.subr.mxu0 0.0
      %1516 = vmatpush1.msra.mxu0 %v1493
      %1517 = vmatprep.subr.mxu0 0.0
      %1518 = vmatpush1.msra.mxu0 %v1494
      %1519 = vmatprep.subr.mxu0 0.0
      %1520 = vmatpush1.msra.mxu0 %v1495
      %1521 = vmatprep.subr.mxu0 0.0
      %1522 = vmatpush1.msra.mxu0 %v1496
      %1523 = vmatprep.subr.mxu0 0.0
      %1524 = vmatpush1.msra.mxu0 %v1497
      %1525 = vmatprep.subr.mxu0 0.0
      %1526 = vmatpush1.msra.mxu0 %v1498
      %1527 = vmatprep.subr.mxu0 0.0
      %1528 = vmatpush1.msra.mxu0 %v1499
      %1529 = vmatprep.subr.mxu0 0.0
      %1530 = vmatpush1.msra.mxu0 %v1500
      %1531 = vmatprep.subr.mxu0 0.0
      %1532 = vmatpush1.msra.mxu0 %v1501
      %1533 = vmatprep.subr.mxu0 0.0
      %1534 = vmatpush1.msra.mxu0 %v1502
      %1535 = vmatprep.subr.mxu0 0.0
      %1536 = vmatpush1.msra.mxu0 0.0
      %1537 = vmatprep.subr.mxu0 0.0
      %1538 = vmatpush1.msra.mxu0 0.0
      %1539 = vmatprep.subr.mxu0 0.0
      %1540 = vmatpush1.msra.mxu0 0.0
      %1541 = vmatprep.subr.mxu0 0.0
      %1542 = vmatpush1.msra.mxu0 0.0
      %1543 = vmatprep.subr.mxu0 0.0
      %1544 = vmatpush1.msra.mxu0 0.0
      %1545 = vmatprep.subr.mxu0 0.0
      %1546 = vmatpush1.msra.mxu0 0.0
      %1547 = vmatprep.subr.mxu0 0.0
      %1548 = vmatpush1.msra.mxu0 0.0
      %1549 = vmatprep.subr.mxu0 0.0
      %1550 = vmatpush1.msra.mxu0 0.0
      %1551 = vmatprep.subr.mxu0 0.0
      %1552 = vmatpush1.msra.mxu0 0.0
      %1553 = vmatprep.subr.mxu0 0.0
      %1554 = vmatpush1.msra.mxu0 0.0
      %1555 = vmatprep.subr.mxu0 0.0
      %1556 = vmatpush1.msra.mxu0 0.0
      %1557 = vmatprep.subr.mxu0 0.0
      %1558 = vmatpush1.msra.mxu0 0.0
      %1559 = vmatprep.subr.mxu0 0.0
      %1560 = vmatpush1.msra.mxu0 0.0
      %1561 = vmatprep.subr.mxu0 0.0
      %1562 = vmatpush1.msra.mxu0 0.0
      %1563 = vmatprep.subr.mxu0 0.0
      %1564 = vmatpush1.msra.mxu0 0.0
      %1565 = vmatprep.subr.mxu0 0.0
      %1566 = vmatpush1.msra.mxu0 0.0
      %1567 = vmatprep.mubr.f32.mxu0 0.0
      %1568 = vmatmul.mubr.f32.gmra.mrb[0].mxu0 %v1454
      %v1569 = vpop.f32.mrb[0].mxu0
      %v1570 = vadd.f32 0.0, %v1569
      %v1571 = vpop.f32.mrb[0].mxu0
      %1572 = vmatprep.mubr.f32.mxu0 0.0
      %1573 = vmatmul.mubr.f32.gmra.mrb[0].mxu0 %v1455
      %v1574 = vpop.f32.mrb[0].mxu0
      %v1575 = vadd.f32 0.0, %v1574
      %v1576 = vpop.f32.mrb[0].mxu0
      %1577 = vmatprep.mubr.f32.mxu0 0.0
      %1578 = vmatmul.mubr.f32.gmra.mrb[0].mxu0 %v1456
      %v1579 = vpop.f32.mrb[0].mxu0
      %v1580 = vadd.f32 0.0, %v1579
      %v1581 = vpop.f32.mrb[0].mxu0
      %1582 = vmatprep.mubr.f32.mxu0 0.0
      %1583 = vmatmul.mubr.f32.gmra.mrb[0].mxu0 %v1457
      %v1584 = vpop.f32.mrb[0].mxu0
      %v1585 = vadd.f32 0.0, %v1584
      %v1586 = vpop.f32.mrb[0].mxu0
      %1587 = vmatprep.mubr.f32.mxu0 0.0
      %1588 = vmatmul.mubr.f32.gmra.mrb[0].mxu0 %v1458
      %v1589 = vpop.f32.mrb[0].mxu0
      %v1590 = vadd.f32 0.0, %v1589
      %v1591 = vpop.f32.mrb[0].mxu0
      %1592 = vmatprep.mubr.f32.mxu0 0.0
      %1593 = vmatmul.mubr.f32.gmra.mrb[0].mxu0 %v1459
      %v1594 = vpop.f32.mrb[0].mxu0
      %v1595 = vadd.f32 0.0, %v1594
      %v1596 = vpop.f32.mrb[0].mxu0
      %1597 = vmatprep.mubr.f32.mxu0 0.0
      %1598 = vmatmul.mubr.f32.gmra.mrb[0].mxu0 %v1460
      %v1599 = vpop.f32.mrb[0].mxu0
      %v1600 = vadd.f32 0.0, %v1599
      %v1601 = vpop.f32.mrb[0].mxu0
      %1602 = vmatprep.mubr.f32.mxu0 0.0
      %1603 = vmatmul.mubr.f32.gmra.mrb[0].mxu0 %v1461
      %v1604 = vpop.f32.mrb[0].mxu0
      %v1605 = vadd.f32 0.0, %v1604
      %v1606 = vpop.f32.mrb[0].mxu0
      %1607 = vmatprep.mubr.f32.mxu0 0.0
      %1608 = vmatmul.mubr.f32.gmra.mrb[0].mxu0 %v1462
      %v1609 = vpop.f32.mrb[0].mxu0
      %v1610 = vadd.f32 0.0, %v1609
      %v1611 = vpop.f32.mrb[0].mxu0
      %1612 = vmatprep.mubr.f32.mxu0 0.0
      %1613 = vmatmul.mubr.f32.gmra.mrb[0].mxu0 %v1463
      %v1614 = vpop.f32.mrb[0].mxu0
      %v1615 = vadd.f32 0.0, %v1614
      %v1616 = vpop.f32.mrb[0].mxu0
      %1617 = vmatprep.mubr.f32.mxu0 0.0
      %1618 = vmatmul.mubr.f32.gmra.mrb[0].mxu0 %v1464
      %v1619 = vpop.f32.mrb[0].mxu0
      %v1620 = vadd.f32 0.0, %v1619
      %v1621 = vpop.f32.mrb[0].mxu0
      %1622 = vmatprep.mubr.f32.mxu0 0.0
      %1623 = vmatmul.mubr.f32.gmra.mrb[0].mxu0 %v1465
      %v1624 = vpop.f32.mrb[0].mxu0
      %v1625 = vadd.f32 0.0, %v1624
      %v1626 = vpop.f32.mrb[0].mxu0
      %1627 = vmatprep.mubr.f32.mxu0 0.0
      %1628 = vmatmul.mubr.f32.gmra.mrb[0].mxu0 %v1466
      %v1629 = vpop.f32.mrb[0].mxu0
      %v1630 = vadd.f32 0.0, %v1629
      %v1631 = vpop.f32.mrb[0].mxu0
      %1632 = vmatprep.mubr.f32.mxu0 0.0
      %1633 = vmatmul.mubr.f32.gmra.mrb[0].mxu0 %v1467
      %v1634 = vpop.f32.mrb[0].mxu0
      %v1635 = vadd.f32 0.0, %v1634
      %v1636 = vpop.f32.mrb[0].mxu0
      %1637 = vmatprep.mubr.f32.mxu0 0.0
      %1638 = vmatmul.mubr.f32.gmra.mrb[0].mxu0 %v1468
      %v1639 = vpop.f32.mrb[0].mxu0
      %v1640 = vadd.f32 0.0, %v1639
      %v1641 = vpop.f32.mrb[0].mxu0
      %1642 = vmatprep.mubr.f32.mxu0 0.0
      %1643 = vmatmul.mubr.f32.gmra.mrb[0].mxu0 %v1469
      %v1644 = vpop.f32.mrb[0].mxu0
      %v1645 = vadd.f32 0.0, %v1644
      %v1646 = vpop.f32.mrb[0].mxu0
      %1647 = vmatprep.mubr.f32.mxu0 0.0
      %1648 = vmatmul.mubr.f32.gmra.mrb[0].mxu0 %v1470
      %v1649 = vpop.f32.mrb[0].mxu0
      %v1650 = vadd.f32 0.0, %v1649
      %v1651 = vpop.f32.mrb[0].mxu0
      %1652 = vmatprep.mubr.f32.mxu0 0.0
      %1653 = vmatmul.mubr.f32.gmra.mrb[0].mxu0 %v1471
      %v1654 = vpop.f32.mrb[0].mxu0
      %v1655 = vadd.f32 0.0, %v1654
      %v1656 = vpop.f32.mrb[0].mxu0
      %1657 = vmatprep.mubr.f32.mxu0 0.0
      %1658 = vmatmul.mubr.f32.gmra.mrb[0].mxu0 %v1472
      %v1659 = vpop.f32.mrb[0].mxu0
      %v1660 = vadd.f32 0.0, %v1659
      %v1661 = vpop.f32.mrb[0].mxu0
      %1662 = vmatprep.mubr.f32.mxu0 0.0
      %1663 = vmatmul.mubr.f32.gmra.mrb[0].mxu0 %v1473
      %v1664 = vpop.f32.mrb[0].mxu0
      %v1665 = vadd.f32 0.0, %v1664
      %v1666 = vpop.f32.mrb[0].mxu0
      %1667 = vmatprep.mubr.f32.mxu0 0.0
      %1668 = vmatmul.mubr.f32.gmra.mrb[0].mxu0 %v1474
      %v1669 = vpop.f32.mrb[0].mxu0
      %v1670 = vadd.f32 0.0, %v1669
      %v1671 = vpop.f32.mrb[0].mxu0
      %1672 = vmatprep.mubr.f32.mxu0 0.0
      %1673 = vmatmul.mubr.f32.gmra.mrb[0].mxu0 %v1475
      %v1674 = vpop.f32.mrb[0].mxu0
      %v1675 = vadd.f32 0.0, %v1674
      %v1676 = vpop.f32.mrb[0].mxu0
      %1677 = vmatprep.mubr.f32.mxu0 0.0
      %1678 = vmatmul.mubr.f32.gmra.mrb[0].mxu0 %v1476
      %v1679 = vpop.f32.mrb[0].mxu0
      %v1680 = vadd.f32 0.0, %v1679
      %v1681 = vpop.f32.mrb[0].mxu0
      %1682 = vmatprep.mubr.f32.mxu0 0.0
      %1683 = vmatmul.mubr.f32.gmra.mrb[0].mxu0 %v1477
      %v1684 = vpop.f32.mrb[0].mxu0
      %v1685 = vadd.f32 0.0, %v1684
      %v1686 = vpop.f32.mrb[0].mxu0
      %1687 = vmatprep.mubr.f32.mxu0 0.0
      %1688 = vmatmul.mubr.f32.gmra.mrb[0].mxu0 %v1478
      %v1689 = vpop.f32.mrb[0].mxu0
      %v1690 = vadd.f32 0.0, %v1689
      %v1691 = vpop.f32.mrb[0].mxu0
      %1692 = vmatprep.mubr.f32.mxu0 0.0
      %1693 = vmatmul.mubr.f32.gmra.mrb[0].mxu0 %v1479
      %v1694 = vpop.f32.mrb[0].mxu0
      %v1695 = vadd.f32 0.0, %v1694
      %v1696 = vpop.f32.mrb[0].mxu0
      %1697 = vmatprep.mubr.f32.mxu0 0.0
      %1698 = vmatmul.mubr.f32.gmra.mrb[0].mxu0 %v1480
      %v1699 = vpop.f32.mrb[0].mxu0
      %v1700 = vadd.f32 0.0, %v1699
      %v1701 = vpop.f32.mrb[0].mxu0
      %1702 = vmatprep.mubr.f32.mxu0 0.0
      %1703 = vmatmul.mubr.f32.gmra.mrb[0].mxu0 %v1481
      %v1704 = vpop.f32.mrb[0].mxu0
      %v1705 = vadd.f32 0.0, %v1704
      %v1706 = vpop.f32.mrb[0].mxu0
      %1707 = vmatprep.mubr.f32.mxu0 0.0
      %1708 = vmatmul.mubr.f32.gmra.mrb[0].mxu0 %v1482
      %v1709 = vpop.f32.mrb[0].mxu0
      %v1710 = vadd.f32 0.0, %v1709
      %v1711 = vpop.f32.mrb[0].mxu0
      %1712 = vmatprep.mubr.f32.mxu0 0.0
      %1713 = vmatmul.mubr.f32.gmra.mrb[0].mxu0 %v1483
      %v1714 = vpop.f32.mrb[0].mxu0
      %v1715 = vadd.f32 0.0, %v1714
      %v1716 = vpop.f32.mrb[0].mxu0
      %1717 = vmatprep.mubr.f32.mxu0 0.0
      %1718 = vmatmul.mubr.f32.gmra.mrb[0].mxu0 %v1484
      %v1719 = vpop.f32.mrb[0].mxu0
      %v1720 = vadd.f32 0.0, %v1719
      %v1721 = vpop.f32.mrb[0].mxu0
      %1722 = vmatprep.mubr.f32.mxu0 0.0
      %1723 = vmatmul.mubr.f32.gmra.mrb[0].mxu0 %v1485
      %v1724 = vpop.f32.mrb[0].mxu0
      %v1725 = vadd.f32 0.0, %v1724
      %v1726 = vpop.f32.mrb[0].mxu0
      %1727 = vdwg.mxu0
      %1728 = vmatprep.subr.mxu0 0.0
      %1729 = vmatpush1.msra.mxu0 %v1437
      %1730 = vmatprep.subr.mxu0 0.0
      %1731 = vmatpush1.msra.mxu0 %v1438
      %1732 = vmatprep.subr.mxu0 0.0
      %1733 = vmatpush1.msra.mxu0 %v1439
      %1734 = vmatprep.subr.mxu0 0.0
      %1735 = vmatpush1.msra.mxu0 %v1440
      %1736 = vmatprep.subr.mxu0 0.0
      %1737 = vmatpush1.msra.mxu0 %v1441
      %1738 = vmatprep.subr.mxu0 0.0
      %1739 = vmatpush1.msra.mxu0 %v1442
      %1740 = vmatprep.subr.mxu0 0.0
      %1741 = vmatpush1.msra.mxu0 %v1443
      %1742 = vmatprep.subr.mxu0 0.0
      %1743 = vmatpush1.msra.mxu0 %v1444
      %1744 = vmatprep.subr.mxu0 0.0
      %1745 = vmatpush1.msra.mxu0 %v1445
      %1746 = vmatprep.subr.mxu0 0.0
      %1747 = vmatpush1.msra.mxu0 %v1446
      %1748 = vmatprep.subr.mxu0 0.0
      %1749 = vmatpush1.msra.mxu0 %v1447
      %1750 = vmatprep.subr.mxu0 0.0
      %1751 = vmatpush1.msra.mxu0 %v1448
      %1752 = vmatprep.subr.mxu0 0.0
      %1753 = vmatpush1.msra.mxu0 %v1449
      %1754 = vmatprep.subr.mxu0 0.0
      %1755 = vmatpush1.msra.mxu0 %v1450
      %1756 = vmatprep.subr.mxu0 0.0
      %1757 = vmatpush1.msra.mxu0 %v1451
      %1758 = vmatprep.subr.mxu0 0.0
      %1759 = vmatpush1.msra.mxu0 %v1452
      %1760 = vmatprep.subr.mxu0 0.0
      %1761 = vmatpush1.msra.mxu0 0.0
      %1762 = vmatprep.subr.mxu0 0.0
      %1763 = vmatpush1.msra.mxu0 0.0
      %1764 = vmatprep.subr.mxu0 0.0
      %1765 = vmatpush1.msra.mxu0 0.0
      %1766 = vmatprep.subr.mxu0 0.0
      %1767 = vmatpush1.msra.mxu0 0.0
      %1768 = vmatprep.subr.mxu0 0.0
      %1769 = vmatpush1.msra.mxu0 0.0
      %1770 = vmatprep.subr.mxu0 0.0
      %1771 = vmatpush1.msra.mxu0 0.0
      %1772 = vmatprep.subr.mxu0 0.0
      %1773 = vmatpush1.msra.mxu0 0.0
      %1774 = vmatprep.subr.mxu0 0.0
      %1775 = vmatpush1.msra.mxu0 0.0
      %1776 = vmatprep.subr.mxu0 0.0
      %1777 = vmatpush1.msra.mxu0 0.0
      %1778 = vmatprep.subr.mxu0 0.0
      %1779 = vmatpush1.msra.mxu0 0.0
      %1780 = vmatprep.subr.mxu0 0.0
      %1781 = vmatpush1.msra.mxu0 0.0
      %1782 = vmatprep.subr.mxu0 0.0
      %1783 = vmatpush1.msra.mxu0 0.0
      %1784 = vmatprep.subr.mxu0 0.0
      %1785 = vmatpush1.msra.mxu0 0.0
      %1786 = vmatprep.subr.mxu0 0.0
      %1787 = vmatpush1.msra.mxu0 0.0
      %1788 = vmatprep.subr.mxu0 0.0
      %1789 = vmatpush1.msra.mxu0 0.0
      %1790 = vmatprep.subr.mxu0 0.0
      %1791 = vmatpush1.msra.mxu0 0.0
      %1792 = vmatprep.mubr.f32.mxu0 0.0
      %1793 = vmatmul.mubr.f32.gmra.mrb[0].mxu0 %v1404
      %v1794 = vpop.f32.mrb[0].mxu0
      %v1795 = vadd.f32 %v1570, %v1794
      %v1796 = vpop.f32.mrb[0].mxu0
      %1797 = vmatprep.mubr.f32.mxu0 0.0
      %1798 = vmatmul.mubr.f32.gmra.mrb[0].mxu0 %v1405
      %v1799 = vpop.f32.mrb[0].mxu0
      %v1800 = vadd.f32 %v1575, %v1799
      %v1801 = vpop.f32.mrb[0].mxu0
      %1802 = vmatprep.mubr.f32.mxu0 0.0
      %1803 = vmatmul.mubr.f32.gmra.mrb[0].mxu0 %v1406
      %v1804 = vpop.f32.mrb[0].mxu0
      %v1805 = vadd.f32 %v1580, %v1804
      %v1806 = vpop.f32.mrb[0].mxu0
      %1807 = vmatprep.mubr.f32.mxu0 0.0
      %1808 = vmatmul.mubr.f32.gmra.mrb[0].mxu0 %v1407
      %v1809 = vpop.f32.mrb[0].mxu0
      %v1810 = vadd.f32 %v1585, %v1809
      %v1811 = vpop.f32.mrb[0].mxu0
      %1812 = vmatprep.mubr.f32.mxu0 0.0
      %1813 = vmatmul.mubr.f32.gmra.mrb[0].mxu0 %v1408
      %v1814 = vpop.f32.mrb[0].mxu0
      %v1815 = vadd.f32 %v1590, %v1814
      %v1816 = vpop.f32.mrb[0].mxu0
      %1817 = vmatprep.mubr.f32.mxu0 0.0
      %1818 = vmatmul.mubr.f32.gmra.mrb[0].mxu0 %v1409
      %v1819 = vpop.f32.mrb[0].mxu0
      %v1820 = vadd.f32 %v1595, %v1819
      %v1821 = vpop.f32.mrb[0].mxu0
      %1822 = vmatprep.mubr.f32.mxu0 0.0
      %1823 = vmatmul.mubr.f32.gmra.mrb[0].mxu0 %v1410
      %v1824 = vpop.f32.mrb[0].mxu0
      %v1825 = vadd.f32 %v1600, %v1824
      %v1826 = vpop.f32.mrb[0].mxu0
      %1827 = vmatprep.mubr.f32.mxu0 0.0
      %1828 = vmatmul.mubr.f32.gmra.mrb[0].mxu0 %v1411
      %v1829 = vpop.f32.mrb[0].mxu0
      %v1830 = vadd.f32 %v1605, %v1829
      %v1831 = vpop.f32.mrb[0].mxu0
      %1832 = vmatprep.mubr.f32.mxu0 0.0
      %1833 = vmatmul.mubr.f32.gmra.mrb[0].mxu0 %v1412
      %v1834 = vpop.f32.mrb[0].mxu0
      %v1835 = vadd.f32 %v1610, %v1834
      %v1836 = vpop.f32.mrb[0].mxu0
      %1837 = vmatprep.mubr.f32.mxu0 0.0
      %1838 = vmatmul.mubr.f32.gmra.mrb[0].mxu0 %v1413
      %v1839 = vpop.f32.mrb[0].mxu0
      %v1840 = vadd.f32 %v1615, %v1839
      %v1841 = vpop.f32.mrb[0].mxu0
      %1842 = vmatprep.mubr.f32.mxu0 0.0
      %1843 = vmatmul.mubr.f32.gmra.mrb[0].mxu0 %v1414
      %v1844 = vpop.f32.mrb[0].mxu0
      %v1845 = vadd.f32 %v1620, %v1844
      %v1846 = vpop.f32.mrb[0].mxu0
      %1847 = vmatprep.mubr.f32.mxu0 0.0
      %1848 = vmatmul.mubr.f32.gmra.mrb[0].mxu0 %v1415
      %v1849 = vpop.f32.mrb[0].mxu0
      %v1850 = vadd.f32 %v1625, %v1849
      %v1851 = vpop.f32.mrb[0].mxu0
      %1852 = vmatprep.mubr.f32.mxu0 0.0
      %1853 = vmatmul.mubr.f32.gmra.mrb[0].mxu0 %v1416
      %v1854 = vpop.f32.mrb[0].mxu0
      %v1855 = vadd.f32 %v1630, %v1854
      %v1856 = vpop.f32.mrb[0].mxu0
      %1857 = vmatprep.mubr.f32.mxu0 0.0
      %1858 = vmatmul.mubr.f32.gmra.mrb[0].mxu0 %v1417
      %v1859 = vpop.f32.mrb[0].mxu0
      %v1860 = vadd.f32 %v1635, %v1859
      %v1861 = vpop.f32.mrb[0].mxu0
      %1862 = vmatprep.mubr.f32.mxu0 0.0
      %1863 = vmatmul.mubr.f32.gmra.mrb[0].mxu0 %v1418
      %v1864 = vpop.f32.mrb[0].mxu0
      %v1865 = vadd.f32 %v1640, %v1864
      %v1866 = vpop.f32.mrb[0].mxu0
      %1867 = vmatprep.mubr.f32.mxu0 0.0
      %1868 = vmatmul.mubr.f32.gmra.mrb[0].mxu0 %v1419
      %v1869 = vpop.f32.mrb[0].mxu0
      %v1870 = vadd.f32 %v1645, %v1869
      %v1871 = vpop.f32.mrb[0].mxu0
      %1872 = vmatprep.mubr.f32.mxu0 0.0
      %1873 = vmatmul.mubr.f32.gmra.mrb[0].mxu0 %v1420
      %v1874 = vpop.f32.mrb[0].mxu0
      %v1875 = vadd.f32 %v1650, %v1874
      %v1876 = vpop.f32.mrb[0].mxu0
      %1877 = vmatprep.mubr.f32.mxu0 0.0
      %1878 = vmatmul.mubr.f32.gmra.mrb[0].mxu0 %v1421
      %v1879 = vpop.f32.mrb[0].mxu0
      %v1880 = vadd.f32 %v1655, %v1879
      %v1881 = vpop.f32.mrb[0].mxu0
      %1882 = vmatprep.mubr.f32.mxu0 0.0
      %1883 = vmatmul.mubr.f32.gmra.mrb[0].mxu0 %v1422
      %v1884 = vpop.f32.mrb[0].mxu0
      %v1885 = vadd.f32 %v1660, %v1884
      %v1886 = vpop.f32.mrb[0].mxu0
      %1887 = vmatprep.mubr.f32.mxu0 0.0
      %1888 = vmatmul.mubr.f32.gmra.mrb[0].mxu0 %v1423
      %v1889 = vpop.f32.mrb[0].mxu0
      %v1890 = vadd.f32 %v1665, %v1889
      %v1891 = vpop.f32.mrb[0].mxu0
      %1892 = vmatprep.mubr.f32.mxu0 0.0
      %1893 = vmatmul.mubr.f32.gmra.mrb[0].mxu0 %v1424
      %v1894 = vpop.f32.mrb[0].mxu0
      %v1895 = vadd.f32 %v1670, %v1894
      %v1896 = vpop.f32.mrb[0].mxu0
      %1897 = vmatprep.mubr.f32.mxu0 0.0
      %1898 = vmatmul.mubr.f32.gmra.mrb[0].mxu0 %v1425
      %v1899 = vpop.f32.mrb[0].mxu0
      %v1900 = vadd.f32 %v1675, %v1899
      %v1901 = vpop.f32.mrb[0].mxu0
      %1902 = vmatprep.mubr.f32.mxu0 0.0
      %1903 = vmatmul.mubr.f32.gmra.mrb[0].mxu0 %v1426
      %v1904 = vpop.f32.mrb[0].mxu0
      %v1905 = vadd.f32 %v1680, %v1904
      %v1906 = vpop.f32.mrb[0].mxu0
      %1907 = vmatprep.mubr.f32.mxu0 0.0
      %1908 = vmatmul.mubr.f32.gmra.mrb[0].mxu0 %v1427
      %v1909 = vpop.f32.mrb[0].mxu0
      %v1910 = vadd.f32 %v1685, %v1909
      %v1911 = vpop.f32.mrb[0].mxu0
      %1912 = vmatprep.mubr.f32.mxu0 0.0
      %1913 = vmatmul.mubr.f32.gmra.mrb[0].mxu0 %v1428
      %v1914 = vpop.f32.mrb[0].mxu0
      %v1915 = vadd.f32 %v1690, %v1914
      %v1916 = vpop.f32.mrb[0].mxu0
      %1917 = vmatprep.mubr.f32.mxu0 0.0
      %1918 = vmatmul.mubr.f32.gmra.mrb[0].mxu0 %v1429
      %v1919 = vpop.f32.mrb[0].mxu0
      %v1920 = vadd.f32 %v1695, %v1919
      %v1921 = vpop.f32.mrb[0].mxu0
      %1922 = vmatprep.mubr.f32.mxu0 0.0
      %1923 = vmatmul.mubr.f32.gmra.mrb[0].mxu0 %v1430
      %v1924 = vpop.f32.mrb[0].mxu0
      %v1925 = vadd.f32 %v1700, %v1924
      %v1926 = vpop.f32.mrb[0].mxu0
      %1927 = vmatprep.mubr.f32.mxu0 0.0
      %1928 = vmatmul.mubr.f32.gmra.mrb[0].mxu0 %v1431
      %v1929 = vpop.f32.mrb[0].mxu0
      %v1930 = vadd.f32 %v1705, %v1929
      %v1931 = vpop.f32.mrb[0].mxu0
      %1932 = vmatprep.mubr.f32.mxu0 0.0
      %1933 = vmatmul.mubr.f32.gmra.mrb[0].mxu0 %v1432
      %v1934 = vpop.f32.mrb[0].mxu0
      %v1935 = vadd.f32 %v1710, %v1934
      %v1936 = vpop.f32.mrb[0].mxu0
      %1937 = vmatprep.mubr.f32.mxu0 0.0
      %1938 = vmatmul.mubr.f32.gmra.mrb[0].mxu0 %v1433
      %v1939 = vpop.f32.mrb[0].mxu0
      %v1940 = vadd.f32 %v1715, %v1939
      %v1941 = vpop.f32.mrb[0].mxu0
      %1942 = vmatprep.mubr.f32.mxu0 0.0
      %1943 = vmatmul.mubr.f32.gmra.mrb[0].mxu0 %v1434
      %v1944 = vpop.f32.mrb[0].mxu0
      %v1945 = vadd.f32 %v1720, %v1944
      %v1946 = vpop.f32.mrb[0].mxu0
      %1947 = vmatprep.mubr.f32.mxu0 0.0
      %1948 = vmatmul.mubr.f32.gmra.mrb[0].mxu0 %v1435
      %v1949 = vpop.f32.mrb[0].mxu0
      %v1950 = vadd.f32 %v1725, %v1949
      %v1951 = vpop.f32.mrb[0].mxu0
      %1952 = vdwg.mxu0
      %v1953 = vld [vmem:[%s1027] sm:$0xff]
      %v1954 = vld [vmem:[%s1027 + $0x8] sm:$0xff]
      %v1955 = vld [vmem:[%s1027 + $0x10] sm:$0xff]
      %v1956 = vld [vmem:[%s1027 + $0x18] sm:$0xff]
      %v1957 = vld [vmem:[%s1027 + $0x20] sm:$0xff]
      %v1958 = vld [vmem:[%s1027 + $0x28] sm:$0xff]
      %v1959 = vld [vmem:[%s1027 + $0x30] sm:$0xff]
      %v1960 = vld [vmem:[%s1027 + $0x38] sm:$0xff]
      %v1961 = vld [vmem:[%s1027 + $0x40] sm:$0xff]
      %v1962 = vld [vmem:[%s1027 + $0x48] sm:$0xff]
      %v1963 = vld [vmem:[%s1027 + $0x50] sm:$0xff]
      %v1964 = vld [vmem:[%s1027 + $0x58] sm:$0xff]
      %v1965 = vld [vmem:[%s1027 + $0x60] sm:$0xff]
      %v1966 = vld [vmem:[%s1027 + $0x68] sm:$0xff]
      %v1967 = vld [vmem:[%s1027 + $0x70] sm:$0xff]
      %v1968 = vld [vmem:[%s1027 + $0x78] sm:$0xff]
      %v1969 = vld [vmem:[%s1027 + $0x80] sm:$0xff]
      %v1970 = vld [vmem:[%s1027 + $0x88] sm:$0xff]
      %v1971 = vld [vmem:[%s1027 + $0x90] sm:$0xff]
      %v1972 = vld [vmem:[%s1027 + $0x98] sm:$0xff]
      %v1973 = vld [vmem:[%s1027 + $0xa0] sm:$0xff]
      %v1974 = vld [vmem:[%s1027 + $0xa8] sm:$0xff]
      %v1975 = vld [vmem:[%s1027 + $0xb0] sm:$0xff]
      %v1976 = vld [vmem:[%s1027 + $0xb8] sm:$0xff]
      %v1977 = vld [vmem:[%s1027 + $0xc0] sm:$0xff]
      %v1978 = vld [vmem:[%s1027 + $0xc8] sm:$0xff]
      %v1979 = vld [vmem:[%s1027 + $0xd0] sm:$0xff]
      %v1980 = vld [vmem:[%s1027 + $0xd8] sm:$0xff]
      %v1981 = vld [vmem:[%s1027 + $0xe0] sm:$0xff]
      %v1982 = vld [vmem:[%s1027 + $0xe8] sm:$0xff]
      %v1983 = vld [vmem:[%s1027 + $0xf0] sm:$0xff]
      %v1984 = vld [vmem:[%s1027 + $0xf8] sm:$0xff]
      %s1985 = scalar_lea.vmem %s1, 768
      %v1986 = vld [vmem:[%s1985] sm:$0xff]
      %v1987 = vld [vmem:[%s1985 + $0x8] sm:$0xff]
      %v1988 = vld [vmem:[%s1985 + $0x10] sm:$0xff]
      %v1989 = vld [vmem:[%s1985 + $0x18] sm:$0xff]
      %v1990 = vld [vmem:[%s1985 + $0x20] sm:$0xff]
      %v1991 = vld [vmem:[%s1985 + $0x28] sm:$0xff]
      %v1992 = vld [vmem:[%s1985 + $0x30] sm:$0xff]
      %v1993 = vld [vmem:[%s1985 + $0x38] sm:$0xff]
      %v1994 = vld [vmem:[%s1985 + $0x40] sm:$0xff]
      %v1995 = vld [vmem:[%s1985 + $0x48] sm:$0xff]
      %v1996 = vld [vmem:[%s1985 + $0x50] sm:$0xff]
      %v1997 = vld [vmem:[%s1985 + $0x58] sm:$0xff]
      %v1998 = vld [vmem:[%s1985 + $0x60] sm:$0xff]
      %v1999 = vld [vmem:[%s1985 + $0x68] sm:$0xff]
      %v2000 = vld [vmem:[%s1985 + $0x70] sm:$0xff]
      %v2001 = vld [vmem:[%s1985 + $0x78] sm:$0xff]
      %2002 = vmatprep.subr.mxu0 0.0
      %2003 = vmatpush1.msra.mxu0 %v1986
      %2004 = vmatprep.subr.mxu0 0.0
      %2005 = vmatpush1.msra.mxu0 %v1987
      %2006 = vmatprep.subr.mxu0 0.0
      %2007 = vmatpush1.msra.mxu0 %v1988
      %2008 = vmatprep.subr.mxu0 0.0
      %2009 = vmatpush1.msra.mxu0 %v1989
      %2010 = vmatprep.subr.mxu0 0.0
      %2011 = vmatpush1.msra.mxu0 %v1990
      %2012 = vmatprep.subr.mxu0 0.0
      %2013 = vmatpush1.msra.mxu0 %v1991
      %2014 = vmatprep.subr.mxu0 0.0
      %2015 = vmatpush1.msra.mxu0 %v1992
      %2016 = vmatprep.subr.mxu0 0.0
      %2017 = vmatpush1.msra.mxu0 %v1993
      %2018 = vmatprep.subr.mxu0 0.0
      %2019 = vmatpush1.msra.mxu0 %v1994
      %2020 = vmatprep.subr.mxu0 0.0
      %2021 = vmatpush1.msra.mxu0 %v1995
      %2022 = vmatprep.subr.mxu0 0.0
      %2023 = vmatpush1.msra.mxu0 %v1996
      %2024 = vmatprep.subr.mxu0 0.0
      %2025 = vmatpush1.msra.mxu0 %v1997
      %2026 = vmatprep.subr.mxu0 0.0
      %2027 = vmatpush1.msra.mxu0 %v1998
      %2028 = vmatprep.subr.mxu0 0.0
      %2029 = vmatpush1.msra.mxu0 %v1999
      %2030 = vmatprep.subr.mxu0 0.0
      %2031 = vmatpush1.msra.mxu0 %v2000
      %2032 = vmatprep.subr.mxu0 0.0
      %2033 = vmatpush1.msra.mxu0 %v2001
      %2034 = vmatprep.subr.mxu0 0.0
      %2035 = vmatpush1.msra.mxu0 0.0
      %2036 = vmatprep.subr.mxu0 0.0
      %2037 = vmatpush1.msra.mxu0 0.0
      %2038 = vmatprep.subr.mxu0 0.0
      %2039 = vmatpush1.msra.mxu0 0.0
      %2040 = vmatprep.subr.mxu0 0.0
      %2041 = vmatpush1.msra.mxu0 0.0
      %2042 = vmatprep.subr.mxu0 0.0
      %2043 = vmatpush1.msra.mxu0 0.0
      %2044 = vmatprep.subr.mxu0 0.0
      %2045 = vmatpush1.msra.mxu0 0.0
      %2046 = vmatprep.subr.mxu0 0.0
      %2047 = vmatpush1.msra.mxu0 0.0
      %2048 = vmatprep.subr.mxu0 0.0
      %2049 = vmatpush1.msra.mxu0 0.0
      %2050 = vmatprep.subr.mxu0 0.0
      %2051 = vmatpush1.msra.mxu0 0.0
      %2052 = vmatprep.subr.mxu0 0.0
      %2053 = vmatpush1.msra.mxu0 0.0
      %2054 = vmatprep.subr.mxu0 0.0
      %2055 = vmatpush1.msra.mxu0 0.0
      %2056 = vmatprep.subr.mxu0 0.0
      %2057 = vmatpush1.msra.mxu0 0.0
      %2058 = vmatprep.subr.mxu0 0.0
      %2059 = vmatpush1.msra.mxu0 0.0
      %2060 = vmatprep.subr.mxu0 0.0
      %2061 = vmatpush1.msra.mxu0 0.0
      %2062 = vmatprep.subr.mxu0 0.0
      %2063 = vmatpush1.msra.mxu0 0.0
      %2064 = vmatprep.subr.mxu0 0.0
      %2065 = vmatpush1.msra.mxu0 0.0
      %2066 = vmatprep.mubr.f32.mxu0 0.0
      %2067 = vmatmul.mubr.f32.gmra.mrb[0].mxu0 %v1953
      %v2068 = vpop.f32.mrb[0].mxu0
      %v2069 = vadd.f32 0.0, %v2068
      %v2070 = vpop.f32.mrb[0].mxu0
      %2071 = vmatprep.mubr.f32.mxu0 0.0
      %2072 = vmatmul.mubr.f32.gmra.mrb[0].mxu0 %v1954
      %v2073 = vpop.f32.mrb[0].mxu0
      %v2074 = vadd.f32 0.0, %v2073
      %v2075 = vpop.f32.mrb[0].mxu0
      %2076 = vmatprep.mubr.f32.mxu0 0.0
      %2077 = vmatmul.mubr.f32.gmra.mrb[0].mxu0 %v1955
      %v2078 = vpop.f32.mrb[0].mxu0
      %v2079 = vadd.f32 0.0, %v2078
      %v2080 = vpop.f32.mrb[0].mxu0
      %2081 = vmatprep.mubr.f32.mxu0 0.0
      %2082 = vmatmul.mubr.f32.gmra.mrb[0].mxu0 %v1956
      %v2083 = vpop.f32.mrb[0].mxu0
      %v2084 = vadd.f32 0.0, %v2083
      %v2085 = vpop.f32.mrb[0].mxu0
      %2086 = vmatprep.mubr.f32.mxu0 0.0
      %2087 = vmatmul.mubr.f32.gmra.mrb[0].mxu0 %v1957
      %v2088 = vpop.f32.mrb[0].mxu0
      %v2089 = vadd.f32 0.0, %v2088
      %v2090 = vpop.f32.mrb[0].mxu0
      %2091 = vmatprep.mubr.f32.mxu0 0.0
      %2092 = vmatmul.mubr.f32.gmra.mrb[0].mxu0 %v1958
      %v2093 = vpop.f32.mrb[0].mxu0
      %v2094 = vadd.f32 0.0, %v2093
      %v2095 = vpop.f32.mrb[0].mxu0
      %2096 = vmatprep.mubr.f32.mxu0 0.0
      %2097 = vmatmul.mubr.f32.gmra.mrb[0].mxu0 %v1959
      %v2098 = vpop.f32.mrb[0].mxu0
      %v2099 = vadd.f32 0.0, %v2098
      %v2100 = vpop.f32.mrb[0].mxu0
      %2101 = vmatprep.mubr.f32.mxu0 0.0
      %2102 = vmatmul.mubr.f32.gmra.mrb[0].mxu0 %v1960
      %v2103 = vpop.f32.mrb[0].mxu0
      %v2104 = vadd.f32 0.0, %v2103
      %v2105 = vpop.f32.mrb[0].mxu0
      %2106 = vmatprep.mubr.f32.mxu0 0.0
      %2107 = vmatmul.mubr.f32.gmra.mrb[0].mxu0 %v1961
      %v2108 = vpop.f32.mrb[0].mxu0
      %v2109 = vadd.f32 0.0, %v2108
      %v2110 = vpop.f32.mrb[0].mxu0
      %2111 = vmatprep.mubr.f32.mxu0 0.0
      %2112 = vmatmul.mubr.f32.gmra.mrb[0].mxu0 %v1962
      %v2113 = vpop.f32.mrb[0].mxu0
      %v2114 = vadd.f32 0.0, %v2113
      %v2115 = vpop.f32.mrb[0].mxu0
      %2116 = vmatprep.mubr.f32.mxu0 0.0
      %2117 = vmatmul.mubr.f32.gmra.mrb[0].mxu0 %v1963
      %v2118 = vpop.f32.mrb[0].mxu0
      %v2119 = vadd.f32 0.0, %v2118
      %v2120 = vpop.f32.mrb[0].mxu0
      %2121 = vmatprep.mubr.f32.mxu0 0.0
      %2122 = vmatmul.mubr.f32.gmra.mrb[0].mxu0 %v1964
      %v2123 = vpop.f32.mrb[0].mxu0
      %v2124 = vadd.f32 0.0, %v2123
      %v2125 = vpop.f32.mrb[0].mxu0
      %2126 = vmatprep.mubr.f32.mxu0 0.0
      %2127 = vmatmul.mubr.f32.gmra.mrb[0].mxu0 %v1965
      %v2128 = vpop.f32.mrb[0].mxu0
      %v2129 = vadd.f32 0.0, %v2128
      %v2130 = vpop.f32.mrb[0].mxu0
      %2131 = vmatprep.mubr.f32.mxu0 0.0
      %2132 = vmatmul.mubr.f32.gmra.mrb[0].mxu0 %v1966
      %v2133 = vpop.f32.mrb[0].mxu0
      %v2134 = vadd.f32 0.0, %v2133
      %v2135 = vpop.f32.mrb[0].mxu0
      %2136 = vmatprep.mubr.f32.mxu0 0.0
      %2137 = vmatmul.mubr.f32.gmra.mrb[0].mxu0 %v1967
      %v2138 = vpop.f32.mrb[0].mxu0
      %v2139 = vadd.f32 0.0, %v2138
      %v2140 = vpop.f32.mrb[0].mxu0
      %2141 = vmatprep.mubr.f32.mxu0 0.0
      %2142 = vmatmul.mubr.f32.gmra.mrb[0].mxu0 %v1968
      %v2143 = vpop.f32.mrb[0].mxu0
      %v2144 = vadd.f32 0.0, %v2143
      %v2145 = vpop.f32.mrb[0].mxu0
      %2146 = vmatprep.mubr.f32.mxu0 0.0
      %2147 = vmatmul.mubr.f32.gmra.mrb[0].mxu0 %v1969
      %v2148 = vpop.f32.mrb[0].mxu0
      %v2149 = vadd.f32 0.0, %v2148
      %v2150 = vpop.f32.mrb[0].mxu0
      %2151 = vmatprep.mubr.f32.mxu0 0.0
      %2152 = vmatmul.mubr.f32.gmra.mrb[0].mxu0 %v1970
      %v2153 = vpop.f32.mrb[0].mxu0
      %v2154 = vadd.f32 0.0, %v2153
      %v2155 = vpop.f32.mrb[0].mxu0
      %2156 = vmatprep.mubr.f32.mxu0 0.0
      %2157 = vmatmul.mubr.f32.gmra.mrb[0].mxu0 %v1971
      %v2158 = vpop.f32.mrb[0].mxu0
      %v2159 = vadd.f32 0.0, %v2158
      %v2160 = vpop.f32.mrb[0].mxu0
      %2161 = vmatprep.mubr.f32.mxu0 0.0
      %2162 = vmatmul.mubr.f32.gmra.mrb[0].mxu0 %v1972
      %v2163 = vpop.f32.mrb[0].mxu0
      %v2164 = vadd.f32 0.0, %v2163
      %v2165 = vpop.f32.mrb[0].mxu0
      %2166 = vmatprep.mubr.f32.mxu0 0.0
      %2167 = vmatmul.mubr.f32.gmra.mrb[0].mxu0 %v1973
      %v2168 = vpop.f32.mrb[0].mxu0
      %v2169 = vadd.f32 0.0, %v2168
      %v2170 = vpop.f32.mrb[0].mxu0
      %2171 = vmatprep.mubr.f32.mxu0 0.0
      %2172 = vmatmul.mubr.f32.gmra.mrb[0].mxu0 %v1974
      %v2173 = vpop.f32.mrb[0].mxu0
      %v2174 = vadd.f32 0.0, %v2173
      %v2175 = vpop.f32.mrb[0].mxu0
      %2176 = vmatprep.mubr.f32.mxu0 0.0
      %2177 = vmatmul.mubr.f32.gmra.mrb[0].mxu0 %v1975
      %v2178 = vpop.f32.mrb[0].mxu0
      %v2179 = vadd.f32 0.0, %v2178
      %v2180 = vpop.f32.mrb[0].mxu0
      %2181 = vmatprep.mubr.f32.mxu0 0.0
      %2182 = vmatmul.mubr.f32.gmra.mrb[0].mxu0 %v1976
      %v2183 = vpop.f32.mrb[0].mxu0
      %v2184 = vadd.f32 0.0, %v2183
      %v2185 = vpop.f32.mrb[0].mxu0
      %2186 = vmatprep.mubr.f32.mxu0 0.0
      %2187 = vmatmul.mubr.f32.gmra.mrb[0].mxu0 %v1977
      %v2188 = vpop.f32.mrb[0].mxu0
      %v2189 = vadd.f32 0.0, %v2188
      %v2190 = vpop.f32.mrb[0].mxu0
      %2191 = vmatprep.mubr.f32.mxu0 0.0
      %2192 = vmatmul.mubr.f32.gmra.mrb[0].mxu0 %v1978
      %v2193 = vpop.f32.mrb[0].mxu0
      %v2194 = vadd.f32 0.0, %v2193
      %v2195 = vpop.f32.mrb[0].mxu0
      %2196 = vmatprep.mubr.f32.mxu0 0.0
      %2197 = vmatmul.mubr.f32.gmra.mrb[0].mxu0 %v1979
      %v2198 = vpop.f32.mrb[0].mxu0
      %v2199 = vadd.f32 0.0, %v2198
      %v2200 = vpop.f32.mrb[0].mxu0
      %2201 = vmatprep.mubr.f32.mxu0 0.0
      %2202 = vmatmul.mubr.f32.gmra.mrb[0].mxu0 %v1980
      %v2203 = vpop.f32.mrb[0].mxu0
      %v2204 = vadd.f32 0.0, %v2203
      %v2205 = vpop.f32.mrb[0].mxu0
      %2206 = vmatprep.mubr.f32.mxu0 0.0
      %2207 = vmatmul.mubr.f32.gmra.mrb[0].mxu0 %v1981
      %v2208 = vpop.f32.mrb[0].mxu0
      %v2209 = vadd.f32 0.0, %v2208
      %v2210 = vpop.f32.mrb[0].mxu0
      %2211 = vmatprep.mubr.f32.mxu0 0.0
      %2212 = vmatmul.mubr.f32.gmra.mrb[0].mxu0 %v1982
      %v2213 = vpop.f32.mrb[0].mxu0
      %v2214 = vadd.f32 0.0, %v2213
      %v2215 = vpop.f32.mrb[0].mxu0
      %2216 = vmatprep.mubr.f32.mxu0 0.0
      %2217 = vmatmul.mubr.f32.gmra.mrb[0].mxu0 %v1983
      %v2218 = vpop.f32.mrb[0].mxu0
      %v2219 = vadd.f32 0.0, %v2218
      %v2220 = vpop.f32.mrb[0].mxu0
      %2221 = vmatprep.mubr.f32.mxu0 0.0
      %2222 = vmatmul.mubr.f32.gmra.mrb[0].mxu0 %v1984
      %v2223 = vpop.f32.mrb[0].mxu0
      %v2224 = vadd.f32 0.0, %v2223
      %v2225 = vpop.f32.mrb[0].mxu0
      %2226 = vdwg.mxu0
      %v2227 = vadd.f32 %v1795, %v2069
      %v2228 = vadd.f32 %v1800, %v2074
      %v2229 = vadd.f32 %v1805, %v2079
      %v2230 = vadd.f32 %v1810, %v2084
      %v2231 = vadd.f32 %v1815, %v2089
      %v2232 = vadd.f32 %v1820, %v2094
      %v2233 = vadd.f32 %v1825, %v2099
      %v2234 = vadd.f32 %v1830, %v2104
      %v2235 = vadd.f32 %v1835, %v2109
      %v2236 = vadd.f32 %v1840, %v2114
      %v2237 = vadd.f32 %v1845, %v2119
      %v2238 = vadd.f32 %v1850, %v2124
      %v2239 = vadd.f32 %v1855, %v2129
      %v2240 = vadd.f32 %v1860, %v2134
      %v2241 = vadd.f32 %v1865, %v2139
      %v2242 = vadd.f32 %v1870, %v2144
      %v2243 = vadd.f32 %v1875, %v2149
      %v2244 = vadd.f32 %v1880, %v2154
      %v2245 = vadd.f32 %v1885, %v2159
      %v2246 = vadd.f32 %v1890, %v2164
      %v2247 = vadd.f32 %v1895, %v2169
      %v2248 = vadd.f32 %v1900, %v2174
      %v2249 = vadd.f32 %v1905, %v2179
      %v2250 = vadd.f32 %v1910, %v2184
      %v2251 = vadd.f32 %v1915, %v2189
      %v2252 = vadd.f32 %v1920, %v2194
      %v2253 = vadd.f32 %v1925, %v2199
      %v2254 = vadd.f32 %v1930, %v2204
      %v2255 = vadd.f32 %v1935, %v2209
      %v2256 = vadd.f32 %v1940, %v2214
      %v2257 = vadd.f32 %v1945, %v2219
      %v2258 = vadd.f32 %v1950, %v2224
      %s2259 = scalar_lea.vmem %s165, 592
      %v2260 = vld [vmem:[%s2259] sm:$0xff]
      %v2261 = vld [vmem:[%s2259 + $0x8] sm:$0xff]
      %v2262 = vld [vmem:[%s2259 + $0x10] sm:$0xff]
      %v2263 = vld [vmem:[%s2259 + $0x18] sm:$0xff]
      %v2264 = vld [vmem:[%s2259 + $0x20] sm:$0xff]
      %v2265 = vld [vmem:[%s2259 + $0x28] sm:$0xff]
      %v2266 = vld [vmem:[%s2259 + $0x30] sm:$0xff]
      %v2267 = vld [vmem:[%s2259 + $0x38] sm:$0xff]
      %v2268 = vld [vmem:[%s2259 + $0x40] sm:$0xff]
      %v2269 = vld [vmem:[%s2259 + $0x48] sm:$0xff]
      %v2270 = vld [vmem:[%s2259 + $0x50] sm:$0xff]
      %v2271 = vld [vmem:[%s2259 + $0x58] sm:$0xff]
      %v2272 = vld [vmem:[%s2259 + $0x60] sm:$0xff]
      %v2273 = vld [vmem:[%s2259 + $0x68] sm:$0xff]
      %v2274 = vld [vmem:[%s2259 + $0x70] sm:$0xff]
      %v2275 = vld [vmem:[%s2259 + $0x78] sm:$0xff]
      %v2276 = vld [vmem:[%s2259 + $0x80] sm:$0xff]
      %v2277 = vld [vmem:[%s2259 + $0x88] sm:$0xff]
      %v2278 = vld [vmem:[%s2259 + $0x90] sm:$0xff]
      %v2279 = vld [vmem:[%s2259 + $0x98] sm:$0xff]
      %v2280 = vld [vmem:[%s2259 + $0xa0] sm:$0xff]
      %v2281 = vld [vmem:[%s2259 + $0xa8] sm:$0xff]
      %v2282 = vld [vmem:[%s2259 + $0xb0] sm:$0xff]
      %v2283 = vld [vmem:[%s2259 + $0xb8] sm:$0xff]
      %v2284 = vld [vmem:[%s2259 + $0xc0] sm:$0xff]
      %v2285 = vld [vmem:[%s2259 + $0xc8] sm:$0xff]
      %v2286 = vld [vmem:[%s2259 + $0xd0] sm:$0xff]
      %v2287 = vld [vmem:[%s2259 + $0xd8] sm:$0xff]
      %v2288 = vld [vmem:[%s2259 + $0xe0] sm:$0xff]
      %v2289 = vld [vmem:[%s2259 + $0xe8] sm:$0xff]
      %v2290 = vld [vmem:[%s2259 + $0xf0] sm:$0xff]
      %v2291 = vld [vmem:[%s2259 + $0xf8] sm:$0xff]
      %s2292 = scalar_lea.vmem %s1, 896
      %v2293 = vld [vmem:[%s2292] sm:$0xff]
      %v2294 = vld [vmem:[%s2292 + $0x8] sm:$0xff]
      %v2295 = vld [vmem:[%s2292 + $0x10] sm:$0xff]
      %v2296 = vld [vmem:[%s2292 + $0x18] sm:$0xff]
      %v2297 = vld [vmem:[%s2292 + $0x20] sm:$0xff]
      %v2298 = vld [vmem:[%s2292 + $0x28] sm:$0xff]
      %v2299 = vld [vmem:[%s2292 + $0x30] sm:$0xff]
      %v2300 = vld [vmem:[%s2292 + $0x38] sm:$0xff]
      %v2301 = vld [vmem:[%s2292 + $0x40] sm:$0xff]
      %v2302 = vld [vmem:[%s2292 + $0x48] sm:$0xff]
      %v2303 = vld [vmem:[%s2292 + $0x50] sm:$0xff]
      %v2304 = vld [vmem:[%s2292 + $0x58] sm:$0xff]
      %v2305 = vld [vmem:[%s2292 + $0x60] sm:$0xff]
      %v2306 = vld [vmem:[%s2292 + $0x68] sm:$0xff]
      %v2307 = vld [vmem:[%s2292 + $0x70] sm:$0xff]
      %v2308 = vld [vmem:[%s2292 + $0x78] sm:$0xff]
      %2309 = vmatprep.subr.mxu0 0.0
      %2310 = vmatpush1.msra.mxu0 %v2293
      %2311 = vmatprep.subr.mxu0 0.0
      %2312 = vmatpush1.msra.mxu0 %v2294
      %2313 = vmatprep.subr.mxu0 0.0
      %2314 = vmatpush1.msra.mxu0 %v2295
      %2315 = vmatprep.subr.mxu0 0.0
      %2316 = vmatpush1.msra.mxu0 %v2296
      %2317 = vmatprep.subr.mxu0 0.0
      %2318 = vmatpush1.msra.mxu0 %v2297
      %2319 = vmatprep.subr.mxu0 0.0
      %2320 = vmatpush1.msra.mxu0 %v2298
      %2321 = vmatprep.subr.mxu0 0.0
      %2322 = vmatpush1.msra.mxu0 %v2299
      %2323 = vmatprep.subr.mxu0 0.0
      %2324 = vmatpush1.msra.mxu0 %v2300
      %2325 = vmatprep.subr.mxu0 0.0
      %2326 = vmatpush1.msra.mxu0 %v2301
      %2327 = vmatprep.subr.mxu0 0.0
      %2328 = vmatpush1.msra.mxu0 %v2302
      %2329 = vmatprep.subr.mxu0 0.0
      %2330 = vmatpush1.msra.mxu0 %v2303
      %2331 = vmatprep.subr.mxu0 0.0
      %2332 = vmatpush1.msra.mxu0 %v2304
      %2333 = vmatprep.subr.mxu0 0.0
      %2334 = vmatpush1.msra.mxu0 %v2305
      %2335 = vmatprep.subr.mxu0 0.0
      %2336 = vmatpush1.msra.mxu0 %v2306
      %2337 = vmatprep.subr.mxu0 0.0
      %2338 = vmatpush1.msra.mxu0 %v2307
      %2339 = vmatprep.subr.mxu0 0.0
      %2340 = vmatpush1.msra.mxu0 %v2308
      %2341 = vmatprep.subr.mxu0 0.0
      %2342 = vmatpush1.msra.mxu0 0.0
      %2343 = vmatprep.subr.mxu0 0.0
      %2344 = vmatpush1.msra.mxu0 0.0
      %2345 = vmatprep.subr.mxu0 0.0
      %2346 = vmatpush1.msra.mxu0 0.0
      %2347 = vmatprep.subr.mxu0 0.0
      %2348 = vmatpush1.msra.mxu0 0.0
      %2349 = vmatprep.subr.mxu0 0.0
      %2350 = vmatpush1.msra.mxu0 0.0
      %2351 = vmatprep.subr.mxu0 0.0
      %2352 = vmatpush1.msra.mxu0 0.0
      %2353 = vmatprep.subr.mxu0 0.0
      %2354 = vmatpush1.msra.mxu0 0.0
      %2355 = vmatprep.subr.mxu0 0.0
      %2356 = vmatpush1.msra.mxu0 0.0
      %2357 = vmatprep.subr.mxu0 0.0
      %2358 = vmatpush1.msra.mxu0 0.0
      %2359 = vmatprep.subr.mxu0 0.0
      %2360 = vmatpush1.msra.mxu0 0.0
      %2361 = vmatprep.subr.mxu0 0.0
      %2362 = vmatpush1.msra.mxu0 0.0
      %2363 = vmatprep.subr.mxu0 0.0
      %2364 = vmatpush1.msra.mxu0 0.0
      %2365 = vmatprep.subr.mxu0 0.0
      %2366 = vmatpush1.msra.mxu0 0.0
      %2367 = vmatprep.subr.mxu0 0.0
      %2368 = vmatpush1.msra.mxu0 0.0
      %2369 = vmatprep.subr.mxu0 0.0
      %2370 = vmatpush1.msra.mxu0 0.0
      %2371 = vmatprep.subr.mxu0 0.0
      %2372 = vmatpush1.msra.mxu0 0.0
      %2373 = vmatprep.mubr.f32.mxu0 0.0
      %2374 = vmatmul.mubr.f32.gmra.mrb[0].mxu0 %v2260
      %v2375 = vpop.f32.mrb[0].mxu0
      %v2376 = vadd.f32 0.0, %v2375
      %v2377 = vpop.f32.mrb[0].mxu0
      %2378 = vmatprep.mubr.f32.mxu0 0.0
      %2379 = vmatmul.mubr.f32.gmra.mrb[0].mxu0 %v2261
      %v2380 = vpop.f32.mrb[0].mxu0
      %v2381 = vadd.f32 0.0, %v2380
      %v2382 = vpop.f32.mrb[0].mxu0
      %2383 = vmatprep.mubr.f32.mxu0 0.0
      %2384 = vmatmul.mubr.f32.gmra.mrb[0].mxu0 %v2262
      %v2385 = vpop.f32.mrb[0].mxu0
      %v2386 = vadd.f32 0.0, %v2385
      %v2387 = vpop.f32.mrb[0].mxu0
      %2388 = vmatprep.mubr.f32.mxu0 0.0
      %2389 = vmatmul.mubr.f32.gmra.mrb[0].mxu0 %v2263
      %v2390 = vpop.f32.mrb[0].mxu0
      %v2391 = vadd.f32 0.0, %v2390
      %v2392 = vpop.f32.mrb[0].mxu0
      %2393 = vmatprep.mubr.f32.mxu0 0.0
      %2394 = vmatmul.mubr.f32.gmra.mrb[0].mxu0 %v2264
      %v2395 = vpop.f32.mrb[0].mxu0
      %v2396 = vadd.f32 0.0, %v2395
      %v2397 = vpop.f32.mrb[0].mxu0
      %2398 = vmatprep.mubr.f32.mxu0 0.0
      %2399 = vmatmul.mubr.f32.gmra.mrb[0].mxu0 %v2265
      %v2400 = vpop.f32.mrb[0].mxu0
      %v2401 = vadd.f32 0.0, %v2400
      %v2402 = vpop.f32.mrb[0].mxu0
      %2403 = vmatprep.mubr.f32.mxu0 0.0
      %2404 = vmatmul.mubr.f32.gmra.mrb[0].mxu0 %v2266
      %v2405 = vpop.f32.mrb[0].mxu0
      %v2406 = vadd.f32 0.0, %v2405
      %v2407 = vpop.f32.mrb[0].mxu0
      %2408 = vmatprep.mubr.f32.mxu0 0.0
      %2409 = vmatmul.mubr.f32.gmra.mrb[0].mxu0 %v2267
      %v2410 = vpop.f32.mrb[0].mxu0
      %v2411 = vadd.f32 0.0, %v2410
      %v2412 = vpop.f32.mrb[0].mxu0
      %2413 = vmatprep.mubr.f32.mxu0 0.0
      %2414 = vmatmul.mubr.f32.gmra.mrb[0].mxu0 %v2268
      %v2415 = vpop.f32.mrb[0].mxu0
      %v2416 = vadd.f32 0.0, %v2415
      %v2417 = vpop.f32.mrb[0].mxu0
      %2418 = vmatprep.mubr.f32.mxu0 0.0
      %2419 = vmatmul.mubr.f32.gmra.mrb[0].mxu0 %v2269
      %v2420 = vpop.f32.mrb[0].mxu0
      %v2421 = vadd.f32 0.0, %v2420
      %v2422 = vpop.f32.mrb[0].mxu0
      %2423 = vmatprep.mubr.f32.mxu0 0.0
      %2424 = vmatmul.mubr.f32.gmra.mrb[0].mxu0 %v2270
      %v2425 = vpop.f32.mrb[0].mxu0
      %v2426 = vadd.f32 0.0, %v2425
      %v2427 = vpop.f32.mrb[0].mxu0
      %2428 = vmatprep.mubr.f32.mxu0 0.0
      %2429 = vmatmul.mubr.f32.gmra.mrb[0].mxu0 %v2271
      %v2430 = vpop.f32.mrb[0].mxu0
      %v2431 = vadd.f32 0.0, %v2430
      %v2432 = vpop.f32.mrb[0].mxu0
      %2433 = vmatprep.mubr.f32.mxu0 0.0
      %2434 = vmatmul.mubr.f32.gmra.mrb[0].mxu0 %v2272
      %v2435 = vpop.f32.mrb[0].mxu0
      %v2436 = vadd.f32 0.0, %v2435
      %v2437 = vpop.f32.mrb[0].mxu0
      %2438 = vmatprep.mubr.f32.mxu0 0.0
      %2439 = vmatmul.mubr.f32.gmra.mrb[0].mxu0 %v2273
      %v2440 = vpop.f32.mrb[0].mxu0
      %v2441 = vadd.f32 0.0, %v2440
      %v2442 = vpop.f32.mrb[0].mxu0
      %2443 = vmatprep.mubr.f32.mxu0 0.0
      %2444 = vmatmul.mubr.f32.gmra.mrb[0].mxu0 %v2274
      %v2445 = vpop.f32.mrb[0].mxu0
      %v2446 = vadd.f32 0.0, %v2445
      %v2447 = vpop.f32.mrb[0].mxu0
      %2448 = vmatprep.mubr.f32.mxu0 0.0
      %2449 = vmatmul.mubr.f32.gmra.mrb[0].mxu0 %v2275
      %v2450 = vpop.f32.mrb[0].mxu0
      %v2451 = vadd.f32 0.0, %v2450
      %v2452 = vpop.f32.mrb[0].mxu0
      %2453 = vmatprep.mubr.f32.mxu0 0.0
      %2454 = vmatmul.mubr.f32.gmra.mrb[0].mxu0 %v2276
      %v2455 = vpop.f32.mrb[0].mxu0
      %v2456 = vadd.f32 0.0, %v2455
      %v2457 = vpop.f32.mrb[0].mxu0
      %2458 = vmatprep.mubr.f32.mxu0 0.0
      %2459 = vmatmul.mubr.f32.gmra.mrb[0].mxu0 %v2277
      %v2460 = vpop.f32.mrb[0].mxu0
      %v2461 = vadd.f32 0.0, %v2460
      %v2462 = vpop.f32.mrb[0].mxu0
      %2463 = vmatprep.mubr.f32.mxu0 0.0
      %2464 = vmatmul.mubr.f32.gmra.mrb[0].mxu0 %v2278
      %v2465 = vpop.f32.mrb[0].mxu0
      %v2466 = vadd.f32 0.0, %v2465
      %v2467 = vpop.f32.mrb[0].mxu0
      %2468 = vmatprep.mubr.f32.mxu0 0.0
      %2469 = vmatmul.mubr.f32.gmra.mrb[0].mxu0 %v2279
      %v2470 = vpop.f32.mrb[0].mxu0
      %v2471 = vadd.f32 0.0, %v2470
      %v2472 = vpop.f32.mrb[0].mxu0
      %2473 = vmatprep.mubr.f32.mxu0 0.0
      %2474 = vmatmul.mubr.f32.gmra.mrb[0].mxu0 %v2280
      %v2475 = vpop.f32.mrb[0].mxu0
      %v2476 = vadd.f32 0.0, %v2475
      %v2477 = vpop.f32.mrb[0].mxu0
      %2478 = vmatprep.mubr.f32.mxu0 0.0
      %2479 = vmatmul.mubr.f32.gmra.mrb[0].mxu0 %v2281
      %v2480 = vpop.f32.mrb[0].mxu0
      %v2481 = vadd.f32 0.0, %v2480
      %v2482 = vpop.f32.mrb[0].mxu0
      %2483 = vmatprep.mubr.f32.mxu0 0.0
      %2484 = vmatmul.mubr.f32.gmra.mrb[0].mxu0 %v2282
      %v2485 = vpop.f32.mrb[0].mxu0
      %v2486 = vadd.f32 0.0, %v2485
      %v2487 = vpop.f32.mrb[0].mxu0
      %2488 = vmatprep.mubr.f32.mxu0 0.0
      %2489 = vmatmul.mubr.f32.gmra.mrb[0].mxu0 %v2283
      %v2490 = vpop.f32.mrb[0].mxu0
      %v2491 = vadd.f32 0.0, %v2490
      %v2492 = vpop.f32.mrb[0].mxu0
      %2493 = vmatprep.mubr.f32.mxu0 0.0
      %2494 = vmatmul.mubr.f32.gmra.mrb[0].mxu0 %v2284
      %v2495 = vpop.f32.mrb[0].mxu0
      %v2496 = vadd.f32 0.0, %v2495
      %v2497 = vpop.f32.mrb[0].mxu0
      %2498 = vmatprep.mubr.f32.mxu0 0.0
      %2499 = vmatmul.mubr.f32.gmra.mrb[0].mxu0 %v2285
      %v2500 = vpop.f32.mrb[0].mxu0
      %v2501 = vadd.f32 0.0, %v2500
      %v2502 = vpop.f32.mrb[0].mxu0
      %2503 = vmatprep.mubr.f32.mxu0 0.0
      %2504 = vmatmul.mubr.f32.gmra.mrb[0].mxu0 %v2286
      %v2505 = vpop.f32.mrb[0].mxu0
      %v2506 = vadd.f32 0.0, %v2505
      %v2507 = vpop.f32.mrb[0].mxu0
      %2508 = vmatprep.mubr.f32.mxu0 0.0
      %2509 = vmatmul.mubr.f32.gmra.mrb[0].mxu0 %v2287
      %v2510 = vpop.f32.mrb[0].mxu0
      %v2511 = vadd.f32 0.0, %v2510
      %v2512 = vpop.f32.mrb[0].mxu0
      %2513 = vmatprep.mubr.f32.mxu0 0.0
      %2514 = vmatmul.mubr.f32.gmra.mrb[0].mxu0 %v2288
      %v2515 = vpop.f32.mrb[0].mxu0
      %v2516 = vadd.f32 0.0, %v2515
      %v2517 = vpop.f32.mrb[0].mxu0
      %2518 = vmatprep.mubr.f32.mxu0 0.0
      %2519 = vmatmul.mubr.f32.gmra.mrb[0].mxu0 %v2289
      %v2520 = vpop.f32.mrb[0].mxu0
      %v2521 = vadd.f32 0.0, %v2520
      %v2522 = vpop.f32.mrb[0].mxu0
      %2523 = vmatprep.mubr.f32.mxu0 0.0
      %2524 = vmatmul.mubr.f32.gmra.mrb[0].mxu0 %v2290
      %v2525 = vpop.f32.mrb[0].mxu0
      %v2526 = vadd.f32 0.0, %v2525
      %v2527 = vpop.f32.mrb[0].mxu0
      %2528 = vmatprep.mubr.f32.mxu0 0.0
      %2529 = vmatmul.mubr.f32.gmra.mrb[0].mxu0 %v2291
      %v2530 = vpop.f32.mrb[0].mxu0
      %v2531 = vadd.f32 0.0, %v2530
      %v2532 = vpop.f32.mrb[0].mxu0
      %2533 = vdwg.mxu0
      %v2534 = vadd.f32 %v2227, %v2376
      %v2535 = vadd.f32 %v2228, %v2381
      %v2536 = vadd.f32 %v2229, %v2386
      %v2537 = vadd.f32 %v2230, %v2391
      %v2538 = vadd.f32 %v2231, %v2396
      %v2539 = vadd.f32 %v2232, %v2401
      %v2540 = vadd.f32 %v2233, %v2406
      %v2541 = vadd.f32 %v2234, %v2411
      %v2542 = vadd.f32 %v2235, %v2416
      %v2543 = vadd.f32 %v2236, %v2421
      %v2544 = vadd.f32 %v2237, %v2426
      %v2545 = vadd.f32 %v2238, %v2431
      %v2546 = vadd.f32 %v2239, %v2436
      %v2547 = vadd.f32 %v2240, %v2441
      %v2548 = vadd.f32 %v2241, %v2446
      %v2549 = vadd.f32 %v2242, %v2451
      %v2550 = vadd.f32 %v2243, %v2456
      %v2551 = vadd.f32 %v2244, %v2461
      %v2552 = vadd.f32 %v2245, %v2466
      %v2553 = vadd.f32 %v2246, %v2471
      %v2554 = vadd.f32 %v2247, %v2476
      %v2555 = vadd.f32 %v2248, %v2481
      %v2556 = vadd.f32 %v2249, %v2486
      %v2557 = vadd.f32 %v2250, %v2491
      %v2558 = vadd.f32 %v2251, %v2496
      %v2559 = vadd.f32 %v2252, %v2501
      %v2560 = vadd.f32 %v2253, %v2506
      %v2561 = vadd.f32 %v2254, %v2511
      %v2562 = vadd.f32 %v2255, %v2516
      %v2563 = vadd.f32 %v2256, %v2521
      %v2564 = vadd.f32 %v2257, %v2526
      %v2565 = vadd.f32 %v2258, %v2531
      %v2566 = vadd.f32 %v2534, %v1338
      %v2567 = vadd.f32 %v2535, %v1338
      %v2568 = vadd.f32 %v2536, %v1338
      %v2569 = vadd.f32 %v2537, %v1338
      %v2570 = vadd.f32 %v2538, %v1338
      %v2571 = vadd.f32 %v2539, %v1338
      %v2572 = vadd.f32 %v2540, %v1338
      %v2573 = vadd.f32 %v2541, %v1338
      %v2574 = vadd.f32 %v2542, %v1338
      %v2575 = vadd.f32 %v2543, %v1338
      %v2576 = vadd.f32 %v2544, %v1338
      %v2577 = vadd.f32 %v2545, %v1338
      %v2578 = vadd.f32 %v2546, %v1338
      %v2579 = vadd.f32 %v2547, %v1338
      %v2580 = vadd.f32 %v2548, %v1338
      %v2581 = vadd.f32 %v2549, %v1338
      %v2582 = vadd.f32 %v2550, %v1338
      %v2583 = vadd.f32 %v2551, %v1338
      %v2584 = vadd.f32 %v2552, %v1338
      %v2585 = vadd.f32 %v2553, %v1338
      %v2586 = vadd.f32 %v2554, %v1338
      %v2587 = vadd.f32 %v2555, %v1338
      %v2588 = vadd.f32 %v2556, %v1338
      %v2589 = vadd.f32 %v2557, %v1338
      %v2590 = vadd.f32 %v2558, %v1338
      %v2591 = vadd.f32 %v2559, %v1338
      %v2592 = vadd.f32 %v2560, %v1338
      %v2593 = vadd.f32 %v2561, %v1338
      %v2594 = vadd.f32 %v2562, %v1338
      %v2595 = vadd.f32 %v2563, %v1338
      %v2596 = vadd.f32 %v2564, %v1338
      %v2597 = vadd.f32 %v2565, %v1338
      %2598 = vst [vmem:[%s170 + $0x8] sm:$0xff] %v2566
      %2599 = vst [vmem:[%s170 + $0x18] sm:$0xff] %v2567
      %2600 = vst [vmem:[%s170 + $0x48] sm:$0xff] %v2568
      %2601 = vst [vmem:[%s170 + $0x58] sm:$0xff] %v2569
      %2602 = vst [vmem:[%s170 + $0x88] sm:$0xff] %v2570
      %2603 = vst [vmem:[%s170 + $0x98] sm:$0xff] %v2571
      %2604 = vst [vmem:[%s170 + $0xc8] sm:$0xff] %v2572
      %2605 = vst [vmem:[%s170 + $0xd8] sm:$0xff] %v2573
      %2606 = vst [vmem:[%s170 + $0x108] sm:$0xff] %v2574
      %2607 = vst [vmem:[%s170 + $0x118] sm:$0xff] %v2575
      %2608 = vst [vmem:[%s170 + $0x148] sm:$0xff] %v2576
      %2609 = vst [vmem:[%s170 + $0x158] sm:$0xff] %v2577
      %2610 = vst [vmem:[%s170 + $0x188] sm:$0xff] %v2578
      %2611 = vst [vmem:[%s170 + $0x198] sm:$0xff] %v2579
      %2612 = vst [vmem:[%s170 + $0x1c8] sm:$0xff] %v2580
      %2613 = vst [vmem:[%s170 + $0x1d8] sm:$0xff] %v2581
      %2614 = vst [vmem:[%s170 + $0x208] sm:$0xff] %v2582
      %2615 = vst [vmem:[%s170 + $0x218] sm:$0xff] %v2583
      %2616 = vst [vmem:[%s170 + $0x248] sm:$0xff] %v2584
      %2617 = vst [vmem:[%s170 + $0x258] sm:$0xff] %v2585
      %2618 = vst [vmem:[%s170 + $0x288] sm:$0xff] %v2586
      %2619 = vst [vmem:[%s170 + $0x298] sm:$0xff] %v2587
      %2620 = vst [vmem:[%s170 + $0x2c8] sm:$0xff] %v2588
      %2621 = vst [vmem:[%s170 + $0x2d8] sm:$0xff] %v2589
      %2622 = vst [vmem:[%s170 + $0x308] sm:$0xff] %v2590
      %2623 = vst [vmem:[%s170 + $0x318] sm:$0xff] %v2591
      %2624 = vst [vmem:[%s170 + $0x348] sm:$0xff] %v2592
      %2625 = vst [vmem:[%s170 + $0x358] sm:$0xff] %v2593
      %2626 = vst [vmem:[%s170 + $0x388] sm:$0xff] %v2594
      %2627 = vst [vmem:[%s170 + $0x398] sm:$0xff] %v2595
      %2628 = vst [vmem:[%s170 + $0x3c8] sm:$0xff] %v2596
      %2629 = vst [vmem:[%s170 + $0x3d8] sm:$0xff] %v2597
      %v2630 = vld [vmem:[%s720] sm:$0xff]
      %v2631 = vld [vmem:[%s720 + $0x8] sm:$0xff]
      %v2632 = vld [vmem:[%s720 + $0x10] sm:$0xff]
      %v2633 = vld [vmem:[%s720 + $0x18] sm:$0xff]
      %v2634 = vld [vmem:[%s720 + $0x20] sm:$0xff]
      %v2635 = vld [vmem:[%s720 + $0x28] sm:$0xff]
      %v2636 = vld [vmem:[%s720 + $0x30] sm:$0xff]
      %v2637 = vld [vmem:[%s720 + $0x38] sm:$0xff]
      %v2638 = vld [vmem:[%s720 + $0x40] sm:$0xff]
      %v2639 = vld [vmem:[%s720 + $0x48] sm:$0xff]
      %v2640 = vld [vmem:[%s720 + $0x50] sm:$0xff]
      %v2641 = vld [vmem:[%s720 + $0x58] sm:$0xff]
      %v2642 = vld [vmem:[%s720 + $0x60] sm:$0xff]
      %v2643 = vld [vmem:[%s720 + $0x68] sm:$0xff]
      %v2644 = vld [vmem:[%s720 + $0x70] sm:$0xff]
      %v2645 = vld [vmem:[%s720 + $0x78] sm:$0xff]
      %v2646 = vld [vmem:[%s720 + $0x80] sm:$0xff]
      %v2647 = vld [vmem:[%s720 + $0x88] sm:$0xff]
      %v2648 = vld [vmem:[%s720 + $0x90] sm:$0xff]
      %v2649 = vld [vmem:[%s720 + $0x98] sm:$0xff]
      %v2650 = vld [vmem:[%s720 + $0xa0] sm:$0xff]
      %v2651 = vld [vmem:[%s720 + $0xa8] sm:$0xff]
      %v2652 = vld [vmem:[%s720 + $0xb0] sm:$0xff]
      %v2653 = vld [vmem:[%s720 + $0xb8] sm:$0xff]
      %v2654 = vld [vmem:[%s720 + $0xc0] sm:$0xff]
      %v2655 = vld [vmem:[%s720 + $0xc8] sm:$0xff]
      %v2656 = vld [vmem:[%s720 + $0xd0] sm:$0xff]
      %v2657 = vld [vmem:[%s720 + $0xd8] sm:$0xff]
      %v2658 = vld [vmem:[%s720 + $0xe0] sm:$0xff]
      %v2659 = vld [vmem:[%s720 + $0xe8] sm:$0xff]
      %v2660 = vld [vmem:[%s720 + $0xf0] sm:$0xff]
      %v2661 = vld [vmem:[%s720 + $0xf8] sm:$0xff]
      %s2662 = scalar_lea.vmem %s1, 1024
      %v2663 = vld [vmem:[%s2662] sm:$0xff]
      %v2664 = vld [vmem:[%s2662 + $0x8] sm:$0xff]
      %v2665 = vld [vmem:[%s2662 + $0x10] sm:$0xff]
      %v2666 = vld [vmem:[%s2662 + $0x18] sm:$0xff]
      %v2667 = vld [vmem:[%s2662 + $0x20] sm:$0xff]
      %v2668 = vld [vmem:[%s2662 + $0x28] sm:$0xff]
      %v2669 = vld [vmem:[%s2662 + $0x30] sm:$0xff]
      %v2670 = vld [vmem:[%s2662 + $0x38] sm:$0xff]
      %v2671 = vld [vmem:[%s2662 + $0x40] sm:$0xff]
      %v2672 = vld [vmem:[%s2662 + $0x48] sm:$0xff]
      %v2673 = vld [vmem:[%s2662 + $0x50] sm:$0xff]
      %v2674 = vld [vmem:[%s2662 + $0x58] sm:$0xff]
      %v2675 = vld [vmem:[%s2662 + $0x60] sm:$0xff]
      %v2676 = vld [vmem:[%s2662 + $0x68] sm:$0xff]
      %v2677 = vld [vmem:[%s2662 + $0x70] sm:$0xff]
      %v2678 = vld [vmem:[%s2662 + $0x78] sm:$0xff]
      %v2679 = vld [vmem:[%s1027] sm:$0xff]
      %v2680 = vld [vmem:[%s1027 + $0x8] sm:$0xff]
      %v2681 = vld [vmem:[%s1027 + $0x10] sm:$0xff]
      %v2682 = vld [vmem:[%s1027 + $0x18] sm:$0xff]
      %v2683 = vld [vmem:[%s1027 + $0x20] sm:$0xff]
      %v2684 = vld [vmem:[%s1027 + $0x28] sm:$0xff]
      %v2685 = vld [vmem:[%s1027 + $0x30] sm:$0xff]
      %v2686 = vld [vmem:[%s1027 + $0x38] sm:$0xff]
      %v2687 = vld [vmem:[%s1027 + $0x40] sm:$0xff]
      %v2688 = vld [vmem:[%s1027 + $0x48] sm:$0xff]
      %v2689 = vld [vmem:[%s1027 + $0x50] sm:$0xff]
      %v2690 = vld [vmem:[%s1027 + $0x58] sm:$0xff]
      %v2691 = vld [vmem:[%s1027 + $0x60] sm:$0xff]
      %v2692 = vld [vmem:[%s1027 + $0x68] sm:$0xff]
      %v2693 = vld [vmem:[%s1027 + $0x70] sm:$0xff]
      %v2694 = vld [vmem:[%s1027 + $0x78] sm:$0xff]
      %v2695 = vld [vmem:[%s1027 + $0x80] sm:$0xff]
      %v2696 = vld [vmem:[%s1027 + $0x88] sm:$0xff]
      %v2697 = vld [vmem:[%s1027 + $0x90] sm:$0xff]
      %v2698 = vld [vmem:[%s1027 + $0x98] sm:$0xff]
      %v2699 = vld [vmem:[%s1027 + $0xa0] sm:$0xff]
      %v2700 = vld [vmem:[%s1027 + $0xa8] sm:$0xff]
      %v2701 = vld [vmem:[%s1027 + $0xb0] sm:$0xff]
      %v2702 = vld [vmem:[%s1027 + $0xb8] sm:$0xff]
      %v2703 = vld [vmem:[%s1027 + $0xc0] sm:$0xff]
      %v2704 = vld [vmem:[%s1027 + $0xc8] sm:$0xff]
      %v2705 = vld [vmem:[%s1027 + $0xd0] sm:$0xff]
      %v2706 = vld [vmem:[%s1027 + $0xd8] sm:$0xff]
      %v2707 = vld [vmem:[%s1027 + $0xe0] sm:$0xff]
      %v2708 = vld [vmem:[%s1027 + $0xe8] sm:$0xff]
      %v2709 = vld [vmem:[%s1027 + $0xf0] sm:$0xff]
      %v2710 = vld [vmem:[%s1027 + $0xf8] sm:$0xff]
      %s2711 = scalar_lea.vmem %s1, 1152
      %v2712 = vld [vmem:[%s2711] sm:$0xff]
      %v2713 = vld [vmem:[%s2711 + $0x8] sm:$0xff]
      %v2714 = vld [vmem:[%s2711 + $0x10] sm:$0xff]
      %v2715 = vld [vmem:[%s2711 + $0x18] sm:$0xff]
      %v2716 = vld [vmem:[%s2711 + $0x20] sm:$0xff]
      %v2717 = vld [vmem:[%s2711 + $0x28] sm:$0xff]
      %v2718 = vld [vmem:[%s2711 + $0x30] sm:$0xff]
      %v2719 = vld [vmem:[%s2711 + $0x38] sm:$0xff]
      %v2720 = vld [vmem:[%s2711 + $0x40] sm:$0xff]
      %v2721 = vld [vmem:[%s2711 + $0x48] sm:$0xff]
      %v2722 = vld [vmem:[%s2711 + $0x50] sm:$0xff]
      %v2723 = vld [vmem:[%s2711 + $0x58] sm:$0xff]
      %v2724 = vld [vmem:[%s2711 + $0x60] sm:$0xff]
      %v2725 = vld [vmem:[%s2711 + $0x68] sm:$0xff]
      %v2726 = vld [vmem:[%s2711 + $0x70] sm:$0xff]
      %v2727 = vld [vmem:[%s2711 + $0x78] sm:$0xff]
      %2728 = vmatprep.subr.mxu0 0.0
      %2729 = vmatpush1.msra.mxu0 %v2712
      %2730 = vmatprep.subr.mxu0 0.0
      %2731 = vmatpush1.msra.mxu0 %v2713
      %2732 = vmatprep.subr.mxu0 0.0
      %2733 = vmatpush1.msra.mxu0 %v2714
      %2734 = vmatprep.subr.mxu0 0.0
      %2735 = vmatpush1.msra.mxu0 %v2715
      %2736 = vmatprep.subr.mxu0 0.0
      %2737 = vmatpush1.msra.mxu0 %v2716
      %2738 = vmatprep.subr.mxu0 0.0
      %2739 = vmatpush1.msra.mxu0 %v2717
      %2740 = vmatprep.subr.mxu0 0.0
      %2741 = vmatpush1.msra.mxu0 %v2718
      %2742 = vmatprep.subr.mxu0 0.0
      %2743 = vmatpush1.msra.mxu0 %v2719
      %2744 = vmatprep.subr.mxu0 0.0
      %2745 = vmatpush1.msra.mxu0 %v2720
      %2746 = vmatprep.subr.mxu0 0.0
      %2747 = vmatpush1.msra.mxu0 %v2721
      %2748 = vmatprep.subr.mxu0 0.0
      %2749 = vmatpush1.msra.mxu0 %v2722
      %2750 = vmatprep.subr.mxu0 0.0
      %2751 = vmatpush1.msra.mxu0 %v2723
      %2752 = vmatprep.subr.mxu0 0.0
      %2753 = vmatpush1.msra.mxu0 %v2724
      %2754 = vmatprep.subr.mxu0 0.0
      %2755 = vmatpush1.msra.mxu0 %v2725
      %2756 = vmatprep.subr.mxu0 0.0
      %2757 = vmatpush1.msra.mxu0 %v2726
      %2758 = vmatprep.subr.mxu0 0.0
      %2759 = vmatpush1.msra.mxu0 %v2727
      %2760 = vmatprep.subr.mxu0 0.0
      %2761 = vmatpush1.msra.mxu0 0.0
      %2762 = vmatprep.subr.mxu0 0.0
      %2763 = vmatpush1.msra.mxu0 0.0
      %2764 = vmatprep.subr.mxu0 0.0
      %2765 = vmatpush1.msra.mxu0 0.0
      %2766 = vmatprep.subr.mxu0 0.0
      %2767 = vmatpush1.msra.mxu0 0.0
      %2768 = vmatprep.subr.mxu0 0.0
      %2769 = vmatpush1.msra.mxu0 0.0
      %2770 = vmatprep.subr.mxu0 0.0
      %2771 = vmatpush1.msra.mxu0 0.0
      %2772 = vmatprep.subr.mxu0 0.0
      %2773 = vmatpush1.msra.mxu0 0.0
      %2774 = vmatprep.subr.mxu0 0.0
      %2775 = vmatpush1.msra.mxu0 0.0
      %2776 = vmatprep.subr.mxu0 0.0
      %2777 = vmatpush1.msra.mxu0 0.0
      %2778 = vmatprep.subr.mxu0 0.0
      %2779 = vmatpush1.msra.mxu0 0.0
      %2780 = vmatprep.subr.mxu0 0.0
      %2781 = vmatpush1.msra.mxu0 0.0
      %2782 = vmatprep.subr.mxu0 0.0
      %2783 = vmatpush1.msra.mxu0 0.0
      %2784 = vmatprep.subr.mxu0 0.0
      %2785 = vmatpush1.msra.mxu0 0.0
      %2786 = vmatprep.subr.mxu0 0.0
      %2787 = vmatpush1.msra.mxu0 0.0
      %2788 = vmatprep.subr.mxu0 0.0
      %2789 = vmatpush1.msra.mxu0 0.0
      %2790 = vmatprep.subr.mxu0 0.0
      %2791 = vmatpush1.msra.mxu0 0.0
      %2792 = vmatprep.mubr.f32.mxu0 0.0
      %2793 = vmatmul.mubr.f32.gmra.mrb[0].mxu0 %v2679
      %v2794 = vpop.f32.mrb[0].mxu0
      %v2795 = vadd.f32 0.0, %v2794
      %v2796 = vpop.f32.mrb[0].mxu0
      %2797 = vmatprep.mubr.f32.mxu0 0.0
      %2798 = vmatmul.mubr.f32.gmra.mrb[0].mxu0 %v2680
      %v2799 = vpop.f32.mrb[0].mxu0
      %v2800 = vadd.f32 0.0, %v2799
      %v2801 = vpop.f32.mrb[0].mxu0
      %2802 = vmatprep.mubr.f32.mxu0 0.0
      %2803 = vmatmul.mubr.f32.gmra.mrb[0].mxu0 %v2681
      %v2804 = vpop.f32.mrb[0].mxu0
      %v2805 = vadd.f32 0.0, %v2804
      %v2806 = vpop.f32.mrb[0].mxu0
      %2807 = vmatprep.mubr.f32.mxu0 0.0
      %2808 = vmatmul.mubr.f32.gmra.mrb[0].mxu0 %v2682
      %v2809 = vpop.f32.mrb[0].mxu0
      %v2810 = vadd.f32 0.0, %v2809
      %v2811 = vpop.f32.mrb[0].mxu0
      %2812 = vmatprep.mubr.f32.mxu0 0.0
      %2813 = vmatmul.mubr.f32.gmra.mrb[0].mxu0 %v2683
      %v2814 = vpop.f32.mrb[0].mxu0
      %v2815 = vadd.f32 0.0, %v2814
      %v2816 = vpop.f32.mrb[0].mxu0
      %2817 = vmatprep.mubr.f32.mxu0 0.0
      %2818 = vmatmul.mubr.f32.gmra.mrb[0].mxu0 %v2684
      %v2819 = vpop.f32.mrb[0].mxu0
      %v2820 = vadd.f32 0.0, %v2819
      %v2821 = vpop.f32.mrb[0].mxu0
      %2822 = vmatprep.mubr.f32.mxu0 0.0
      %2823 = vmatmul.mubr.f32.gmra.mrb[0].mxu0 %v2685
      %v2824 = vpop.f32.mrb[0].mxu0
      %v2825 = vadd.f32 0.0, %v2824
      %v2826 = vpop.f32.mrb[0].mxu0
      %2827 = vmatprep.mubr.f32.mxu0 0.0
      %2828 = vmatmul.mubr.f32.gmra.mrb[0].mxu0 %v2686
      %v2829 = vpop.f32.mrb[0].mxu0
      %v2830 = vadd.f32 0.0, %v2829
      %v2831 = vpop.f32.mrb[0].mxu0
      %2832 = vmatprep.mubr.f32.mxu0 0.0
      %2833 = vmatmul.mubr.f32.gmra.mrb[0].mxu0 %v2687
      %v2834 = vpop.f32.mrb[0].mxu0
      %v2835 = vadd.f32 0.0, %v2834
      %v2836 = vpop.f32.mrb[0].mxu0
      %2837 = vmatprep.mubr.f32.mxu0 0.0
      %2838 = vmatmul.mubr.f32.gmra.mrb[0].mxu0 %v2688
      %v2839 = vpop.f32.mrb[0].mxu0
      %v2840 = vadd.f32 0.0, %v2839
      %v2841 = vpop.f32.mrb[0].mxu0
      %2842 = vmatprep.mubr.f32.mxu0 0.0
      %2843 = vmatmul.mubr.f32.gmra.mrb[0].mxu0 %v2689
      %v2844 = vpop.f32.mrb[0].mxu0
      %v2845 = vadd.f32 0.0, %v2844
      %v2846 = vpop.f32.mrb[0].mxu0
      %2847 = vmatprep.mubr.f32.mxu0 0.0
      %2848 = vmatmul.mubr.f32.gmra.mrb[0].mxu0 %v2690
      %v2849 = vpop.f32.mrb[0].mxu0
      %v2850 = vadd.f32 0.0, %v2849
      %v2851 = vpop.f32.mrb[0].mxu0
      %2852 = vmatprep.mubr.f32.mxu0 0.0
      %2853 = vmatmul.mubr.f32.gmra.mrb[0].mxu0 %v2691
      %v2854 = vpop.f32.mrb[0].mxu0
      %v2855 = vadd.f32 0.0, %v2854
      %v2856 = vpop.f32.mrb[0].mxu0
      %2857 = vmatprep.mubr.f32.mxu0 0.0
      %2858 = vmatmul.mubr.f32.gmra.mrb[0].mxu0 %v2692
      %v2859 = vpop.f32.mrb[0].mxu0
      %v2860 = vadd.f32 0.0, %v2859
      %v2861 = vpop.f32.mrb[0].mxu0
      %2862 = vmatprep.mubr.f32.mxu0 0.0
      %2863 = vmatmul.mubr.f32.gmra.mrb[0].mxu0 %v2693
      %v2864 = vpop.f32.mrb[0].mxu0
      %v2865 = vadd.f32 0.0, %v2864
      %v2866 = vpop.f32.mrb[0].mxu0
      %2867 = vmatprep.mubr.f32.mxu0 0.0
      %2868 = vmatmul.mubr.f32.gmra.mrb[0].mxu0 %v2694
      %v2869 = vpop.f32.mrb[0].mxu0
      %v2870 = vadd.f32 0.0, %v2869
      %v2871 = vpop.f32.mrb[0].mxu0
      %2872 = vmatprep.mubr.f32.mxu0 0.0
      %2873 = vmatmul.mubr.f32.gmra.mrb[0].mxu0 %v2695
      %v2874 = vpop.f32.mrb[0].mxu0
      %v2875 = vadd.f32 0.0, %v2874
      %v2876 = vpop.f32.mrb[0].mxu0
      %2877 = vmatprep.mubr.f32.mxu0 0.0
      %2878 = vmatmul.mubr.f32.gmra.mrb[0].mxu0 %v2696
      %v2879 = vpop.f32.mrb[0].mxu0
      %v2880 = vadd.f32 0.0, %v2879
      %v2881 = vpop.f32.mrb[0].mxu0
      %2882 = vmatprep.mubr.f32.mxu0 0.0
      %2883 = vmatmul.mubr.f32.gmra.mrb[0].mxu0 %v2697
      %v2884 = vpop.f32.mrb[0].mxu0
      %v2885 = vadd.f32 0.0, %v2884
      %v2886 = vpop.f32.mrb[0].mxu0
      %2887 = vmatprep.mubr.f32.mxu0 0.0
      %2888 = vmatmul.mubr.f32.gmra.mrb[0].mxu0 %v2698
      %v2889 = vpop.f32.mrb[0].mxu0
      %v2890 = vadd.f32 0.0, %v2889
      %v2891 = vpop.f32.mrb[0].mxu0
      %2892 = vmatprep.mubr.f32.mxu0 0.0
      %2893 = vmatmul.mubr.f32.gmra.mrb[0].mxu0 %v2699
      %v2894 = vpop.f32.mrb[0].mxu0
      %v2895 = vadd.f32 0.0, %v2894
      %v2896 = vpop.f32.mrb[0].mxu0
      %2897 = vmatprep.mubr.f32.mxu0 0.0
      %2898 = vmatmul.mubr.f32.gmra.mrb[0].mxu0 %v2700
      %v2899 = vpop.f32.mrb[0].mxu0
      %v2900 = vadd.f32 0.0, %v2899
      %v2901 = vpop.f32.mrb[0].mxu0
      %2902 = vmatprep.mubr.f32.mxu0 0.0
      %2903 = vmatmul.mubr.f32.gmra.mrb[0].mxu0 %v2701
      %v2904 = vpop.f32.mrb[0].mxu0
      %v2905 = vadd.f32 0.0, %v2904
      %v2906 = vpop.f32.mrb[0].mxu0
      %2907 = vmatprep.mubr.f32.mxu0 0.0
      %2908 = vmatmul.mubr.f32.gmra.mrb[0].mxu0 %v2702
      %v2909 = vpop.f32.mrb[0].mxu0
      %v2910 = vadd.f32 0.0, %v2909
      %v2911 = vpop.f32.mrb[0].mxu0
      %2912 = vmatprep.mubr.f32.mxu0 0.0
      %2913 = vmatmul.mubr.f32.gmra.mrb[0].mxu0 %v2703
      %v2914 = vpop.f32.mrb[0].mxu0
      %v2915 = vadd.f32 0.0, %v2914
      %v2916 = vpop.f32.mrb[0].mxu0
      %2917 = vmatprep.mubr.f32.mxu0 0.0
      %2918 = vmatmul.mubr.f32.gmra.mrb[0].mxu0 %v2704
      %v2919 = vpop.f32.mrb[0].mxu0
      %v2920 = vadd.f32 0.0, %v2919
      %v2921 = vpop.f32.mrb[0].mxu0
      %2922 = vmatprep.mubr.f32.mxu0 0.0
      %2923 = vmatmul.mubr.f32.gmra.mrb[0].mxu0 %v2705
      %v2924 = vpop.f32.mrb[0].mxu0
      %v2925 = vadd.f32 0.0, %v2924
      %v2926 = vpop.f32.mrb[0].mxu0
      %2927 = vmatprep.mubr.f32.mxu0 0.0
      %2928 = vmatmul.mubr.f32.gmra.mrb[0].mxu0 %v2706
      %v2929 = vpop.f32.mrb[0].mxu0
      %v2930 = vadd.f32 0.0, %v2929
      %v2931 = vpop.f32.mrb[0].mxu0
      %2932 = vmatprep.mubr.f32.mxu0 0.0
      %2933 = vmatmul.mubr.f32.gmra.mrb[0].mxu0 %v2707
      %v2934 = vpop.f32.mrb[0].mxu0
      %v2935 = vadd.f32 0.0, %v2934
      %v2936 = vpop.f32.mrb[0].mxu0
      %2937 = vmatprep.mubr.f32.mxu0 0.0
      %2938 = vmatmul.mubr.f32.gmra.mrb[0].mxu0 %v2708
      %v2939 = vpop.f32.mrb[0].mxu0
      %v2940 = vadd.f32 0.0, %v2939
      %v2941 = vpop.f32.mrb[0].mxu0
      %2942 = vmatprep.mubr.f32.mxu0 0.0
      %2943 = vmatmul.mubr.f32.gmra.mrb[0].mxu0 %v2709
      %v2944 = vpop.f32.mrb[0].mxu0
      %v2945 = vadd.f32 0.0, %v2944
      %v2946 = vpop.f32.mrb[0].mxu0
      %2947 = vmatprep.mubr.f32.mxu0 0.0
      %2948 = vmatmul.mubr.f32.gmra.mrb[0].mxu0 %v2710
      %v2949 = vpop.f32.mrb[0].mxu0
      %v2950 = vadd.f32 0.0, %v2949
      %v2951 = vpop.f32.mrb[0].mxu0
      %2952 = vdwg.mxu0
      %2953 = vmatprep.subr.mxu0 0.0
      %2954 = vmatpush1.msra.mxu0 %v2663
      %2955 = vmatprep.subr.mxu0 0.0
      %2956 = vmatpush1.msra.mxu0 %v2664
      %2957 = vmatprep.subr.mxu0 0.0
      %2958 = vmatpush1.msra.mxu0 %v2665
      %2959 = vmatprep.subr.mxu0 0.0
      %2960 = vmatpush1.msra.mxu0 %v2666
      %2961 = vmatprep.subr.mxu0 0.0
      %2962 = vmatpush1.msra.mxu0 %v2667
      %2963 = vmatprep.subr.mxu0 0.0
      %2964 = vmatpush1.msra.mxu0 %v2668
      %2965 = vmatprep.subr.mxu0 0.0
      %2966 = vmatpush1.msra.mxu0 %v2669
      %2967 = vmatprep.subr.mxu0 0.0
      %2968 = vmatpush1.msra.mxu0 %v2670
      %2969 = vmatprep.subr.mxu0 0.0
      %2970 = vmatpush1.msra.mxu0 %v2671
      %2971 = vmatprep.subr.mxu0 0.0
      %2972 = vmatpush1.msra.mxu0 %v2672
      %2973 = vmatprep.subr.mxu0 0.0
      %2974 = vmatpush1.msra.mxu0 %v2673
      %2975 = vmatprep.subr.mxu0 0.0
      %2976 = vmatpush1.msra.mxu0 %v2674
      %2977 = vmatprep.subr.mxu0 0.0
      %2978 = vmatpush1.msra.mxu0 %v2675
      %2979 = vmatprep.subr.mxu0 0.0
      %2980 = vmatpush1.msra.mxu0 %v2676
      %2981 = vmatprep.subr.mxu0 0.0
      %2982 = vmatpush1.msra.mxu0 %v2677
      %2983 = vmatprep.subr.mxu0 0.0
      %2984 = vmatpush1.msra.mxu0 %v2678
      %2985 = vmatprep.subr.mxu0 0.0
      %2986 = vmatpush1.msra.mxu0 0.0
      %2987 = vmatprep.subr.mxu0 0.0
      %2988 = vmatpush1.msra.mxu0 0.0
      %2989 = vmatprep.subr.mxu0 0.0
      %2990 = vmatpush1.msra.mxu0 0.0
      %2991 = vmatprep.subr.mxu0 0.0
      %2992 = vmatpush1.msra.mxu0 0.0
      %2993 = vmatprep.subr.mxu0 0.0
      %2994 = vmatpush1.msra.mxu0 0.0
      %2995 = vmatprep.subr.mxu0 0.0
      %2996 = vmatpush1.msra.mxu0 0.0
      %2997 = vmatprep.subr.mxu0 0.0
      %2998 = vmatpush1.msra.mxu0 0.0
      %2999 = vmatprep.subr.mxu0 0.0
      %3000 = vmatpush1.msra.mxu0 0.0
      %3001 = vmatprep.subr.mxu0 0.0
      %3002 = vmatpush1.msra.mxu0 0.0
      %3003 = vmatprep.subr.mxu0 0.0
      %3004 = vmatpush1.msra.mxu0 0.0
      %3005 = vmatprep.subr.mxu0 0.0
      %3006 = vmatpush1.msra.mxu0 0.0
      %3007 = vmatprep.subr.mxu0 0.0
      %3008 = vmatpush1.msra.mxu0 0.0
      %3009 = vmatprep.subr.mxu0 0.0
      %3010 = vmatpush1.msra.mxu0 0.0
      %3011 = vmatprep.subr.mxu0 0.0
      %3012 = vmatpush1.msra.mxu0 0.0
      %3013 = vmatprep.subr.mxu0 0.0
      %3014 = vmatpush1.msra.mxu0 0.0
      %3015 = vmatprep.subr.mxu0 0.0
      %3016 = vmatpush1.msra.mxu0 0.0
      %3017 = vmatprep.mubr.f32.mxu0 0.0
      %3018 = vmatmul.mubr.f32.gmra.mrb[0].mxu0 %v2630
      %v3019 = vpop.f32.mrb[0].mxu0
      %v3020 = vadd.f32 %v2795, %v3019
      %v3021 = vpop.f32.mrb[0].mxu0
      %3022 = vmatprep.mubr.f32.mxu0 0.0
      %3023 = vmatmul.mubr.f32.gmra.mrb[0].mxu0 %v2631
      %v3024 = vpop.f32.mrb[0].mxu0
      %v3025 = vadd.f32 %v2800, %v3024
      %v3026 = vpop.f32.mrb[0].mxu0
      %3027 = vmatprep.mubr.f32.mxu0 0.0
      %3028 = vmatmul.mubr.f32.gmra.mrb[0].mxu0 %v2632
      %v3029 = vpop.f32.mrb[0].mxu0
      %v3030 = vadd.f32 %v2805, %v3029
      %v3031 = vpop.f32.mrb[0].mxu0
      %3032 = vmatprep.mubr.f32.mxu0 0.0
      %3033 = vmatmul.mubr.f32.gmra.mrb[0].mxu0 %v2633
      %v3034 = vpop.f32.mrb[0].mxu0
      %v3035 = vadd.f32 %v2810, %v3034
      %v3036 = vpop.f32.mrb[0].mxu0
      %3037 = vmatprep.mubr.f32.mxu0 0.0
      %3038 = vmatmul.mubr.f32.gmra.mrb[0].mxu0 %v2634
      %v3039 = vpop.f32.mrb[0].mxu0
      %v3040 = vadd.f32 %v2815, %v3039
      %v3041 = vpop.f32.mrb[0].mxu0
      %3042 = vmatprep.mubr.f32.mxu0 0.0
      %3043 = vmatmul.mubr.f32.gmra.mrb[0].mxu0 %v2635
      %v3044 = vpop.f32.mrb[0].mxu0
      %v3045 = vadd.f32 %v2820, %v3044
      %v3046 = vpop.f32.mrb[0].mxu0
      %3047 = vmatprep.mubr.f32.mxu0 0.0
      %3048 = vmatmul.mubr.f32.gmra.mrb[0].mxu0 %v2636
      %v3049 = vpop.f32.mrb[0].mxu0
      %v3050 = vadd.f32 %v2825, %v3049
      %v3051 = vpop.f32.mrb[0].mxu0
      %3052 = vmatprep.mubr.f32.mxu0 0.0
      %3053 = vmatmul.mubr.f32.gmra.mrb[0].mxu0 %v2637
      %v3054 = vpop.f32.mrb[0].mxu0
      %v3055 = vadd.f32 %v2830, %v3054
      %v3056 = vpop.f32.mrb[0].mxu0
      %3057 = vmatprep.mubr.f32.mxu0 0.0
      %3058 = vmatmul.mubr.f32.gmra.mrb[0].mxu0 %v2638
      %v3059 = vpop.f32.mrb[0].mxu0
      %v3060 = vadd.f32 %v2835, %v3059
      %v3061 = vpop.f32.mrb[0].mxu0
      %3062 = vmatprep.mubr.f32.mxu0 0.0
      %3063 = vmatmul.mubr.f32.gmra.mrb[0].mxu0 %v2639
      %v3064 = vpop.f32.mrb[0].mxu0
      %v3065 = vadd.f32 %v2840, %v3064
      %v3066 = vpop.f32.mrb[0].mxu0
      %3067 = vmatprep.mubr.f32.mxu0 0.0
      %3068 = vmatmul.mubr.f32.gmra.mrb[0].mxu0 %v2640
      %v3069 = vpop.f32.mrb[0].mxu0
      %v3070 = vadd.f32 %v2845, %v3069
      %v3071 = vpop.f32.mrb[0].mxu0
      %3072 = vmatprep.mubr.f32.mxu0 0.0
      %3073 = vmatmul.mubr.f32.gmra.mrb[0].mxu0 %v2641
      %v3074 = vpop.f32.mrb[0].mxu0
      %v3075 = vadd.f32 %v2850, %v3074
      %v3076 = vpop.f32.mrb[0].mxu0
      %3077 = vmatprep.mubr.f32.mxu0 0.0
      %3078 = vmatmul.mubr.f32.gmra.mrb[0].mxu0 %v2642
      %v3079 = vpop.f32.mrb[0].mxu0
      %v3080 = vadd.f32 %v2855, %v3079
      %v3081 = vpop.f32.mrb[0].mxu0
      %3082 = vmatprep.mubr.f32.mxu0 0.0
      %3083 = vmatmul.mubr.f32.gmra.mrb[0].mxu0 %v2643
      %v3084 = vpop.f32.mrb[0].mxu0
      %v3085 = vadd.f32 %v2860, %v3084
      %v3086 = vpop.f32.mrb[0].mxu0
      %3087 = vmatprep.mubr.f32.mxu0 0.0
      %3088 = vmatmul.mubr.f32.gmra.mrb[0].mxu0 %v2644
      %v3089 = vpop.f32.mrb[0].mxu0
      %v3090 = vadd.f32 %v2865, %v3089
      %v3091 = vpop.f32.mrb[0].mxu0
      %3092 = vmatprep.mubr.f32.mxu0 0.0
      %3093 = vmatmul.mubr.f32.gmra.mrb[0].mxu0 %v2645
      %v3094 = vpop.f32.mrb[0].mxu0
      %v3095 = vadd.f32 %v2870, %v3094
      %v3096 = vpop.f32.mrb[0].mxu0
      %3097 = vmatprep.mubr.f32.mxu0 0.0
      %3098 = vmatmul.mubr.f32.gmra.mrb[0].mxu0 %v2646
      %v3099 = vpop.f32.mrb[0].mxu0
      %v3100 = vadd.f32 %v2875, %v3099
      %v3101 = vpop.f32.mrb[0].mxu0
      %3102 = vmatprep.mubr.f32.mxu0 0.0
      %3103 = vmatmul.mubr.f32.gmra.mrb[0].mxu0 %v2647
      %v3104 = vpop.f32.mrb[0].mxu0
      %v3105 = vadd.f32 %v2880, %v3104
      %v3106 = vpop.f32.mrb[0].mxu0
      %3107 = vmatprep.mubr.f32.mxu0 0.0
      %3108 = vmatmul.mubr.f32.gmra.mrb[0].mxu0 %v2648
      %v3109 = vpop.f32.mrb[0].mxu0
      %v3110 = vadd.f32 %v2885, %v3109
      %v3111 = vpop.f32.mrb[0].mxu0
      %3112 = vmatprep.mubr.f32.mxu0 0.0
      %3113 = vmatmul.mubr.f32.gmra.mrb[0].mxu0 %v2649
      %v3114 = vpop.f32.mrb[0].mxu0
      %v3115 = vadd.f32 %v2890, %v3114
      %v3116 = vpop.f32.mrb[0].mxu0
      %3117 = vmatprep.mubr.f32.mxu0 0.0
      %3118 = vmatmul.mubr.f32.gmra.mrb[0].mxu0 %v2650
      %v3119 = vpop.f32.mrb[0].mxu0
      %v3120 = vadd.f32 %v2895, %v3119
      %v3121 = vpop.f32.mrb[0].mxu0
      %3122 = vmatprep.mubr.f32.mxu0 0.0
      %3123 = vmatmul.mubr.f32.gmra.mrb[0].mxu0 %v2651
      %v3124 = vpop.f32.mrb[0].mxu0
      %v3125 = vadd.f32 %v2900, %v3124
      %v3126 = vpop.f32.mrb[0].mxu0
      %3127 = vmatprep.mubr.f32.mxu0 0.0
      %3128 = vmatmul.mubr.f32.gmra.mrb[0].mxu0 %v2652
      %v3129 = vpop.f32.mrb[0].mxu0
      %v3130 = vadd.f32 %v2905, %v3129
      %v3131 = vpop.f32.mrb[0].mxu0
      %3132 = vmatprep.mubr.f32.mxu0 0.0
      %3133 = vmatmul.mubr.f32.gmra.mrb[0].mxu0 %v2653
      %v3134 = vpop.f32.mrb[0].mxu0
      %v3135 = vadd.f32 %v2910, %v3134
      %v3136 = vpop.f32.mrb[0].mxu0
      %3137 = vmatprep.mubr.f32.mxu0 0.0
      %3138 = vmatmul.mubr.f32.gmra.mrb[0].mxu0 %v2654
      %v3139 = vpop.f32.mrb[0].mxu0
      %v3140 = vadd.f32 %v2915, %v3139
      %v3141 = vpop.f32.mrb[0].mxu0
      %3142 = vmatprep.mubr.f32.mxu0 0.0
      %3143 = vmatmul.mubr.f32.gmra.mrb[0].mxu0 %v2655
      %v3144 = vpop.f32.mrb[0].mxu0
      %v3145 = vadd.f32 %v2920, %v3144
      %v3146 = vpop.f32.mrb[0].mxu0
      %3147 = vmatprep.mubr.f32.mxu0 0.0
      %3148 = vmatmul.mubr.f32.gmra.mrb[0].mxu0 %v2656
      %v3149 = vpop.f32.mrb[0].mxu0
      %v3150 = vadd.f32 %v2925, %v3149
      %v3151 = vpop.f32.mrb[0].mxu0
      %3152 = vmatprep.mubr.f32.mxu0 0.0
      %3153 = vmatmul.mubr.f32.gmra.mrb[0].mxu0 %v2657
      %v3154 = vpop.f32.mrb[0].mxu0
      %v3155 = vadd.f32 %v2930, %v3154
      %v3156 = vpop.f32.mrb[0].mxu0
      %3157 = vmatprep.mubr.f32.mxu0 0.0
      %3158 = vmatmul.mubr.f32.gmra.mrb[0].mxu0 %v2658
      %v3159 = vpop.f32.mrb[0].mxu0
      %v3160 = vadd.f32 %v2935, %v3159
      %v3161 = vpop.f32.mrb[0].mxu0
      %3162 = vmatprep.mubr.f32.mxu0 0.0
      %3163 = vmatmul.mubr.f32.gmra.mrb[0].mxu0 %v2659
      %v3164 = vpop.f32.mrb[0].mxu0
      %v3165 = vadd.f32 %v2940, %v3164
      %v3166 = vpop.f32.mrb[0].mxu0
      %3167 = vmatprep.mubr.f32.mxu0 0.0
      %3168 = vmatmul.mubr.f32.gmra.mrb[0].mxu0 %v2660
      %v3169 = vpop.f32.mrb[0].mxu0
      %v3170 = vadd.f32 %v2945, %v3169
      %v3171 = vpop.f32.mrb[0].mxu0
      %3172 = vmatprep.mubr.f32.mxu0 0.0
      %3173 = vmatmul.mubr.f32.gmra.mrb[0].mxu0 %v2661
      %v3174 = vpop.f32.mrb[0].mxu0
      %v3175 = vadd.f32 %v2950, %v3174
      %v3176 = vpop.f32.mrb[0].mxu0
      %3177 = vdwg.mxu0
      %s3178 = scalar_lea.vmem %s165, 32
      %v3179 = vld [vmem:[%s3178] sm:$0xff]
      %v3180 = vld [vmem:[%s3178 + $0x8] sm:$0xff]
      %v3181 = vld [vmem:[%s3178 + $0x10] sm:$0xff]
      %v3182 = vld [vmem:[%s3178 + $0x18] sm:$0xff]
      %v3183 = vld [vmem:[%s3178 + $0x20] sm:$0xff]
      %v3184 = vld [vmem:[%s3178 + $0x28] sm:$0xff]
      %v3185 = vld [vmem:[%s3178 + $0x30] sm:$0xff]
      %v3186 = vld [vmem:[%s3178 + $0x38] sm:$0xff]
      %v3187 = vld [vmem:[%s3178 + $0x40] sm:$0xff]
      %v3188 = vld [vmem:[%s3178 + $0x48] sm:$0xff]
      %v3189 = vld [vmem:[%s3178 + $0x50] sm:$0xff]
      %v3190 = vld [vmem:[%s3178 + $0x58] sm:$0xff]
      %v3191 = vld [vmem:[%s3178 + $0x60] sm:$0xff]
      %v3192 = vld [vmem:[%s3178 + $0x68] sm:$0xff]
      %v3193 = vld [vmem:[%s3178 + $0x70] sm:$0xff]
      %v3194 = vld [vmem:[%s3178 + $0x78] sm:$0xff]
      %v3195 = vld [vmem:[%s3178 + $0x80] sm:$0xff]
      %v3196 = vld [vmem:[%s3178 + $0x88] sm:$0xff]
      %v3197 = vld [vmem:[%s3178 + $0x90] sm:$0xff]
      %v3198 = vld [vmem:[%s3178 + $0x98] sm:$0xff]
      %v3199 = vld [vmem:[%s3178 + $0xa0] sm:$0xff]
      %v3200 = vld [vmem:[%s3178 + $0xa8] sm:$0xff]
      %v3201 = vld [vmem:[%s3178 + $0xb0] sm:$0xff]
      %v3202 = vld [vmem:[%s3178 + $0xb8] sm:$0xff]
      %v3203 = vld [vmem:[%s3178 + $0xc0] sm:$0xff]
      %v3204 = vld [vmem:[%s3178 + $0xc8] sm:$0xff]
      %v3205 = vld [vmem:[%s3178 + $0xd0] sm:$0xff]
      %v3206 = vld [vmem:[%s3178 + $0xd8] sm:$0xff]
      %v3207 = vld [vmem:[%s3178 + $0xe0] sm:$0xff]
      %v3208 = vld [vmem:[%s3178 + $0xe8] sm:$0xff]
      %v3209 = vld [vmem:[%s3178 + $0xf0] sm:$0xff]
      %v3210 = vld [vmem:[%s3178 + $0xf8] sm:$0xff]
      %s3211 = scalar_lea.vmem %s1, 1280
      %v3212 = vld [vmem:[%s3211] sm:$0xff]
      %v3213 = vld [vmem:[%s3211 + $0x8] sm:$0xff]
      %v3214 = vld [vmem:[%s3211 + $0x10] sm:$0xff]
      %v3215 = vld [vmem:[%s3211 + $0x18] sm:$0xff]
      %v3216 = vld [vmem:[%s3211 + $0x20] sm:$0xff]
      %v3217 = vld [vmem:[%s3211 + $0x28] sm:$0xff]
      %v3218 = vld [vmem:[%s3211 + $0x30] sm:$0xff]
      %v3219 = vld [vmem:[%s3211 + $0x38] sm:$0xff]
      %v3220 = vld [vmem:[%s3211 + $0x40] sm:$0xff]
      %v3221 = vld [vmem:[%s3211 + $0x48] sm:$0xff]
      %v3222 = vld [vmem:[%s3211 + $0x50] sm:$0xff]
      %v3223 = vld [vmem:[%s3211 + $0x58] sm:$0xff]
      %v3224 = vld [vmem:[%s3211 + $0x60] sm:$0xff]
      %v3225 = vld [vmem:[%s3211 + $0x68] sm:$0xff]
      %v3226 = vld [vmem:[%s3211 + $0x70] sm:$0xff]
      %v3227 = vld [vmem:[%s3211 + $0x78] sm:$0xff]
      %3228 = vmatprep.subr.mxu0 0.0
      %3229 = vmatpush1.msra.mxu0 %v3212
      %3230 = vmatprep.subr.mxu0 0.0
      %3231 = vmatpush1.msra.mxu0 %v3213
      %3232 = vmatprep.subr.mxu0 0.0
      %3233 = vmatpush1.msra.mxu0 %v3214
      %3234 = vmatprep.subr.mxu0 0.0
      %3235 = vmatpush1.msra.mxu0 %v3215
      %3236 = vmatprep.subr.mxu0 0.0
      %3237 = vmatpush1.msra.mxu0 %v3216
      %3238 = vmatprep.subr.mxu0 0.0
      %3239 = vmatpush1.msra.mxu0 %v3217
      %3240 = vmatprep.subr.mxu0 0.0
      %3241 = vmatpush1.msra.mxu0 %v3218
      %3242 = vmatprep.subr.mxu0 0.0
      %3243 = vmatpush1.msra.mxu0 %v3219
      %3244 = vmatprep.subr.mxu0 0.0
      %3245 = vmatpush1.msra.mxu0 %v3220
      %3246 = vmatprep.subr.mxu0 0.0
      %3247 = vmatpush1.msra.mxu0 %v3221
      %3248 = vmatprep.subr.mxu0 0.0
      %3249 = vmatpush1.msra.mxu0 %v3222
      %3250 = vmatprep.subr.mxu0 0.0
      %3251 = vmatpush1.msra.mxu0 %v3223
      %3252 = vmatprep.subr.mxu0 0.0
      %3253 = vmatpush1.msra.mxu0 %v3224
      %3254 = vmatprep.subr.mxu0 0.0
      %3255 = vmatpush1.msra.mxu0 %v3225
      %3256 = vmatprep.subr.mxu0 0.0
      %3257 = vmatpush1.msra.mxu0 %v3226
      %3258 = vmatprep.subr.mxu0 0.0
      %3259 = vmatpush1.msra.mxu0 %v3227
      %3260 = vmatprep.subr.mxu0 0.0
      %3261 = vmatpush1.msra.mxu0 0.0
      %3262 = vmatprep.subr.mxu0 0.0
      %3263 = vmatpush1.msra.mxu0 0.0
      %3264 = vmatprep.subr.mxu0 0.0
      %3265 = vmatpush1.msra.mxu0 0.0
      %3266 = vmatprep.subr.mxu0 0.0
      %3267 = vmatpush1.msra.mxu0 0.0
      %3268 = vmatprep.subr.mxu0 0.0
      %3269 = vmatpush1.msra.mxu0 0.0
      %3270 = vmatprep.subr.mxu0 0.0
      %3271 = vmatpush1.msra.mxu0 0.0
      %3272 = vmatprep.subr.mxu0 0.0
      %3273 = vmatpush1.msra.mxu0 0.0
      %3274 = vmatprep.subr.mxu0 0.0
      %3275 = vmatpush1.msra.mxu0 0.0
      %3276 = vmatprep.subr.mxu0 0.0
      %3277 = vmatpush1.msra.mxu0 0.0
      %3278 = vmatprep.subr.mxu0 0.0
      %3279 = vmatpush1.msra.mxu0 0.0
      %3280 = vmatprep.subr.mxu0 0.0
      %3281 = vmatpush1.msra.mxu0 0.0
      %3282 = vmatprep.subr.mxu0 0.0
      %3283 = vmatpush1.msra.mxu0 0.0
      %3284 = vmatprep.subr.mxu0 0.0
      %3285 = vmatpush1.msra.mxu0 0.0
      %3286 = vmatprep.subr.mxu0 0.0
      %3287 = vmatpush1.msra.mxu0 0.0
      %3288 = vmatprep.subr.mxu0 0.0
      %3289 = vmatpush1.msra.mxu0 0.0
      %3290 = vmatprep.subr.mxu0 0.0
      %3291 = vmatpush1.msra.mxu0 0.0
      %3292 = vmatprep.mubr.f32.mxu0 0.0
      %3293 = vmatmul.mubr.f32.gmra.mrb[0].mxu0 %v3179
      %v3294 = vpop.f32.mrb[0].mxu0
      %v3295 = vadd.f32 0.0, %v3294
      %v3296 = vpop.f32.mrb[0].mxu0
      %3297 = vmatprep.mubr.f32.mxu0 0.0
      %3298 = vmatmul.mubr.f32.gmra.mrb[0].mxu0 %v3180
      %v3299 = vpop.f32.mrb[0].mxu0
      %v3300 = vadd.f32 0.0, %v3299
      %v3301 = vpop.f32.mrb[0].mxu0
      %3302 = vmatprep.mubr.f32.mxu0 0.0
      %3303 = vmatmul.mubr.f32.gmra.mrb[0].mxu0 %v3181
      %v3304 = vpop.f32.mrb[0].mxu0
      %v3305 = vadd.f32 0.0, %v3304
      %v3306 = vpop.f32.mrb[0].mxu0
      %3307 = vmatprep.mubr.f32.mxu0 0.0
      %3308 = vmatmul.mubr.f32.gmra.mrb[0].mxu0 %v3182
      %v3309 = vpop.f32.mrb[0].mxu0
      %v3310 = vadd.f32 0.0, %v3309
      %v3311 = vpop.f32.mrb[0].mxu0
      %3312 = vmatprep.mubr.f32.mxu0 0.0
      %3313 = vmatmul.mubr.f32.gmra.mrb[0].mxu0 %v3183
      %v3314 = vpop.f32.mrb[0].mxu0
      %v3315 = vadd.f32 0.0, %v3314
      %v3316 = vpop.f32.mrb[0].mxu0
      %3317 = vmatprep.mubr.f32.mxu0 0.0
      %3318 = vmatmul.mubr.f32.gmra.mrb[0].mxu0 %v3184
      %v3319 = vpop.f32.mrb[0].mxu0
      %v3320 = vadd.f32 0.0, %v3319
      %v3321 = vpop.f32.mrb[0].mxu0
      %3322 = vmatprep.mubr.f32.mxu0 0.0
      %3323 = vmatmul.mubr.f32.gmra.mrb[0].mxu0 %v3185
      %v3324 = vpop.f32.mrb[0].mxu0
      %v3325 = vadd.f32 0.0, %v3324
      %v3326 = vpop.f32.mrb[0].mxu0
      %3327 = vmatprep.mubr.f32.mxu0 0.0
      %3328 = vmatmul.mubr.f32.gmra.mrb[0].mxu0 %v3186
      %v3329 = vpop.f32.mrb[0].mxu0
      %v3330 = vadd.f32 0.0, %v3329
      %v3331 = vpop.f32.mrb[0].mxu0
      %3332 = vmatprep.mubr.f32.mxu0 0.0
      %3333 = vmatmul.mubr.f32.gmra.mrb[0].mxu0 %v3187
      %v3334 = vpop.f32.mrb[0].mxu0
      %v3335 = vadd.f32 0.0, %v3334
      %v3336 = vpop.f32.mrb[0].mxu0
      %3337 = vmatprep.mubr.f32.mxu0 0.0
      %3338 = vmatmul.mubr.f32.gmra.mrb[0].mxu0 %v3188
      %v3339 = vpop.f32.mrb[0].mxu0
      %v3340 = vadd.f32 0.0, %v3339
      %v3341 = vpop.f32.mrb[0].mxu0
      %3342 = vmatprep.mubr.f32.mxu0 0.0
      %3343 = vmatmul.mubr.f32.gmra.mrb[0].mxu0 %v3189
      %v3344 = vpop.f32.mrb[0].mxu0
      %v3345 = vadd.f32 0.0, %v3344
      %v3346 = vpop.f32.mrb[0].mxu0
      %3347 = vmatprep.mubr.f32.mxu0 0.0
      %3348 = vmatmul.mubr.f32.gmra.mrb[0].mxu0 %v3190
      %v3349 = vpop.f32.mrb[0].mxu0
      %v3350 = vadd.f32 0.0, %v3349
      %v3351 = vpop.f32.mrb[0].mxu0
      %3352 = vmatprep.mubr.f32.mxu0 0.0
      %3353 = vmatmul.mubr.f32.gmra.mrb[0].mxu0 %v3191
      %v3354 = vpop.f32.mrb[0].mxu0
      %v3355 = vadd.f32 0.0, %v3354
      %v3356 = vpop.f32.mrb[0].mxu0
      %3357 = vmatprep.mubr.f32.mxu0 0.0
      %3358 = vmatmul.mubr.f32.gmra.mrb[0].mxu0 %v3192
      %v3359 = vpop.f32.mrb[0].mxu0
      %v3360 = vadd.f32 0.0, %v3359
      %v3361 = vpop.f32.mrb[0].mxu0
      %3362 = vmatprep.mubr.f32.mxu0 0.0
      %3363 = vmatmul.mubr.f32.gmra.mrb[0].mxu0 %v3193
      %v3364 = vpop.f32.mrb[0].mxu0
      %v3365 = vadd.f32 0.0, %v3364
      %v3366 = vpop.f32.mrb[0].mxu0
      %3367 = vmatprep.mubr.f32.mxu0 0.0
      %3368 = vmatmul.mubr.f32.gmra.mrb[0].mxu0 %v3194
      %v3369 = vpop.f32.mrb[0].mxu0
      %v3370 = vadd.f32 0.0, %v3369
      %v3371 = vpop.f32.mrb[0].mxu0
      %3372 = vmatprep.mubr.f32.mxu0 0.0
      %3373 = vmatmul.mubr.f32.gmra.mrb[0].mxu0 %v3195
      %v3374 = vpop.f32.mrb[0].mxu0
      %v3375 = vadd.f32 0.0, %v3374
      %v3376 = vpop.f32.mrb[0].mxu0
      %3377 = vmatprep.mubr.f32.mxu0 0.0
      %3378 = vmatmul.mubr.f32.gmra.mrb[0].mxu0 %v3196
      %v3379 = vpop.f32.mrb[0].mxu0
      %v3380 = vadd.f32 0.0, %v3379
      %v3381 = vpop.f32.mrb[0].mxu0
      %3382 = vmatprep.mubr.f32.mxu0 0.0
      %3383 = vmatmul.mubr.f32.gmra.mrb[0].mxu0 %v3197
      %v3384 = vpop.f32.mrb[0].mxu0
      %v3385 = vadd.f32 0.0, %v3384
      %v3386 = vpop.f32.mrb[0].mxu0
      %3387 = vmatprep.mubr.f32.mxu0 0.0
      %3388 = vmatmul.mubr.f32.gmra.mrb[0].mxu0 %v3198
      %v3389 = vpop.f32.mrb[0].mxu0
      %v3390 = vadd.f32 0.0, %v3389
      %v3391 = vpop.f32.mrb[0].mxu0
      %3392 = vmatprep.mubr.f32.mxu0 0.0
      %3393 = vmatmul.mubr.f32.gmra.mrb[0].mxu0 %v3199
      %v3394 = vpop.f32.mrb[0].mxu0
      %v3395 = vadd.f32 0.0, %v3394
      %v3396 = vpop.f32.mrb[0].mxu0
      %3397 = vmatprep.mubr.f32.mxu0 0.0
      %3398 = vmatmul.mubr.f32.gmra.mrb[0].mxu0 %v3200
      %v3399 = vpop.f32.mrb[0].mxu0
      %v3400 = vadd.f32 0.0, %v3399
      %v3401 = vpop.f32.mrb[0].mxu0
      %3402 = vmatprep.mubr.f32.mxu0 0.0
      %3403 = vmatmul.mubr.f32.gmra.mrb[0].mxu0 %v3201
      %v3404 = vpop.f32.mrb[0].mxu0
      %v3405 = vadd.f32 0.0, %v3404
      %v3406 = vpop.f32.mrb[0].mxu0
      %3407 = vmatprep.mubr.f32.mxu0 0.0
      %3408 = vmatmul.mubr.f32.gmra.mrb[0].mxu0 %v3202
      %v3409 = vpop.f32.mrb[0].mxu0
      %v3410 = vadd.f32 0.0, %v3409
      %v3411 = vpop.f32.mrb[0].mxu0
      %3412 = vmatprep.mubr.f32.mxu0 0.0
      %3413 = vmatmul.mubr.f32.gmra.mrb[0].mxu0 %v3203
      %v3414 = vpop.f32.mrb[0].mxu0
      %v3415 = vadd.f32 0.0, %v3414
      %v3416 = vpop.f32.mrb[0].mxu0
      %3417 = vmatprep.mubr.f32.mxu0 0.0
      %3418 = vmatmul.mubr.f32.gmra.mrb[0].mxu0 %v3204
      %v3419 = vpop.f32.mrb[0].mxu0
      %v3420 = vadd.f32 0.0, %v3419
      %v3421 = vpop.f32.mrb[0].mxu0
      %3422 = vmatprep.mubr.f32.mxu0 0.0
      %3423 = vmatmul.mubr.f32.gmra.mrb[0].mxu0 %v3205
      %v3424 = vpop.f32.mrb[0].mxu0
      %v3425 = vadd.f32 0.0, %v3424
      %v3426 = vpop.f32.mrb[0].mxu0
      %3427 = vmatprep.mubr.f32.mxu0 0.0
      %3428 = vmatmul.mubr.f32.gmra.mrb[0].mxu0 %v3206
      %v3429 = vpop.f32.mrb[0].mxu0
      %v3430 = vadd.f32 0.0, %v3429
      %v3431 = vpop.f32.mrb[0].mxu0
      %3432 = vmatprep.mubr.f32.mxu0 0.0
      %3433 = vmatmul.mubr.f32.gmra.mrb[0].mxu0 %v3207
      %v3434 = vpop.f32.mrb[0].mxu0
      %v3435 = vadd.f32 0.0, %v3434
      %v3436 = vpop.f32.mrb[0].mxu0
      %3437 = vmatprep.mubr.f32.mxu0 0.0
      %3438 = vmatmul.mubr.f32.gmra.mrb[0].mxu0 %v3208
      %v3439 = vpop.f32.mrb[0].mxu0
      %v3440 = vadd.f32 0.0, %v3439
      %v3441 = vpop.f32.mrb[0].mxu0
      %3442 = vmatprep.mubr.f32.mxu0 0.0
      %3443 = vmatmul.mubr.f32.gmra.mrb[0].mxu0 %v3209
      %v3444 = vpop.f32.mrb[0].mxu0
      %v3445 = vadd.f32 0.0, %v3444
      %v3446 = vpop.f32.mrb[0].mxu0
      %3447 = vmatprep.mubr.f32.mxu0 0.0
      %3448 = vmatmul.mubr.f32.gmra.mrb[0].mxu0 %v3210
      %v3449 = vpop.f32.mrb[0].mxu0
      %v3450 = vadd.f32 0.0, %v3449
      %v3451 = vpop.f32.mrb[0].mxu0
      %3452 = vdwg.mxu0
      %v3453 = vadd.f32 %v3020, %v3295
      %v3454 = vadd.f32 %v3025, %v3300
      %v3455 = vadd.f32 %v3030, %v3305
      %v3456 = vadd.f32 %v3035, %v3310
      %v3457 = vadd.f32 %v3040, %v3315
      %v3458 = vadd.f32 %v3045, %v3320
      %v3459 = vadd.f32 %v3050, %v3325
      %v3460 = vadd.f32 %v3055, %v3330
      %v3461 = vadd.f32 %v3060, %v3335
      %v3462 = vadd.f32 %v3065, %v3340
      %v3463 = vadd.f32 %v3070, %v3345
      %v3464 = vadd.f32 %v3075, %v3350
      %v3465 = vadd.f32 %v3080, %v3355
      %v3466 = vadd.f32 %v3085, %v3360
      %v3467 = vadd.f32 %v3090, %v3365
      %v3468 = vadd.f32 %v3095, %v3370
      %v3469 = vadd.f32 %v3100, %v3375
      %v3470 = vadd.f32 %v3105, %v3380
      %v3471 = vadd.f32 %v3110, %v3385
      %v3472 = vadd.f32 %v3115, %v3390
      %v3473 = vadd.f32 %v3120, %v3395
      %v3474 = vadd.f32 %v3125, %v3400
      %v3475 = vadd.f32 %v3130, %v3405
      %v3476 = vadd.f32 %v3135, %v3410
      %v3477 = vadd.f32 %v3140, %v3415
      %v3478 = vadd.f32 %v3145, %v3420
      %v3479 = vadd.f32 %v3150, %v3425
      %v3480 = vadd.f32 %v3155, %v3430
      %v3481 = vadd.f32 %v3160, %v3435
      %v3482 = vadd.f32 %v3165, %v3440
      %v3483 = vadd.f32 %v3170, %v3445
      %v3484 = vadd.f32 %v3175, %v3450
      %s3485 = scalar_lea.vmem %s165, 320
      %v3486 = vld [vmem:[%s3485] sm:$0xff]
      %v3487 = vld [vmem:[%s3485 + $0x8] sm:$0xff]
      %v3488 = vld [vmem:[%s3485 + $0x10] sm:$0xff]
      %v3489 = vld [vmem:[%s3485 + $0x18] sm:$0xff]
      %v3490 = vld [vmem:[%s3485 + $0x20] sm:$0xff]
      %v3491 = vld [vmem:[%s3485 + $0x28] sm:$0xff]
      %v3492 = vld [vmem:[%s3485 + $0x30] sm:$0xff]
      %v3493 = vld [vmem:[%s3485 + $0x38] sm:$0xff]
      %v3494 = vld [vmem:[%s3485 + $0x40] sm:$0xff]
      %v3495 = vld [vmem:[%s3485 + $0x48] sm:$0xff]
      %v3496 = vld [vmem:[%s3485 + $0x50] sm:$0xff]
      %v3497 = vld [vmem:[%s3485 + $0x58] sm:$0xff]
      %v3498 = vld [vmem:[%s3485 + $0x60] sm:$0xff]
      %v3499 = vld [vmem:[%s3485 + $0x68] sm:$0xff]
      %v3500 = vld [vmem:[%s3485 + $0x70] sm:$0xff]
      %v3501 = vld [vmem:[%s3485 + $0x78] sm:$0xff]
      %v3502 = vld [vmem:[%s3485 + $0x80] sm:$0xff]
      %v3503 = vld [vmem:[%s3485 + $0x88] sm:$0xff]
      %v3504 = vld [vmem:[%s3485 + $0x90] sm:$0xff]
      %v3505 = vld [vmem:[%s3485 + $0x98] sm:$0xff]
      %v3506 = vld [vmem:[%s3485 + $0xa0] sm:$0xff]
      %v3507 = vld [vmem:[%s3485 + $0xa8] sm:$0xff]
      %v3508 = vld [vmem:[%s3485 + $0xb0] sm:$0xff]
      %v3509 = vld [vmem:[%s3485 + $0xb8] sm:$0xff]
      %v3510 = vld [vmem:[%s3485 + $0xc0] sm:$0xff]
      %v3511 = vld [vmem:[%s3485 + $0xc8] sm:$0xff]
      %v3512 = vld [vmem:[%s3485 + $0xd0] sm:$0xff]
      %v3513 = vld [vmem:[%s3485 + $0xd8] sm:$0xff]
      %v3514 = vld [vmem:[%s3485 + $0xe0] sm:$0xff]
      %v3515 = vld [vmem:[%s3485 + $0xe8] sm:$0xff]
      %v3516 = vld [vmem:[%s3485 + $0xf0] sm:$0xff]
      %v3517 = vld [vmem:[%s3485 + $0xf8] sm:$0xff]
      %s3518 = scalar_lea.vmem %s1, 1408
      %v3519 = vld [vmem:[%s3518] sm:$0xff]
      %v3520 = vld [vmem:[%s3518 + $0x8] sm:$0xff]
      %v3521 = vld [vmem:[%s3518 + $0x10] sm:$0xff]
      %v3522 = vld [vmem:[%s3518 + $0x18] sm:$0xff]
      %v3523 = vld [vmem:[%s3518 + $0x20] sm:$0xff]
      %v3524 = vld [vmem:[%s3518 + $0x28] sm:$0xff]
      %v3525 = vld [vmem:[%s3518 + $0x30] sm:$0xff]
      %v3526 = vld [vmem:[%s3518 + $0x38] sm:$0xff]
      %v3527 = vld [vmem:[%s3518 + $0x40] sm:$0xff]
      %v3528 = vld [vmem:[%s3518 + $0x48] sm:$0xff]
      %v3529 = vld [vmem:[%s3518 + $0x50] sm:$0xff]
      %v3530 = vld [vmem:[%s3518 + $0x58] sm:$0xff]
      %v3531 = vld [vmem:[%s3518 + $0x60] sm:$0xff]
      %v3532 = vld [vmem:[%s3518 + $0x68] sm:$0xff]
      %v3533 = vld [vmem:[%s3518 + $0x70] sm:$0xff]
      %v3534 = vld [vmem:[%s3518 + $0x78] sm:$0xff]
      %3535 = vmatprep.subr.mxu0 0.0
      %3536 = vmatpush1.msra.mxu0 %v3519
      %3537 = vmatprep.subr.mxu0 0.0
      %3538 = vmatpush1.msra.mxu0 %v3520
      %3539 = vmatprep.subr.mxu0 0.0
      %3540 = vmatpush1.msra.mxu0 %v3521
      %3541 = vmatprep.subr.mxu0 0.0
      %3542 = vmatpush1.msra.mxu0 %v3522
      %3543 = vmatprep.subr.mxu0 0.0
      %3544 = vmatpush1.msra.mxu0 %v3523
      %3545 = vmatprep.subr.mxu0 0.0
      %3546 = vmatpush1.msra.mxu0 %v3524
      %3547 = vmatprep.subr.mxu0 0.0
      %3548 = vmatpush1.msra.mxu0 %v3525
      %3549 = vmatprep.subr.mxu0 0.0
      %3550 = vmatpush1.msra.mxu0 %v3526
      %3551 = vmatprep.subr.mxu0 0.0
      %3552 = vmatpush1.msra.mxu0 %v3527
      %3553 = vmatprep.subr.mxu0 0.0
      %3554 = vmatpush1.msra.mxu0 %v3528
      %3555 = vmatprep.subr.mxu0 0.0
      %3556 = vmatpush1.msra.mxu0 %v3529
      %3557 = vmatprep.subr.mxu0 0.0
      %3558 = vmatpush1.msra.mxu0 %v3530
      %3559 = vmatprep.subr.mxu0 0.0
      %3560 = vmatpush1.msra.mxu0 %v3531
      %3561 = vmatprep.subr.mxu0 0.0
      %3562 = vmatpush1.msra.mxu0 %v3532
      %3563 = vmatprep.subr.mxu0 0.0
      %3564 = vmatpush1.msra.mxu0 %v3533
      %3565 = vmatprep.subr.mxu0 0.0
      %3566 = vmatpush1.msra.mxu0 %v3534
      %3567 = vmatprep.subr.mxu0 0.0
      %3568 = vmatpush1.msra.mxu0 0.0
      %3569 = vmatprep.subr.mxu0 0.0
      %3570 = vmatpush1.msra.mxu0 0.0
      %3571 = vmatprep.subr.mxu0 0.0
      %3572 = vmatpush1.msra.mxu0 0.0
      %3573 = vmatprep.subr.mxu0 0.0
      %3574 = vmatpush1.msra.mxu0 0.0
      %3575 = vmatprep.subr.mxu0 0.0
      %3576 = vmatpush1.msra.mxu0 0.0
      %3577 = vmatprep.subr.mxu0 0.0
      %3578 = vmatpush1.msra.mxu0 0.0
      %3579 = vmatprep.subr.mxu0 0.0
      %3580 = vmatpush1.msra.mxu0 0.0
      %3581 = vmatprep.subr.mxu0 0.0
      %3582 = vmatpush1.msra.mxu0 0.0
      %3583 = vmatprep.subr.mxu0 0.0
      %3584 = vmatpush1.msra.mxu0 0.0
      %3585 = vmatprep.subr.mxu0 0.0
      %3586 = vmatpush1.msra.mxu0 0.0
      %3587 = vmatprep.subr.mxu0 0.0
      %3588 = vmatpush1.msra.mxu0 0.0
      %3589 = vmatprep.subr.mxu0 0.0
      %3590 = vmatpush1.msra.mxu0 0.0
      %3591 = vmatprep.subr.mxu0 0.0
      %3592 = vmatpush1.msra.mxu0 0.0
      %3593 = vmatprep.subr.mxu0 0.0
      %3594 = vmatpush1.msra.mxu0 0.0
      %3595 = vmatprep.subr.mxu0 0.0
      %3596 = vmatpush1.msra.mxu0 0.0
      %3597 = vmatprep.subr.mxu0 0.0
      %3598 = vmatpush1.msra.mxu0 0.0
      %3599 = vmatprep.mubr.f32.mxu0 0.0
      %3600 = vmatmul.mubr.f32.gmra.mrb[0].mxu0 %v3486
      %v3601 = vpop.f32.mrb[0].mxu0
      %v3602 = vadd.f32 0.0, %v3601
      %v3603 = vpop.f32.mrb[0].mxu0
      %3604 = vmatprep.mubr.f32.mxu0 0.0
      %3605 = vmatmul.mubr.f32.gmra.mrb[0].mxu0 %v3487
      %v3606 = vpop.f32.mrb[0].mxu0
      %v3607 = vadd.f32 0.0, %v3606
      %v3608 = vpop.f32.mrb[0].mxu0
      %3609 = vmatprep.mubr.f32.mxu0 0.0
      %3610 = vmatmul.mubr.f32.gmra.mrb[0].mxu0 %v3488
      %v3611 = vpop.f32.mrb[0].mxu0
      %v3612 = vadd.f32 0.0, %v3611
      %v3613 = vpop.f32.mrb[0].mxu0
      %3614 = vmatprep.mubr.f32.mxu0 0.0
      %3615 = vmatmul.mubr.f32.gmra.mrb[0].mxu0 %v3489
      %v3616 = vpop.f32.mrb[0].mxu0
      %v3617 = vadd.f32 0.0, %v3616
      %v3618 = vpop.f32.mrb[0].mxu0
      %3619 = vmatprep.mubr.f32.mxu0 0.0
      %3620 = vmatmul.mubr.f32.gmra.mrb[0].mxu0 %v3490
      %v3621 = vpop.f32.mrb[0].mxu0
      %v3622 = vadd.f32 0.0, %v3621
      %v3623 = vpop.f32.mrb[0].mxu0
      %3624 = vmatprep.mubr.f32.mxu0 0.0
      %3625 = vmatmul.mubr.f32.gmra.mrb[0].mxu0 %v3491
      %v3626 = vpop.f32.mrb[0].mxu0
      %v3627 = vadd.f32 0.0, %v3626
      %v3628 = vpop.f32.mrb[0].mxu0
      %3629 = vmatprep.mubr.f32.mxu0 0.0
      %3630 = vmatmul.mubr.f32.gmra.mrb[0].mxu0 %v3492
      %v3631 = vpop.f32.mrb[0].mxu0
      %v3632 = vadd.f32 0.0, %v3631
      %v3633 = vpop.f32.mrb[0].mxu0
      %3634 = vmatprep.mubr.f32.mxu0 0.0
      %3635 = vmatmul.mubr.f32.gmra.mrb[0].mxu0 %v3493
      %v3636 = vpop.f32.mrb[0].mxu0
      %v3637 = vadd.f32 0.0, %v3636
      %v3638 = vpop.f32.mrb[0].mxu0
      %3639 = vmatprep.mubr.f32.mxu0 0.0
      %3640 = vmatmul.mubr.f32.gmra.mrb[0].mxu0 %v3494
      %v3641 = vpop.f32.mrb[0].mxu0
      %v3642 = vadd.f32 0.0, %v3641
      %v3643 = vpop.f32.mrb[0].mxu0
      %3644 = vmatprep.mubr.f32.mxu0 0.0
      %3645 = vmatmul.mubr.f32.gmra.mrb[0].mxu0 %v3495
      %v3646 = vpop.f32.mrb[0].mxu0
      %v3647 = vadd.f32 0.0, %v3646
      %v3648 = vpop.f32.mrb[0].mxu0
      %3649 = vmatprep.mubr.f32.mxu0 0.0
      %3650 = vmatmul.mubr.f32.gmra.mrb[0].mxu0 %v3496
      %v3651 = vpop.f32.mrb[0].mxu0
      %v3652 = vadd.f32 0.0, %v3651
      %v3653 = vpop.f32.mrb[0].mxu0
      %3654 = vmatprep.mubr.f32.mxu0 0.0
      %3655 = vmatmul.mubr.f32.gmra.mrb[0].mxu0 %v3497
      %v3656 = vpop.f32.mrb[0].mxu0
      %v3657 = vadd.f32 0.0, %v3656
      %v3658 = vpop.f32.mrb[0].mxu0
      %3659 = vmatprep.mubr.f32.mxu0 0.0
      %3660 = vmatmul.mubr.f32.gmra.mrb[0].mxu0 %v3498
      %v3661 = vpop.f32.mrb[0].mxu0
      %v3662 = vadd.f32 0.0, %v3661
      %v3663 = vpop.f32.mrb[0].mxu0
      %3664 = vmatprep.mubr.f32.mxu0 0.0
      %3665 = vmatmul.mubr.f32.gmra.mrb[0].mxu0 %v3499
      %v3666 = vpop.f32.mrb[0].mxu0
      %v3667 = vadd.f32 0.0, %v3666
      %v3668 = vpop.f32.mrb[0].mxu0
      %3669 = vmatprep.mubr.f32.mxu0 0.0
      %3670 = vmatmul.mubr.f32.gmra.mrb[0].mxu0 %v3500
      %v3671 = vpop.f32.mrb[0].mxu0
      %v3672 = vadd.f32 0.0, %v3671
      %v3673 = vpop.f32.mrb[0].mxu0
      %3674 = vmatprep.mubr.f32.mxu0 0.0
      %3675 = vmatmul.mubr.f32.gmra.mrb[0].mxu0 %v3501
      %v3676 = vpop.f32.mrb[0].mxu0
      %v3677 = vadd.f32 0.0, %v3676
      %v3678 = vpop.f32.mrb[0].mxu0
      %3679 = vmatprep.mubr.f32.mxu0 0.0
      %3680 = vmatmul.mubr.f32.gmra.mrb[0].mxu0 %v3502
      %v3681 = vpop.f32.mrb[0].mxu0
      %v3682 = vadd.f32 0.0, %v3681
      %v3683 = vpop.f32.mrb[0].mxu0
      %3684 = vmatprep.mubr.f32.mxu0 0.0
      %3685 = vmatmul.mubr.f32.gmra.mrb[0].mxu0 %v3503
      %v3686 = vpop.f32.mrb[0].mxu0
      %v3687 = vadd.f32 0.0, %v3686
      %v3688 = vpop.f32.mrb[0].mxu0
      %3689 = vmatprep.mubr.f32.mxu0 0.0
      %3690 = vmatmul.mubr.f32.gmra.mrb[0].mxu0 %v3504
      %v3691 = vpop.f32.mrb[0].mxu0
      %v3692 = vadd.f32 0.0, %v3691
      %v3693 = vpop.f32.mrb[0].mxu0
      %3694 = vmatprep.mubr.f32.mxu0 0.0
      %3695 = vmatmul.mubr.f32.gmra.mrb[0].mxu0 %v3505
      %v3696 = vpop.f32.mrb[0].mxu0
      %v3697 = vadd.f32 0.0, %v3696
      %v3698 = vpop.f32.mrb[0].mxu0
      %3699 = vmatprep.mubr.f32.mxu0 0.0
      %3700 = vmatmul.mubr.f32.gmra.mrb[0].mxu0 %v3506
      %v3701 = vpop.f32.mrb[0].mxu0
      %v3702 = vadd.f32 0.0, %v3701
      %v3703 = vpop.f32.mrb[0].mxu0
      %3704 = vmatprep.mubr.f32.mxu0 0.0
      %3705 = vmatmul.mubr.f32.gmra.mrb[0].mxu0 %v3507
      %v3706 = vpop.f32.mrb[0].mxu0
      %v3707 = vadd.f32 0.0, %v3706
      %v3708 = vpop.f32.mrb[0].mxu0
      %3709 = vmatprep.mubr.f32.mxu0 0.0
      %3710 = vmatmul.mubr.f32.gmra.mrb[0].mxu0 %v3508
      %v3711 = vpop.f32.mrb[0].mxu0
      %v3712 = vadd.f32 0.0, %v3711
      %v3713 = vpop.f32.mrb[0].mxu0
      %3714 = vmatprep.mubr.f32.mxu0 0.0
      %3715 = vmatmul.mubr.f32.gmra.mrb[0].mxu0 %v3509
      %v3716 = vpop.f32.mrb[0].mxu0
      %v3717 = vadd.f32 0.0, %v3716
      %v3718 = vpop.f32.mrb[0].mxu0
      %3719 = vmatprep.mubr.f32.mxu0 0.0
      %3720 = vmatmul.mubr.f32.gmra.mrb[0].mxu0 %v3510
      %v3721 = vpop.f32.mrb[0].mxu0
      %v3722 = vadd.f32 0.0, %v3721
      %v3723 = vpop.f32.mrb[0].mxu0
      %3724 = vmatprep.mubr.f32.mxu0 0.0
      %3725 = vmatmul.mubr.f32.gmra.mrb[0].mxu0 %v3511
      %v3726 = vpop.f32.mrb[0].mxu0
      %v3727 = vadd.f32 0.0, %v3726
      %v3728 = vpop.f32.mrb[0].mxu0
      %3729 = vmatprep.mubr.f32.mxu0 0.0
      %3730 = vmatmul.mubr.f32.gmra.mrb[0].mxu0 %v3512
      %v3731 = vpop.f32.mrb[0].mxu0
      %v3732 = vadd.f32 0.0, %v3731
      %v3733 = vpop.f32.mrb[0].mxu0
      %3734 = vmatprep.mubr.f32.mxu0 0.0
      %3735 = vmatmul.mubr.f32.gmra.mrb[0].mxu0 %v3513
      %v3736 = vpop.f32.mrb[0].mxu0
      %v3737 = vadd.f32 0.0, %v3736
      %v3738 = vpop.f32.mrb[0].mxu0
      %3739 = vmatprep.mubr.f32.mxu0 0.0
      %3740 = vmatmul.mubr.f32.gmra.mrb[0].mxu0 %v3514
      %v3741 = vpop.f32.mrb[0].mxu0
      %v3742 = vadd.f32 0.0, %v3741
      %v3743 = vpop.f32.mrb[0].mxu0
      %3744 = vmatprep.mubr.f32.mxu0 0.0
      %3745 = vmatmul.mubr.f32.gmra.mrb[0].mxu0 %v3515
      %v3746 = vpop.f32.mrb[0].mxu0
      %v3747 = vadd.f32 0.0, %v3746
      %v3748 = vpop.f32.mrb[0].mxu0
      %3749 = vmatprep.mubr.f32.mxu0 0.0
      %3750 = vmatmul.mubr.f32.gmra.mrb[0].mxu0 %v3516
      %v3751 = vpop.f32.mrb[0].mxu0
      %v3752 = vadd.f32 0.0, %v3751
      %v3753 = vpop.f32.mrb[0].mxu0
      %3754 = vmatprep.mubr.f32.mxu0 0.0
      %3755 = vmatmul.mubr.f32.gmra.mrb[0].mxu0 %v3517
      %v3756 = vpop.f32.mrb[0].mxu0
      %v3757 = vadd.f32 0.0, %v3756
      %v3758 = vpop.f32.mrb[0].mxu0
      %3759 = vdwg.mxu0
      %v3760 = vadd.f32 %v3453, %v3602
      %v3761 = vadd.f32 %v3454, %v3607
      %v3762 = vadd.f32 %v3455, %v3612
      %v3763 = vadd.f32 %v3456, %v3617
      %v3764 = vadd.f32 %v3457, %v3622
      %v3765 = vadd.f32 %v3458, %v3627
      %v3766 = vadd.f32 %v3459, %v3632
      %v3767 = vadd.f32 %v3460, %v3637
      %v3768 = vadd.f32 %v3461, %v3642
      %v3769 = vadd.f32 %v3462, %v3647
      %v3770 = vadd.f32 %v3463, %v3652
      %v3771 = vadd.f32 %v3464, %v3657
      %v3772 = vadd.f32 %v3465, %v3662
      %v3773 = vadd.f32 %v3466, %v3667
      %v3774 = vadd.f32 %v3467, %v3672
      %v3775 = vadd.f32 %v3468, %v3677
      %v3776 = vadd.f32 %v3469, %v3682
      %v3777 = vadd.f32 %v3470, %v3687
      %v3778 = vadd.f32 %v3471, %v3692
      %v3779 = vadd.f32 %v3472, %v3697
      %v3780 = vadd.f32 %v3473, %v3702
      %v3781 = vadd.f32 %v3474, %v3707
      %v3782 = vadd.f32 %v3475, %v3712
      %v3783 = vadd.f32 %v3476, %v3717
      %v3784 = vadd.f32 %v3477, %v3722
      %v3785 = vadd.f32 %v3478, %v3727
      %v3786 = vadd.f32 %v3479, %v3732
      %v3787 = vadd.f32 %v3480, %v3737
      %v3788 = vadd.f32 %v3481, %v3742
      %v3789 = vadd.f32 %v3482, %v3747
      %v3790 = vadd.f32 %v3483, %v3752
      %v3791 = vadd.f32 %v3484, %v3757
      %v3792 = vadd.f32 %v3760, %v1338
      %v3793 = vadd.f32 %v3761, %v1338
      %v3794 = vadd.f32 %v3762, %v1338
      %v3795 = vadd.f32 %v3763, %v1338
      %v3796 = vadd.f32 %v3764, %v1338
      %v3797 = vadd.f32 %v3765, %v1338
      %v3798 = vadd.f32 %v3766, %v1338
      %v3799 = vadd.f32 %v3767, %v1338
      %v3800 = vadd.f32 %v3768, %v1338
      %v3801 = vadd.f32 %v3769, %v1338
      %v3802 = vadd.f32 %v3770, %v1338
      %v3803 = vadd.f32 %v3771, %v1338
      %v3804 = vadd.f32 %v3772, %v1338
      %v3805 = vadd.f32 %v3773, %v1338
      %v3806 = vadd.f32 %v3774, %v1338
      %v3807 = vadd.f32 %v3775, %v1338
      %v3808 = vadd.f32 %v3776, %v1338
      %v3809 = vadd.f32 %v3777, %v1338
      %v3810 = vadd.f32 %v3778, %v1338
      %v3811 = vadd.f32 %v3779, %v1338
      %v3812 = vadd.f32 %v3780, %v1338
      %v3813 = vadd.f32 %v3781, %v1338
      %v3814 = vadd.f32 %v3782, %v1338
      %v3815 = vadd.f32 %v3783, %v1338
      %v3816 = vadd.f32 %v3784, %v1338
      %v3817 = vadd.f32 %v3785, %v1338
      %v3818 = vadd.f32 %v3786, %v1338
      %v3819 = vadd.f32 %v3787, %v1338
      %v3820 = vadd.f32 %v3788, %v1338
      %v3821 = vadd.f32 %v3789, %v1338
      %v3822 = vadd.f32 %v3790, %v1338
      %v3823 = vadd.f32 %v3791, %v1338
      %s3824 = scalar_lea.vmem %s170, 32
      %3825 = vst [vmem:[%s3824] sm:$0xff] %v3792
      %3826 = vst [vmem:[%s3824 + $0x10] sm:$0xff] %v3793
      %3827 = vst [vmem:[%s3824 + $0x40] sm:$0xff] %v3794
      %3828 = vst [vmem:[%s3824 + $0x50] sm:$0xff] %v3795
      %3829 = vst [vmem:[%s3824 + $0x80] sm:$0xff] %v3796
      %3830 = vst [vmem:[%s3824 + $0x90] sm:$0xff] %v3797
      %3831 = vst [vmem:[%s3824 + $0xc0] sm:$0xff] %v3798
      %3832 = vst [vmem:[%s3824 + $0xd0] sm:$0xff] %v3799
      %3833 = vst [vmem:[%s3824 + $0x100] sm:$0xff] %v3800
      %3834 = vst [vmem:[%s3824 + $0x110] sm:$0xff] %v3801
      %3835 = vst [vmem:[%s3824 + $0x140] sm:$0xff] %v3802
      %3836 = vst [vmem:[%s3824 + $0x150] sm:$0xff] %v3803
      %3837 = vst [vmem:[%s3824 + $0x180] sm:$0xff] %v3804
      %3838 = vst [vmem:[%s3824 + $0x190] sm:$0xff] %v3805
      %3839 = vst [vmem:[%s3824 + $0x1c0] sm:$0xff] %v3806
      %3840 = vst [vmem:[%s3824 + $0x1d0] sm:$0xff] %v3807
      %3841 = vst [vmem:[%s3824 + $0x200] sm:$0xff] %v3808
      %3842 = vst [vmem:[%s3824 + $0x210] sm:$0xff] %v3809
      %3843 = vst [vmem:[%s3824 + $0x240] sm:$0xff] %v3810
      %3844 = vst [vmem:[%s3824 + $0x250] sm:$0xff] %v3811
      %3845 = vst [vmem:[%s3824 + $0x280] sm:$0xff] %v3812
      %3846 = vst [vmem:[%s3824 + $0x290] sm:$0xff] %v3813
      %3847 = vst [vmem:[%s3824 + $0x2c0] sm:$0xff] %v3814
      %3848 = vst [vmem:[%s3824 + $0x2d0] sm:$0xff] %v3815
      %3849 = vst [vmem:[%s3824 + $0x300] sm:$0xff] %v3816
      %3850 = vst [vmem:[%s3824 + $0x310] sm:$0xff] %v3817
      %3851 = vst [vmem:[%s3824 + $0x340] sm:$0xff] %v3818
      %3852 = vst [vmem:[%s3824 + $0x350] sm:$0xff] %v3819
      %3853 = vst [vmem:[%s3824 + $0x380] sm:$0xff] %v3820
      %3854 = vst [vmem:[%s3824 + $0x390] sm:$0xff] %v3821
      %3855 = vst [vmem:[%s3824 + $0x3c0] sm:$0xff] %v3822
      %3856 = vst [vmem:[%s3824 + $0x3d0] sm:$0xff] %v3823
      %v3857 = vld [vmem:[%s1027] sm:$0xff]
      %v3858 = vld [vmem:[%s1027 + $0x8] sm:$0xff]
      %v3859 = vld [vmem:[%s1027 + $0x10] sm:$0xff]
      %v3860 = vld [vmem:[%s1027 + $0x18] sm:$0xff]
      %v3861 = vld [vmem:[%s1027 + $0x20] sm:$0xff]
      %v3862 = vld [vmem:[%s1027 + $0x28] sm:$0xff]
      %v3863 = vld [vmem:[%s1027 + $0x30] sm:$0xff]
      %v3864 = vld [vmem:[%s1027 + $0x38] sm:$0xff]
      %v3865 = vld [vmem:[%s1027 + $0x40] sm:$0xff]
      %v3866 = vld [vmem:[%s1027 + $0x48] sm:$0xff]
      %v3867 = vld [vmem:[%s1027 + $0x50] sm:$0xff]
      %v3868 = vld [vmem:[%s1027 + $0x58] sm:$0xff]
      %v3869 = vld [vmem:[%s1027 + $0x60] sm:$0xff]
      %v3870 = vld [vmem:[%s1027 + $0x68] sm:$0xff]
      %v3871 = vld [vmem:[%s1027 + $0x70] sm:$0xff]
      %v3872 = vld [vmem:[%s1027 + $0x78] sm:$0xff]
      %v3873 = vld [vmem:[%s1027 + $0x80] sm:$0xff]
      %v3874 = vld [vmem:[%s1027 + $0x88] sm:$0xff]
      %v3875 = vld [vmem:[%s1027 + $0x90] sm:$0xff]
      %v3876 = vld [vmem:[%s1027 + $0x98] sm:$0xff]
      %v3877 = vld [vmem:[%s1027 + $0xa0] sm:$0xff]
      %v3878 = vld [vmem:[%s1027 + $0xa8] sm:$0xff]
      %v3879 = vld [vmem:[%s1027 + $0xb0] sm:$0xff]
      %v3880 = vld [vmem:[%s1027 + $0xb8] sm:$0xff]
      %v3881 = vld [vmem:[%s1027 + $0xc0] sm:$0xff]
      %v3882 = vld [vmem:[%s1027 + $0xc8] sm:$0xff]
      %v3883 = vld [vmem:[%s1027 + $0xd0] sm:$0xff]
      %v3884 = vld [vmem:[%s1027 + $0xd8] sm:$0xff]
      %v3885 = vld [vmem:[%s1027 + $0xe0] sm:$0xff]
      %v3886 = vld [vmem:[%s1027 + $0xe8] sm:$0xff]
      %v3887 = vld [vmem:[%s1027 + $0xf0] sm:$0xff]
      %v3888 = vld [vmem:[%s1027 + $0xf8] sm:$0xff]
      %s3889 = scalar_lea.vmem %s1, 1536
      %v3890 = vld [vmem:[%s3889] sm:$0xff]
      %v3891 = vld [vmem:[%s3889 + $0x8] sm:$0xff]
      %v3892 = vld [vmem:[%s3889 + $0x10] sm:$0xff]
      %v3893 = vld [vmem:[%s3889 + $0x18] sm:$0xff]
      %v3894 = vld [vmem:[%s3889 + $0x20] sm:$0xff]
      %v3895 = vld [vmem:[%s3889 + $0x28] sm:$0xff]
      %v3896 = vld [vmem:[%s3889 + $0x30] sm:$0xff]
      %v3897 = vld [vmem:[%s3889 + $0x38] sm:$0xff]
      %v3898 = vld [vmem:[%s3889 + $0x40] sm:$0xff]
      %v3899 = vld [vmem:[%s3889 + $0x48] sm:$0xff]
      %v3900 = vld [vmem:[%s3889 + $0x50] sm:$0xff]
      %v3901 = vld [vmem:[%s3889 + $0x58] sm:$0xff]
      %v3902 = vld [vmem:[%s3889 + $0x60] sm:$0xff]
      %v3903 = vld [vmem:[%s3889 + $0x68] sm:$0xff]
      %v3904 = vld [vmem:[%s3889 + $0x70] sm:$0xff]
      %v3905 = vld [vmem:[%s3889 + $0x78] sm:$0xff]
      %v3906 = vld [vmem:[%s2259] sm:$0xff]
      %v3907 = vld [vmem:[%s2259 + $0x8] sm:$0xff]
      %v3908 = vld [vmem:[%s2259 + $0x10] sm:$0xff]
      %v3909 = vld [vmem:[%s2259 + $0x18] sm:$0xff]
      %v3910 = vld [vmem:[%s2259 + $0x20] sm:$0xff]
      %v3911 = vld [vmem:[%s2259 + $0x28] sm:$0xff]
      %v3912 = vld [vmem:[%s2259 + $0x30] sm:$0xff]
      %v3913 = vld [vmem:[%s2259 + $0x38] sm:$0xff]
      %v3914 = vld [vmem:[%s2259 + $0x40] sm:$0xff]
      %v3915 = vld [vmem:[%s2259 + $0x48] sm:$0xff]
      %v3916 = vld [vmem:[%s2259 + $0x50] sm:$0xff]
      %v3917 = vld [vmem:[%s2259 + $0x58] sm:$0xff]
      %v3918 = vld [vmem:[%s2259 + $0x60] sm:$0xff]
      %v3919 = vld [vmem:[%s2259 + $0x68] sm:$0xff]
      %v3920 = vld [vmem:[%s2259 + $0x70] sm:$0xff]
      %v3921 = vld [vmem:[%s2259 + $0x78] sm:$0xff]
      %v3922 = vld [vmem:[%s2259 + $0x80] sm:$0xff]
      %v3923 = vld [vmem:[%s2259 + $0x88] sm:$0xff]
      %v3924 = vld [vmem:[%s2259 + $0x90] sm:$0xff]
      %v3925 = vld [vmem:[%s2259 + $0x98] sm:$0xff]
      %v3926 = vld [vmem:[%s2259 + $0xa0] sm:$0xff]
      %v3927 = vld [vmem:[%s2259 + $0xa8] sm:$0xff]
      %v3928 = vld [vmem:[%s2259 + $0xb0] sm:$0xff]
      %v3929 = vld [vmem:[%s2259 + $0xb8] sm:$0xff]
      %v3930 = vld [vmem:[%s2259 + $0xc0] sm:$0xff]
      %v3931 = vld [vmem:[%s2259 + $0xc8] sm:$0xff]
      %v3932 = vld [vmem:[%s2259 + $0xd0] sm:$0xff]
      %v3933 = vld [vmem:[%s2259 + $0xd8] sm:$0xff]
      %v3934 = vld [vmem:[%s2259 + $0xe0] sm:$0xff]
      %v3935 = vld [vmem:[%s2259 + $0xe8] sm:$0xff]
      %v3936 = vld [vmem:[%s2259 + $0xf0] sm:$0xff]
      %v3937 = vld [vmem:[%s2259 + $0xf8] sm:$0xff]
      %s3938 = scalar_lea.vmem %s1, 1664
      %v3939 = vld [vmem:[%s3938] sm:$0xff]
      %v3940 = vld [vmem:[%s3938 + $0x8] sm:$0xff]
      %v3941 = vld [vmem:[%s3938 + $0x10] sm:$0xff]
      %v3942 = vld [vmem:[%s3938 + $0x18] sm:$0xff]
      %v3943 = vld [vmem:[%s3938 + $0x20] sm:$0xff]
      %v3944 = vld [vmem:[%s3938 + $0x28] sm:$0xff]
      %v3945 = vld [vmem:[%s3938 + $0x30] sm:$0xff]
      %v3946 = vld [vmem:[%s3938 + $0x38] sm:$0xff]
      %v3947 = vld [vmem:[%s3938 + $0x40] sm:$0xff]
      %v3948 = vld [vmem:[%s3938 + $0x48] sm:$0xff]
      %v3949 = vld [vmem:[%s3938 + $0x50] sm:$0xff]
      %v3950 = vld [vmem:[%s3938 + $0x58] sm:$0xff]
      %v3951 = vld [vmem:[%s3938 + $0x60] sm:$0xff]
      %v3952 = vld [vmem:[%s3938 + $0x68] sm:$0xff]
      %v3953 = vld [vmem:[%s3938 + $0x70] sm:$0xff]
      %v3954 = vld [vmem:[%s3938 + $0x78] sm:$0xff]
      %3955 = vmatprep.subr.mxu0 0.0
      %3956 = vmatpush1.msra.mxu0 %v3939
      %3957 = vmatprep.subr.mxu0 0.0
      %3958 = vmatpush1.msra.mxu0 %v3940
      %3959 = vmatprep.subr.mxu0 0.0
      %3960 = vmatpush1.msra.mxu0 %v3941
      %3961 = vmatprep.subr.mxu0 0.0
      %3962 = vmatpush1.msra.mxu0 %v3942
      %3963 = vmatprep.subr.mxu0 0.0
      %3964 = vmatpush1.msra.mxu0 %v3943
      %3965 = vmatprep.subr.mxu0 0.0
      %3966 = vmatpush1.msra.mxu0 %v3944
      %3967 = vmatprep.subr.mxu0 0.0
      %3968 = vmatpush1.msra.mxu0 %v3945
      %3969 = vmatprep.subr.mxu0 0.0
      %3970 = vmatpush1.msra.mxu0 %v3946
      %3971 = vmatprep.subr.mxu0 0.0
      %3972 = vmatpush1.msra.mxu0 %v3947
      %3973 = vmatprep.subr.mxu0 0.0
      %3974 = vmatpush1.msra.mxu0 %v3948
      %3975 = vmatprep.subr.mxu0 0.0
      %3976 = vmatpush1.msra.mxu0 %v3949
      %3977 = vmatprep.subr.mxu0 0.0
      %3978 = vmatpush1.msra.mxu0 %v3950
      %3979 = vmatprep.subr.mxu0 0.0
      %3980 = vmatpush1.msra.mxu0 %v3951
      %3981 = vmatprep.subr.mxu0 0.0
      %3982 = vmatpush1.msra.mxu0 %v3952
      %3983 = vmatprep.subr.mxu0 0.0
      %3984 = vmatpush1.msra.mxu0 %v3953
      %3985 = vmatprep.subr.mxu0 0.0
      %3986 = vmatpush1.msra.mxu0 %v3954
      %3987 = vmatprep.subr.mxu0 0.0
      %3988 = vmatpush1.msra.mxu0 0.0
      %3989 = vmatprep.subr.mxu0 0.0
      %3990 = vmatpush1.msra.mxu0 0.0
      %3991 = vmatprep.subr.mxu0 0.0
      %3992 = vmatpush1.msra.mxu0 0.0
      %3993 = vmatprep.subr.mxu0 0.0
      %3994 = vmatpush1.msra.mxu0 0.0
      %3995 = vmatprep.subr.mxu0 0.0
      %3996 = vmatpush1.msra.mxu0 0.0
      %3997 = vmatprep.subr.mxu0 0.0
      %3998 = vmatpush1.msra.mxu0 0.0
      %3999 = vmatprep.subr.mxu0 0.0
      %4000 = vmatpush1.msra.mxu0 0.0
      %4001 = vmatprep.subr.mxu0 0.0
      %4002 = vmatpush1.msra.mxu0 0.0
      %4003 = vmatprep.subr.mxu0 0.0
      %4004 = vmatpush1.msra.mxu0 0.0
      %4005 = vmatprep.subr.mxu0 0.0
      %4006 = vmatpush1.msra.mxu0 0.0
      %4007 = vmatprep.subr.mxu0 0.0
      %4008 = vmatpush1.msra.mxu0 0.0
      %4009 = vmatprep.subr.mxu0 0.0
      %4010 = vmatpush1.msra.mxu0 0.0
      %4011 = vmatprep.subr.mxu0 0.0
      %4012 = vmatpush1.msra.mxu0 0.0
      %4013 = vmatprep.subr.mxu0 0.0
      %4014 = vmatpush1.msra.mxu0 0.0
      %4015 = vmatprep.subr.mxu0 0.0
      %4016 = vmatpush1.msra.mxu0 0.0
      %4017 = vmatprep.subr.mxu0 0.0
      %4018 = vmatpush1.msra.mxu0 0.0
      %4019 = vmatprep.mubr.f32.mxu0 0.0
      %4020 = vmatmul.mubr.f32.gmra.mrb[0].mxu0 %v3906
      %v4021 = vpop.f32.mrb[0].mxu0
      %v4022 = vadd.f32 0.0, %v4021
      %v4023 = vpop.f32.mrb[0].mxu0
      %4024 = vmatprep.mubr.f32.mxu0 0.0
      %4025 = vmatmul.mubr.f32.gmra.mrb[0].mxu0 %v3907
      %v4026 = vpop.f32.mrb[0].mxu0
      %v4027 = vadd.f32 0.0, %v4026
      %v4028 = vpop.f32.mrb[0].mxu0
      %4029 = vmatprep.mubr.f32.mxu0 0.0
      %4030 = vmatmul.mubr.f32.gmra.mrb[0].mxu0 %v3908
      %v4031 = vpop.f32.mrb[0].mxu0
      %v4032 = vadd.f32 0.0, %v4031
      %v4033 = vpop.f32.mrb[0].mxu0
      %4034 = vmatprep.mubr.f32.mxu0 0.0
      %4035 = vmatmul.mubr.f32.gmra.mrb[0].mxu0 %v3909
      %v4036 = vpop.f32.mrb[0].mxu0
      %v4037 = vadd.f32 0.0, %v4036
      %v4038 = vpop.f32.mrb[0].mxu0
      %4039 = vmatprep.mubr.f32.mxu0 0.0
      %4040 = vmatmul.mubr.f32.gmra.mrb[0].mxu0 %v3910
      %v4041 = vpop.f32.mrb[0].mxu0
      %v4042 = vadd.f32 0.0, %v4041
      %v4043 = vpop.f32.mrb[0].mxu0
      %4044 = vmatprep.mubr.f32.mxu0 0.0
      %4045 = vmatmul.mubr.f32.gmra.mrb[0].mxu0 %v3911
      %v4046 = vpop.f32.mrb[0].mxu0
      %v4047 = vadd.f32 0.0, %v4046
      %v4048 = vpop.f32.mrb[0].mxu0
      %4049 = vmatprep.mubr.f32.mxu0 0.0
      %4050 = vmatmul.mubr.f32.gmra.mrb[0].mxu0 %v3912
      %v4051 = vpop.f32.mrb[0].mxu0
      %v4052 = vadd.f32 0.0, %v4051
      %v4053 = vpop.f32.mrb[0].mxu0
      %4054 = vmatprep.mubr.f32.mxu0 0.0
      %4055 = vmatmul.mubr.f32.gmra.mrb[0].mxu0 %v3913
      %v4056 = vpop.f32.mrb[0].mxu0
      %v4057 = vadd.f32 0.0, %v4056
      %v4058 = vpop.f32.mrb[0].mxu0
      %4059 = vmatprep.mubr.f32.mxu0 0.0
      %4060 = vmatmul.mubr.f32.gmra.mrb[0].mxu0 %v3914
      %v4061 = vpop.f32.mrb[0].mxu0
      %v4062 = vadd.f32 0.0, %v4061
      %v4063 = vpop.f32.mrb[0].mxu0
      %4064 = vmatprep.mubr.f32.mxu0 0.0
      %4065 = vmatmul.mubr.f32.gmra.mrb[0].mxu0 %v3915
      %v4066 = vpop.f32.mrb[0].mxu0
      %v4067 = vadd.f32 0.0, %v4066
      %v4068 = vpop.f32.mrb[0].mxu0
      %4069 = vmatprep.mubr.f32.mxu0 0.0
      %4070 = vmatmul.mubr.f32.gmra.mrb[0].mxu0 %v3916
      %v4071 = vpop.f32.mrb[0].mxu0
      %v4072 = vadd.f32 0.0, %v4071
      %v4073 = vpop.f32.mrb[0].mxu0
      %4074 = vmatprep.mubr.f32.mxu0 0.0
      %4075 = vmatmul.mubr.f32.gmra.mrb[0].mxu0 %v3917
      %v4076 = vpop.f32.mrb[0].mxu0
      %v4077 = vadd.f32 0.0, %v4076
      %v4078 = vpop.f32.mrb[0].mxu0
      %4079 = vmatprep.mubr.f32.mxu0 0.0
      %4080 = vmatmul.mubr.f32.gmra.mrb[0].mxu0 %v3918
      %v4081 = vpop.f32.mrb[0].mxu0
      %v4082 = vadd.f32 0.0, %v4081
      %v4083 = vpop.f32.mrb[0].mxu0
      %4084 = vmatprep.mubr.f32.mxu0 0.0
      %4085 = vmatmul.mubr.f32.gmra.mrb[0].mxu0 %v3919
      %v4086 = vpop.f32.mrb[0].mxu0
      %v4087 = vadd.f32 0.0, %v4086
      %v4088 = vpop.f32.mrb[0].mxu0
      %4089 = vmatprep.mubr.f32.mxu0 0.0
      %4090 = vmatmul.mubr.f32.gmra.mrb[0].mxu0 %v3920
      %v4091 = vpop.f32.mrb[0].mxu0
      %v4092 = vadd.f32 0.0, %v4091
      %v4093 = vpop.f32.mrb[0].mxu0
      %4094 = vmatprep.mubr.f32.mxu0 0.0
      %4095 = vmatmul.mubr.f32.gmra.mrb[0].mxu0 %v3921
      %v4096 = vpop.f32.mrb[0].mxu0
      %v4097 = vadd.f32 0.0, %v4096
      %v4098 = vpop.f32.mrb[0].mxu0
      %4099 = vmatprep.mubr.f32.mxu0 0.0
      %4100 = vmatmul.mubr.f32.gmra.mrb[0].mxu0 %v3922
      %v4101 = vpop.f32.mrb[0].mxu0
      %v4102 = vadd.f32 0.0, %v4101
      %v4103 = vpop.f32.mrb[0].mxu0
      %4104 = vmatprep.mubr.f32.mxu0 0.0
      %4105 = vmatmul.mubr.f32.gmra.mrb[0].mxu0 %v3923
      %v4106 = vpop.f32.mrb[0].mxu0
      %v4107 = vadd.f32 0.0, %v4106
      %v4108 = vpop.f32.mrb[0].mxu0
      %4109 = vmatprep.mubr.f32.mxu0 0.0
      %4110 = vmatmul.mubr.f32.gmra.mrb[0].mxu0 %v3924
      %v4111 = vpop.f32.mrb[0].mxu0
      %v4112 = vadd.f32 0.0, %v4111
      %v4113 = vpop.f32.mrb[0].mxu0
      %4114 = vmatprep.mubr.f32.mxu0 0.0
      %4115 = vmatmul.mubr.f32.gmra.mrb[0].mxu0 %v3925
      %v4116 = vpop.f32.mrb[0].mxu0
      %v4117 = vadd.f32 0.0, %v4116
      %v4118 = vpop.f32.mrb[0].mxu0
      %4119 = vmatprep.mubr.f32.mxu0 0.0
      %4120 = vmatmul.mubr.f32.gmra.mrb[0].mxu0 %v3926
      %v4121 = vpop.f32.mrb[0].mxu0
      %v4122 = vadd.f32 0.0, %v4121
      %v4123 = vpop.f32.mrb[0].mxu0
      %4124 = vmatprep.mubr.f32.mxu0 0.0
      %4125 = vmatmul.mubr.f32.gmra.mrb[0].mxu0 %v3927
      %v4126 = vpop.f32.mrb[0].mxu0
      %v4127 = vadd.f32 0.0, %v4126
      %v4128 = vpop.f32.mrb[0].mxu0
      %4129 = vmatprep.mubr.f32.mxu0 0.0
      %4130 = vmatmul.mubr.f32.gmra.mrb[0].mxu0 %v3928
      %v4131 = vpop.f32.mrb[0].mxu0
      %v4132 = vadd.f32 0.0, %v4131
      %v4133 = vpop.f32.mrb[0].mxu0
      %4134 = vmatprep.mubr.f32.mxu0 0.0
      %4135 = vmatmul.mubr.f32.gmra.mrb[0].mxu0 %v3929
      %v4136 = vpop.f32.mrb[0].mxu0
      %v4137 = vadd.f32 0.0, %v4136
      %v4138 = vpop.f32.mrb[0].mxu0
      %4139 = vmatprep.mubr.f32.mxu0 0.0
      %4140 = vmatmul.mubr.f32.gmra.mrb[0].mxu0 %v3930
      %v4141 = vpop.f32.mrb[0].mxu0
      %v4142 = vadd.f32 0.0, %v4141
      %v4143 = vpop.f32.mrb[0].mxu0
      %4144 = vmatprep.mubr.f32.mxu0 0.0
      %4145 = vmatmul.mubr.f32.gmra.mrb[0].mxu0 %v3931
      %v4146 = vpop.f32.mrb[0].mxu0
      %v4147 = vadd.f32 0.0, %v4146
      %v4148 = vpop.f32.mrb[0].mxu0
      %4149 = vmatprep.mubr.f32.mxu0 0.0
      %4150 = vmatmul.mubr.f32.gmra.mrb[0].mxu0 %v3932
      %v4151 = vpop.f32.mrb[0].mxu0
      %v4152 = vadd.f32 0.0, %v4151
      %v4153 = vpop.f32.mrb[0].mxu0
      %4154 = vmatprep.mubr.f32.mxu0 0.0
      %4155 = vmatmul.mubr.f32.gmra.mrb[0].mxu0 %v3933
      %v4156 = vpop.f32.mrb[0].mxu0
      %v4157 = vadd.f32 0.0, %v4156
      %v4158 = vpop.f32.mrb[0].mxu0
      %4159 = vmatprep.mubr.f32.mxu0 0.0
      %4160 = vmatmul.mubr.f32.gmra.mrb[0].mxu0 %v3934
      %v4161 = vpop.f32.mrb[0].mxu0
      %v4162 = vadd.f32 0.0, %v4161
      %v4163 = vpop.f32.mrb[0].mxu0
      %4164 = vmatprep.mubr.f32.mxu0 0.0
      %4165 = vmatmul.mubr.f32.gmra.mrb[0].mxu0 %v3935
      %v4166 = vpop.f32.mrb[0].mxu0
      %v4167 = vadd.f32 0.0, %v4166
      %v4168 = vpop.f32.mrb[0].mxu0
      %4169 = vmatprep.mubr.f32.mxu0 0.0
      %4170 = vmatmul.mubr.f32.gmra.mrb[0].mxu0 %v3936
      %v4171 = vpop.f32.mrb[0].mxu0
      %v4172 = vadd.f32 0.0, %v4171
      %v4173 = vpop.f32.mrb[0].mxu0
      %4174 = vmatprep.mubr.f32.mxu0 0.0
      %4175 = vmatmul.mubr.f32.gmra.mrb[0].mxu0 %v3937
      %v4176 = vpop.f32.mrb[0].mxu0
      %v4177 = vadd.f32 0.0, %v4176
      %v4178 = vpop.f32.mrb[0].mxu0
      %4179 = vdwg.mxu0
      %4180 = vmatprep.subr.mxu0 0.0
      %4181 = vmatpush1.msra.mxu0 %v3890
      %4182 = vmatprep.subr.mxu0 0.0
      %4183 = vmatpush1.msra.mxu0 %v3891
      %4184 = vmatprep.subr.mxu0 0.0
      %4185 = vmatpush1.msra.mxu0 %v3892
      %4186 = vmatprep.subr.mxu0 0.0
      %4187 = vmatpush1.msra.mxu0 %v3893
      %4188 = vmatprep.subr.mxu0 0.0
      %4189 = vmatpush1.msra.mxu0 %v3894
      %4190 = vmatprep.subr.mxu0 0.0
      %4191 = vmatpush1.msra.mxu0 %v3895
      %4192 = vmatprep.subr.mxu0 0.0
      %4193 = vmatpush1.msra.mxu0 %v3896
      %4194 = vmatprep.subr.mxu0 0.0
      %4195 = vmatpush1.msra.mxu0 %v3897
      %4196 = vmatprep.subr.mxu0 0.0
      %4197 = vmatpush1.msra.mxu0 %v3898
      %4198 = vmatprep.subr.mxu0 0.0
      %4199 = vmatpush1.msra.mxu0 %v3899
      %4200 = vmatprep.subr.mxu0 0.0
      %4201 = vmatpush1.msra.mxu0 %v3900
      %4202 = vmatprep.subr.mxu0 0.0
      %4203 = vmatpush1.msra.mxu0 %v3901
      %4204 = vmatprep.subr.mxu0 0.0
      %4205 = vmatpush1.msra.mxu0 %v3902
      %4206 = vmatprep.subr.mxu0 0.0
      %4207 = vmatpush1.msra.mxu0 %v3903
      %4208 = vmatprep.subr.mxu0 0.0
      %4209 = vmatpush1.msra.mxu0 %v3904
      %4210 = vmatprep.subr.mxu0 0.0
      %4211 = vmatpush1.msra.mxu0 %v3905
      %4212 = vmatprep.subr.mxu0 0.0
      %4213 = vmatpush1.msra.mxu0 0.0
      %4214 = vmatprep.subr.mxu0 0.0
      %4215 = vmatpush1.msra.mxu0 0.0
      %4216 = vmatprep.subr.mxu0 0.0
      %4217 = vmatpush1.msra.mxu0 0.0
      %4218 = vmatprep.subr.mxu0 0.0
      %4219 = vmatpush1.msra.mxu0 0.0
      %4220 = vmatprep.subr.mxu0 0.0
      %4221 = vmatpush1.msra.mxu0 0.0
      %4222 = vmatprep.subr.mxu0 0.0
      %4223 = vmatpush1.msra.mxu0 0.0
      %4224 = vmatprep.subr.mxu0 0.0
      %4225 = vmatpush1.msra.mxu0 0.0
      %4226 = vmatprep.subr.mxu0 0.0
      %4227 = vmatpush1.msra.mxu0 0.0
      %4228 = vmatprep.subr.mxu0 0.0
      %4229 = vmatpush1.msra.mxu0 0.0
      %4230 = vmatprep.subr.mxu0 0.0
      %4231 = vmatpush1.msra.mxu0 0.0
      %4232 = vmatprep.subr.mxu0 0.0
      %4233 = vmatpush1.msra.mxu0 0.0
      %4234 = vmatprep.subr.mxu0 0.0
      %4235 = vmatpush1.msra.mxu0 0.0
      %4236 = vmatprep.subr.mxu0 0.0
      %4237 = vmatpush1.msra.mxu0 0.0
      %4238 = vmatprep.subr.mxu0 0.0
      %4239 = vmatpush1.msra.mxu0 0.0
      %4240 = vmatprep.subr.mxu0 0.0
      %4241 = vmatpush1.msra.mxu0 0.0
      %4242 = vmatprep.subr.mxu0 0.0
      %4243 = vmatpush1.msra.mxu0 0.0
      %4244 = vmatprep.mubr.f32.mxu0 0.0
      %4245 = vmatmul.mubr.f32.gmra.mrb[0].mxu0 %v3857
      %v4246 = vpop.f32.mrb[0].mxu0
      %v4247 = vadd.f32 %v4022, %v4246
      %v4248 = vpop.f32.mrb[0].mxu0
      %4249 = vmatprep.mubr.f32.mxu0 0.0
      %4250 = vmatmul.mubr.f32.gmra.mrb[0].mxu0 %v3858
      %v4251 = vpop.f32.mrb[0].mxu0
      %v4252 = vadd.f32 %v4027, %v4251
      %v4253 = vpop.f32.mrb[0].mxu0
      %4254 = vmatprep.mubr.f32.mxu0 0.0
      %4255 = vmatmul.mubr.f32.gmra.mrb[0].mxu0 %v3859
      %v4256 = vpop.f32.mrb[0].mxu0
      %v4257 = vadd.f32 %v4032, %v4256
      %v4258 = vpop.f32.mrb[0].mxu0
      %4259 = vmatprep.mubr.f32.mxu0 0.0
      %4260 = vmatmul.mubr.f32.gmra.mrb[0].mxu0 %v3860
      %v4261 = vpop.f32.mrb[0].mxu0
      %v4262 = vadd.f32 %v4037, %v4261
      %v4263 = vpop.f32.mrb[0].mxu0
      %4264 = vmatprep.mubr.f32.mxu0 0.0
      %4265 = vmatmul.mubr.f32.gmra.mrb[0].mxu0 %v3861
      %v4266 = vpop.f32.mrb[0].mxu0
      %v4267 = vadd.f32 %v4042, %v4266
      %v4268 = vpop.f32.mrb[0].mxu0
      %4269 = vmatprep.mubr.f32.mxu0 0.0
      %4270 = vmatmul.mubr.f32.gmra.mrb[0].mxu0 %v3862
      %v4271 = vpop.f32.mrb[0].mxu0
      %v4272 = vadd.f32 %v4047, %v4271
      %v4273 = vpop.f32.mrb[0].mxu0
      %4274 = vmatprep.mubr.f32.mxu0 0.0
      %4275 = vmatmul.mubr.f32.gmra.mrb[0].mxu0 %v3863
      %v4276 = vpop.f32.mrb[0].mxu0
      %v4277 = vadd.f32 %v4052, %v4276
      %v4278 = vpop.f32.mrb[0].mxu0
      %4279 = vmatprep.mubr.f32.mxu0 0.0
      %4280 = vmatmul.mubr.f32.gmra.mrb[0].mxu0 %v3864
      %v4281 = vpop.f32.mrb[0].mxu0
      %v4282 = vadd.f32 %v4057, %v4281
      %v4283 = vpop.f32.mrb[0].mxu0
      %4284 = vmatprep.mubr.f32.mxu0 0.0
      %4285 = vmatmul.mubr.f32.gmra.mrb[0].mxu0 %v3865
      %v4286 = vpop.f32.mrb[0].mxu0
      %v4287 = vadd.f32 %v4062, %v4286
      %v4288 = vpop.f32.mrb[0].mxu0
      %4289 = vmatprep.mubr.f32.mxu0 0.0
      %4290 = vmatmul.mubr.f32.gmra.mrb[0].mxu0 %v3866
      %v4291 = vpop.f32.mrb[0].mxu0
      %v4292 = vadd.f32 %v4067, %v4291
      %v4293 = vpop.f32.mrb[0].mxu0
      %4294 = vmatprep.mubr.f32.mxu0 0.0
      %4295 = vmatmul.mubr.f32.gmra.mrb[0].mxu0 %v3867
      %v4296 = vpop.f32.mrb[0].mxu0
      %v4297 = vadd.f32 %v4072, %v4296
      %v4298 = vpop.f32.mrb[0].mxu0
      %4299 = vmatprep.mubr.f32.mxu0 0.0
      %4300 = vmatmul.mubr.f32.gmra.mrb[0].mxu0 %v3868
      %v4301 = vpop.f32.mrb[0].mxu0
      %v4302 = vadd.f32 %v4077, %v4301
      %v4303 = vpop.f32.mrb[0].mxu0
      %4304 = vmatprep.mubr.f32.mxu0 0.0
      %4305 = vmatmul.mubr.f32.gmra.mrb[0].mxu0 %v3869
      %v4306 = vpop.f32.mrb[0].mxu0
      %v4307 = vadd.f32 %v4082, %v4306
      %v4308 = vpop.f32.mrb[0].mxu0
      %4309 = vmatprep.mubr.f32.mxu0 0.0
      %4310 = vmatmul.mubr.f32.gmra.mrb[0].mxu0 %v3870
      %v4311 = vpop.f32.mrb[0].mxu0
      %v4312 = vadd.f32 %v4087, %v4311
      %v4313 = vpop.f32.mrb[0].mxu0
      %4314 = vmatprep.mubr.f32.mxu0 0.0
      %4315 = vmatmul.mubr.f32.gmra.mrb[0].mxu0 %v3871
      %v4316 = vpop.f32.mrb[0].mxu0
      %v4317 = vadd.f32 %v4092, %v4316
      %v4318 = vpop.f32.mrb[0].mxu0
      %4319 = vmatprep.mubr.f32.mxu0 0.0
      %4320 = vmatmul.mubr.f32.gmra.mrb[0].mxu0 %v3872
      %v4321 = vpop.f32.mrb[0].mxu0
      %v4322 = vadd.f32 %v4097, %v4321
      %v4323 = vpop.f32.mrb[0].mxu0
      %4324 = vmatprep.mubr.f32.mxu0 0.0
      %4325 = vmatmul.mubr.f32.gmra.mrb[0].mxu0 %v3873
      %v4326 = vpop.f32.mrb[0].mxu0
      %v4327 = vadd.f32 %v4102, %v4326
      %v4328 = vpop.f32.mrb[0].mxu0
      %4329 = vmatprep.mubr.f32.mxu0 0.0
      %4330 = vmatmul.mubr.f32.gmra.mrb[0].mxu0 %v3874
      %v4331 = vpop.f32.mrb[0].mxu0
      %v4332 = vadd.f32 %v4107, %v4331
      %v4333 = vpop.f32.mrb[0].mxu0
      %4334 = vmatprep.mubr.f32.mxu0 0.0
      %4335 = vmatmul.mubr.f32.gmra.mrb[0].mxu0 %v3875
      %v4336 = vpop.f32.mrb[0].mxu0
      %v4337 = vadd.f32 %v4112, %v4336
      %v4338 = vpop.f32.mrb[0].mxu0
      %4339 = vmatprep.mubr.f32.mxu0 0.0
      %4340 = vmatmul.mubr.f32.gmra.mrb[0].mxu0 %v3876
      %v4341 = vpop.f32.mrb[0].mxu0
      %v4342 = vadd.f32 %v4117, %v4341
      %v4343 = vpop.f32.mrb[0].mxu0
      %4344 = vmatprep.mubr.f32.mxu0 0.0
      %4345 = vmatmul.mubr.f32.gmra.mrb[0].mxu0 %v3877
      %v4346 = vpop.f32.mrb[0].mxu0
      %v4347 = vadd.f32 %v4122, %v4346
      %v4348 = vpop.f32.mrb[0].mxu0
      %4349 = vmatprep.mubr.f32.mxu0 0.0
      %4350 = vmatmul.mubr.f32.gmra.mrb[0].mxu0 %v3878
      %v4351 = vpop.f32.mrb[0].mxu0
      %v4352 = vadd.f32 %v4127, %v4351
      %v4353 = vpop.f32.mrb[0].mxu0
      %4354 = vmatprep.mubr.f32.mxu0 0.0
      %4355 = vmatmul.mubr.f32.gmra.mrb[0].mxu0 %v3879
      %v4356 = vpop.f32.mrb[0].mxu0
      %v4357 = vadd.f32 %v4132, %v4356
      %v4358 = vpop.f32.mrb[0].mxu0
      %4359 = vmatprep.mubr.f32.mxu0 0.0
      %4360 = vmatmul.mubr.f32.gmra.mrb[0].mxu0 %v3880
      %v4361 = vpop.f32.mrb[0].mxu0
      %v4362 = vadd.f32 %v4137, %v4361
      %v4363 = vpop.f32.mrb[0].mxu0
      %4364 = vmatprep.mubr.f32.mxu0 0.0
      %4365 = vmatmul.mubr.f32.gmra.mrb[0].mxu0 %v3881
      %v4366 = vpop.f32.mrb[0].mxu0
      %v4367 = vadd.f32 %v4142, %v4366
      %v4368 = vpop.f32.mrb[0].mxu0
      %4369 = vmatprep.mubr.f32.mxu0 0.0
      %4370 = vmatmul.mubr.f32.gmra.mrb[0].mxu0 %v3882
      %v4371 = vpop.f32.mrb[0].mxu0
      %v4372 = vadd.f32 %v4147, %v4371
      %v4373 = vpop.f32.mrb[0].mxu0
      %4374 = vmatprep.mubr.f32.mxu0 0.0
      %4375 = vmatmul.mubr.f32.gmra.mrb[0].mxu0 %v3883
      %v4376 = vpop.f32.mrb[0].mxu0
      %v4377 = vadd.f32 %v4152, %v4376
      %v4378 = vpop.f32.mrb[0].mxu0
      %4379 = vmatprep.mubr.f32.mxu0 0.0
      %4380 = vmatmul.mubr.f32.gmra.mrb[0].mxu0 %v3884
      %v4381 = vpop.f32.mrb[0].mxu0
      %v4382 = vadd.f32 %v4157, %v4381
      %v4383 = vpop.f32.mrb[0].mxu0
      %4384 = vmatprep.mubr.f32.mxu0 0.0
      %4385 = vmatmul.mubr.f32.gmra.mrb[0].mxu0 %v3885
      %v4386 = vpop.f32.mrb[0].mxu0
      %v4387 = vadd.f32 %v4162, %v4386
      %v4388 = vpop.f32.mrb[0].mxu0
      %4389 = vmatprep.mubr.f32.mxu0 0.0
      %4390 = vmatmul.mubr.f32.gmra.mrb[0].mxu0 %v3886
      %v4391 = vpop.f32.mrb[0].mxu0
      %v4392 = vadd.f32 %v4167, %v4391
      %v4393 = vpop.f32.mrb[0].mxu0
      %4394 = vmatprep.mubr.f32.mxu0 0.0
      %4395 = vmatmul.mubr.f32.gmra.mrb[0].mxu0 %v3887
      %v4396 = vpop.f32.mrb[0].mxu0
      %v4397 = vadd.f32 %v4172, %v4396
      %v4398 = vpop.f32.mrb[0].mxu0
      %4399 = vmatprep.mubr.f32.mxu0 0.0
      %4400 = vmatmul.mubr.f32.gmra.mrb[0].mxu0 %v3888
      %v4401 = vpop.f32.mrb[0].mxu0
      %v4402 = vadd.f32 %v4177, %v4401
      %v4403 = vpop.f32.mrb[0].mxu0
      %4404 = vdwg.mxu0
      %v4405 = vld [vmem:[%s3485] sm:$0xff]
      %v4406 = vld [vmem:[%s3485 + $0x8] sm:$0xff]
      %v4407 = vld [vmem:[%s3485 + $0x10] sm:$0xff]
      %v4408 = vld [vmem:[%s3485 + $0x18] sm:$0xff]
      %v4409 = vld [vmem:[%s3485 + $0x20] sm:$0xff]
      %v4410 = vld [vmem:[%s3485 + $0x28] sm:$0xff]
      %v4411 = vld [vmem:[%s3485 + $0x30] sm:$0xff]
      %v4412 = vld [vmem:[%s3485 + $0x38] sm:$0xff]
      %v4413 = vld [vmem:[%s3485 + $0x40] sm:$0xff]
      %v4414 = vld [vmem:[%s3485 + $0x48] sm:$0xff]
      %v4415 = vld [vmem:[%s3485 + $0x50] sm:$0xff]
      %v4416 = vld [vmem:[%s3485 + $0x58] sm:$0xff]
      %v4417 = vld [vmem:[%s3485 + $0x60] sm:$0xff]
      %v4418 = vld [vmem:[%s3485 + $0x68] sm:$0xff]
      %v4419 = vld [vmem:[%s3485 + $0x70] sm:$0xff]
      %v4420 = vld [vmem:[%s3485 + $0x78] sm:$0xff]
      %v4421 = vld [vmem:[%s3485 + $0x80] sm:$0xff]
      %v4422 = vld [vmem:[%s3485 + $0x88] sm:$0xff]
      %v4423 = vld [vmem:[%s3485 + $0x90] sm:$0xff]
      %v4424 = vld [vmem:[%s3485 + $0x98] sm:$0xff]
      %v4425 = vld [vmem:[%s3485 + $0xa0] sm:$0xff]
      %v4426 = vld [vmem:[%s3485 + $0xa8] sm:$0xff]
      %v4427 = vld [vmem:[%s3485 + $0xb0] sm:$0xff]
      %v4428 = vld [vmem:[%s3485 + $0xb8] sm:$0xff]
      %v4429 = vld [vmem:[%s3485 + $0xc0] sm:$0xff]
      %v4430 = vld [vmem:[%s3485 + $0xc8] sm:$0xff]
      %v4431 = vld [vmem:[%s3485 + $0xd0] sm:$0xff]
      %v4432 = vld [vmem:[%s3485 + $0xd8] sm:$0xff]
      %v4433 = vld [vmem:[%s3485 + $0xe0] sm:$0xff]
      %v4434 = vld [vmem:[%s3485 + $0xe8] sm:$0xff]
      %v4435 = vld [vmem:[%s3485 + $0xf0] sm:$0xff]
      %v4436 = vld [vmem:[%s3485 + $0xf8] sm:$0xff]
      %s4437 = scalar_lea.vmem %s1, 1792
      %v4438 = vld [vmem:[%s4437] sm:$0xff]
      %v4439 = vld [vmem:[%s4437 + $0x8] sm:$0xff]
      %v4440 = vld [vmem:[%s4437 + $0x10] sm:$0xff]
      %v4441 = vld [vmem:[%s4437 + $0x18] sm:$0xff]
      %v4442 = vld [vmem:[%s4437 + $0x20] sm:$0xff]
      %v4443 = vld [vmem:[%s4437 + $0x28] sm:$0xff]
      %v4444 = vld [vmem:[%s4437 + $0x30] sm:$0xff]
      %v4445 = vld [vmem:[%s4437 + $0x38] sm:$0xff]
      %v4446 = vld [vmem:[%s4437 + $0x40] sm:$0xff]
      %v4447 = vld [vmem:[%s4437 + $0x48] sm:$0xff]
      %v4448 = vld [vmem:[%s4437 + $0x50] sm:$0xff]
      %v4449 = vld [vmem:[%s4437 + $0x58] sm:$0xff]
      %v4450 = vld [vmem:[%s4437 + $0x60] sm:$0xff]
      %v4451 = vld [vmem:[%s4437 + $0x68] sm:$0xff]
      %v4452 = vld [vmem:[%s4437 + $0x70] sm:$0xff]
      %v4453 = vld [vmem:[%s4437 + $0x78] sm:$0xff]
      %4454 = vmatprep.subr.mxu0 0.0
      %4455 = vmatpush1.msra.mxu0 %v4438
      %4456 = vmatprep.subr.mxu0 0.0
      %4457 = vmatpush1.msra.mxu0 %v4439
      %4458 = vmatprep.subr.mxu0 0.0
      %4459 = vmatpush1.msra.mxu0 %v4440
      %4460 = vmatprep.subr.mxu0 0.0
      %4461 = vmatpush1.msra.mxu0 %v4441
      %4462 = vmatprep.subr.mxu0 0.0
      %4463 = vmatpush1.msra.mxu0 %v4442
      %4464 = vmatprep.subr.mxu0 0.0
      %4465 = vmatpush1.msra.mxu0 %v4443
      %4466 = vmatprep.subr.mxu0 0.0
      %4467 = vmatpush1.msra.mxu0 %v4444
      %4468 = vmatprep.subr.mxu0 0.0
      %4469 = vmatpush1.msra.mxu0 %v4445
      %4470 = vmatprep.subr.mxu0 0.0
      %4471 = vmatpush1.msra.mxu0 %v4446
      %4472 = vmatprep.subr.mxu0 0.0
      %4473 = vmatpush1.msra.mxu0 %v4447
      %4474 = vmatprep.subr.mxu0 0.0
      %4475 = vmatpush1.msra.mxu0 %v4448
      %4476 = vmatprep.subr.mxu0 0.0
      %4477 = vmatpush1.msra.mxu0 %v4449
      %4478 = vmatprep.subr.mxu0 0.0
      %4479 = vmatpush1.msra.mxu0 %v4450
      %4480 = vmatprep.subr.mxu0 0.0
      %4481 = vmatpush1.msra.mxu0 %v4451
      %4482 = vmatprep.subr.mxu0 0.0
      %4483 = vmatpush1.msra.mxu0 %v4452
      %4484 = vmatprep.subr.mxu0 0.0
      %4485 = vmatpush1.msra.mxu0 %v4453
      %4486 = vmatprep.subr.mxu0 0.0
      %4487 = vmatpush1.msra.mxu0 0.0
      %4488 = vmatprep.subr.mxu0 0.0
      %4489 = vmatpush1.msra.mxu0 0.0
      %4490 = vmatprep.subr.mxu0 0.0
      %4491 = vmatpush1.msra.mxu0 0.0
      %4492 = vmatprep.subr.mxu0 0.0
      %4493 = vmatpush1.msra.mxu0 0.0
      %4494 = vmatprep.subr.mxu0 0.0
      %4495 = vmatpush1.msra.mxu0 0.0
      %4496 = vmatprep.subr.mxu0 0.0
      %4497 = vmatpush1.msra.mxu0 0.0
      %4498 = vmatprep.subr.mxu0 0.0
      %4499 = vmatpush1.msra.mxu0 0.0
      %4500 = vmatprep.subr.mxu0 0.0
      %4501 = vmatpush1.msra.mxu0 0.0
      %4502 = vmatprep.subr.mxu0 0.0
      %4503 = vmatpush1.msra.mxu0 0.0
      %4504 = vmatprep.subr.mxu0 0.0
      %4505 = vmatpush1.msra.mxu0 0.0
      %4506 = vmatprep.subr.mxu0 0.0
      %4507 = vmatpush1.msra.mxu0 0.0
      %4508 = vmatprep.subr.mxu0 0.0
      %4509 = vmatpush1.msra.mxu0 0.0
      %4510 = vmatprep.subr.mxu0 0.0
      %4511 = vmatpush1.msra.mxu0 0.0
      %4512 = vmatprep.subr.mxu0 0.0
      %4513 = vmatpush1.msra.mxu0 0.0
      %4514 = vmatprep.subr.mxu0 0.0
      %4515 = vmatpush1.msra.mxu0 0.0
      %4516 = vmatprep.subr.mxu0 0.0
      %4517 = vmatpush1.msra.mxu0 0.0
      %4518 = vmatprep.mubr.f32.mxu0 0.0
      %4519 = vmatmul.mubr.f32.gmra.mrb[0].mxu0 %v4405
      %v4520 = vpop.f32.mrb[0].mxu0
      %v4521 = vadd.f32 0.0, %v4520
      %v4522 = vpop.f32.mrb[0].mxu0
      %4523 = vmatprep.mubr.f32.mxu0 0.0
      %4524 = vmatmul.mubr.f32.gmra.mrb[0].mxu0 %v4406
      %v4525 = vpop.f32.mrb[0].mxu0
      %v4526 = vadd.f32 0.0, %v4525
      %v4527 = vpop.f32.mrb[0].mxu0
      %4528 = vmatprep.mubr.f32.mxu0 0.0
      %4529 = vmatmul.mubr.f32.gmra.mrb[0].mxu0 %v4407
      %v4530 = vpop.f32.mrb[0].mxu0
      %v4531 = vadd.f32 0.0, %v4530
      %v4532 = vpop.f32.mrb[0].mxu0
      %4533 = vmatprep.mubr.f32.mxu0 0.0
      %4534 = vmatmul.mubr.f32.gmra.mrb[0].mxu0 %v4408
      %v4535 = vpop.f32.mrb[0].mxu0
      %v4536 = vadd.f32 0.0, %v4535
      %v4537 = vpop.f32.mrb[0].mxu0
      %4538 = vmatprep.mubr.f32.mxu0 0.0
      %4539 = vmatmul.mubr.f32.gmra.mrb[0].mxu0 %v4409
      %v4540 = vpop.f32.mrb[0].mxu0
      %v4541 = vadd.f32 0.0, %v4540
      %v4542 = vpop.f32.mrb[0].mxu0
      %4543 = vmatprep.mubr.f32.mxu0 0.0
      %4544 = vmatmul.mubr.f32.gmra.mrb[0].mxu0 %v4410
      %v4545 = vpop.f32.mrb[0].mxu0
      %v4546 = vadd.f32 0.0, %v4545
      %v4547 = vpop.f32.mrb[0].mxu0
      %4548 = vmatprep.mubr.f32.mxu0 0.0
      %4549 = vmatmul.mubr.f32.gmra.mrb[0].mxu0 %v4411
      %v4550 = vpop.f32.mrb[0].mxu0
      %v4551 = vadd.f32 0.0, %v4550
      %v4552 = vpop.f32.mrb[0].mxu0
      %4553 = vmatprep.mubr.f32.mxu0 0.0
      %4554 = vmatmul.mubr.f32.gmra.mrb[0].mxu0 %v4412
      %v4555 = vpop.f32.mrb[0].mxu0
      %v4556 = vadd.f32 0.0, %v4555
      %v4557 = vpop.f32.mrb[0].mxu0
      %4558 = vmatprep.mubr.f32.mxu0 0.0
      %4559 = vmatmul.mubr.f32.gmra.mrb[0].mxu0 %v4413
      %v4560 = vpop.f32.mrb[0].mxu0
      %v4561 = vadd.f32 0.0, %v4560
      %v4562 = vpop.f32.mrb[0].mxu0
      %4563 = vmatprep.mubr.f32.mxu0 0.0
      %4564 = vmatmul.mubr.f32.gmra.mrb[0].mxu0 %v4414
      %v4565 = vpop.f32.mrb[0].mxu0
      %v4566 = vadd.f32 0.0, %v4565
      %v4567 = vpop.f32.mrb[0].mxu0
      %4568 = vmatprep.mubr.f32.mxu0 0.0
      %4569 = vmatmul.mubr.f32.gmra.mrb[0].mxu0 %v4415
      %v4570 = vpop.f32.mrb[0].mxu0
      %v4571 = vadd.f32 0.0, %v4570
      %v4572 = vpop.f32.mrb[0].mxu0
      %4573 = vmatprep.mubr.f32.mxu0 0.0
      %4574 = vmatmul.mubr.f32.gmra.mrb[0].mxu0 %v4416
      %v4575 = vpop.f32.mrb[0].mxu0
      %v4576 = vadd.f32 0.0, %v4575
      %v4577 = vpop.f32.mrb[0].mxu0
      %4578 = vmatprep.mubr.f32.mxu0 0.0
      %4579 = vmatmul.mubr.f32.gmra.mrb[0].mxu0 %v4417
      %v4580 = vpop.f32.mrb[0].mxu0
      %v4581 = vadd.f32 0.0, %v4580
      %v4582 = vpop.f32.mrb[0].mxu0
      %4583 = vmatprep.mubr.f32.mxu0 0.0
      %4584 = vmatmul.mubr.f32.gmra.mrb[0].mxu0 %v4418
      %v4585 = vpop.f32.mrb[0].mxu0
      %v4586 = vadd.f32 0.0, %v4585
      %v4587 = vpop.f32.mrb[0].mxu0
      %4588 = vmatprep.mubr.f32.mxu0 0.0
      %4589 = vmatmul.mubr.f32.gmra.mrb[0].mxu0 %v4419
      %v4590 = vpop.f32.mrb[0].mxu0
      %v4591 = vadd.f32 0.0, %v4590
      %v4592 = vpop.f32.mrb[0].mxu0
      %4593 = vmatprep.mubr.f32.mxu0 0.0
      %4594 = vmatmul.mubr.f32.gmra.mrb[0].mxu0 %v4420
      %v4595 = vpop.f32.mrb[0].mxu0
      %v4596 = vadd.f32 0.0, %v4595
      %v4597 = vpop.f32.mrb[0].mxu0
      %4598 = vmatprep.mubr.f32.mxu0 0.0
      %4599 = vmatmul.mubr.f32.gmra.mrb[0].mxu0 %v4421
      %v4600 = vpop.f32.mrb[0].mxu0
      %v4601 = vadd.f32 0.0, %v4600
      %v4602 = vpop.f32.mrb[0].mxu0
      %4603 = vmatprep.mubr.f32.mxu0 0.0
      %4604 = vmatmul.mubr.f32.gmra.mrb[0].mxu0 %v4422
      %v4605 = vpop.f32.mrb[0].mxu0
      %v4606 = vadd.f32 0.0, %v4605
      %v4607 = vpop.f32.mrb[0].mxu0
      %4608 = vmatprep.mubr.f32.mxu0 0.0
      %4609 = vmatmul.mubr.f32.gmra.mrb[0].mxu0 %v4423
      %v4610 = vpop.f32.mrb[0].mxu0
      %v4611 = vadd.f32 0.0, %v4610
      %v4612 = vpop.f32.mrb[0].mxu0
      %4613 = vmatprep.mubr.f32.mxu0 0.0
      %4614 = vmatmul.mubr.f32.gmra.mrb[0].mxu0 %v4424
      %v4615 = vpop.f32.mrb[0].mxu0
      %v4616 = vadd.f32 0.0, %v4615
      %v4617 = vpop.f32.mrb[0].mxu0
      %4618 = vmatprep.mubr.f32.mxu0 0.0
      %4619 = vmatmul.mubr.f32.gmra.mrb[0].mxu0 %v4425
      %v4620 = vpop.f32.mrb[0].mxu0
      %v4621 = vadd.f32 0.0, %v4620
      %v4622 = vpop.f32.mrb[0].mxu0
      %4623 = vmatprep.mubr.f32.mxu0 0.0
      %4624 = vmatmul.mubr.f32.gmra.mrb[0].mxu0 %v4426
      %v4625 = vpop.f32.mrb[0].mxu0
      %v4626 = vadd.f32 0.0, %v4625
      %v4627 = vpop.f32.mrb[0].mxu0
      %4628 = vmatprep.mubr.f32.mxu0 0.0
      %4629 = vmatmul.mubr.f32.gmra.mrb[0].mxu0 %v4427
      %v4630 = vpop.f32.mrb[0].mxu0
      %v4631 = vadd.f32 0.0, %v4630
      %v4632 = vpop.f32.mrb[0].mxu0
      %4633 = vmatprep.mubr.f32.mxu0 0.0
      %4634 = vmatmul.mubr.f32.gmra.mrb[0].mxu0 %v4428
      %v4635 = vpop.f32.mrb[0].mxu0
      %v4636 = vadd.f32 0.0, %v4635
      %v4637 = vpop.f32.mrb[0].mxu0
      %4638 = vmatprep.mubr.f32.mxu0 0.0
      %4639 = vmatmul.mubr.f32.gmra.mrb[0].mxu0 %v4429
      %v4640 = vpop.f32.mrb[0].mxu0
      %v4641 = vadd.f32 0.0, %v4640
      %v4642 = vpop.f32.mrb[0].mxu0
      %4643 = vmatprep.mubr.f32.mxu0 0.0
      %4644 = vmatmul.mubr.f32.gmra.mrb[0].mxu0 %v4430
      %v4645 = vpop.f32.mrb[0].mxu0
      %v4646 = vadd.f32 0.0, %v4645
      %v4647 = vpop.f32.mrb[0].mxu0
      %4648 = vmatprep.mubr.f32.mxu0 0.0
      %4649 = vmatmul.mubr.f32.gmra.mrb[0].mxu0 %v4431
      %v4650 = vpop.f32.mrb[0].mxu0
      %v4651 = vadd.f32 0.0, %v4650
      %v4652 = vpop.f32.mrb[0].mxu0
      %4653 = vmatprep.mubr.f32.mxu0 0.0
      %4654 = vmatmul.mubr.f32.gmra.mrb[0].mxu0 %v4432
      %v4655 = vpop.f32.mrb[0].mxu0
      %v4656 = vadd.f32 0.0, %v4655
      %v4657 = vpop.f32.mrb[0].mxu0
      %4658 = vmatprep.mubr.f32.mxu0 0.0
      %4659 = vmatmul.mubr.f32.gmra.mrb[0].mxu0 %v4433
      %v4660 = vpop.f32.mrb[0].mxu0
      %v4661 = vadd.f32 0.0, %v4660
      %v4662 = vpop.f32.mrb[0].mxu0
      %4663 = vmatprep.mubr.f32.mxu0 0.0
      %4664 = vmatmul.mubr.f32.gmra.mrb[0].mxu0 %v4434
      %v4665 = vpop.f32.mrb[0].mxu0
      %v4666 = vadd.f32 0.0, %v4665
      %v4667 = vpop.f32.mrb[0].mxu0
      %4668 = vmatprep.mubr.f32.mxu0 0.0
      %4669 = vmatmul.mubr.f32.gmra.mrb[0].mxu0 %v4435
      %v4670 = vpop.f32.mrb[0].mxu0
      %v4671 = vadd.f32 0.0, %v4670
      %v4672 = vpop.f32.mrb[0].mxu0
      %4673 = vmatprep.mubr.f32.mxu0 0.0
      %4674 = vmatmul.mubr.f32.gmra.mrb[0].mxu0 %v4436
      %v4675 = vpop.f32.mrb[0].mxu0
      %v4676 = vadd.f32 0.0, %v4675
      %v4677 = vpop.f32.mrb[0].mxu0
      %4678 = vdwg.mxu0
      %v4679 = vadd.f32 %v4247, %v4521
      %v4680 = vadd.f32 %v4252, %v4526
      %v4681 = vadd.f32 %v4257, %v4531
      %v4682 = vadd.f32 %v4262, %v4536
      %v4683 = vadd.f32 %v4267, %v4541
      %v4684 = vadd.f32 %v4272, %v4546
      %v4685 = vadd.f32 %v4277, %v4551
      %v4686 = vadd.f32 %v4282, %v4556
      %v4687 = vadd.f32 %v4287, %v4561
      %v4688 = vadd.f32 %v4292, %v4566
      %v4689 = vadd.f32 %v4297, %v4571
      %v4690 = vadd.f32 %v4302, %v4576
      %v4691 = vadd.f32 %v4307, %v4581
      %v4692 = vadd.f32 %v4312, %v4586
      %v4693 = vadd.f32 %v4317, %v4591
      %v4694 = vadd.f32 %v4322, %v4596
      %v4695 = vadd.f32 %v4327, %v4601
      %v4696 = vadd.f32 %v4332, %v4606
      %v4697 = vadd.f32 %v4337, %v4611
      %v4698 = vadd.f32 %v4342, %v4616
      %v4699 = vadd.f32 %v4347, %v4621
      %v4700 = vadd.f32 %v4352, %v4626
      %v4701 = vadd.f32 %v4357, %v4631
      %v4702 = vadd.f32 %v4362, %v4636
      %v4703 = vadd.f32 %v4367, %v4641
      %v4704 = vadd.f32 %v4372, %v4646
      %v4705 = vadd.f32 %v4377, %v4651
      %v4706 = vadd.f32 %v4382, %v4656
      %v4707 = vadd.f32 %v4387, %v4661
      %v4708 = vadd.f32 %v4392, %v4666
      %v4709 = vadd.f32 %v4397, %v4671
      %v4710 = vadd.f32 %v4402, %v4676
      %s4711 = scalar_lea.vmem %s165, 608
      %v4712 = vld [vmem:[%s4711] sm:$0xff]
      %v4713 = vld [vmem:[%s4711 + $0x8] sm:$0xff]
      %v4714 = vld [vmem:[%s4711 + $0x10] sm:$0xff]
      %v4715 = vld [vmem:[%s4711 + $0x18] sm:$0xff]
      %v4716 = vld [vmem:[%s4711 + $0x20] sm:$0xff]
      %v4717 = vld [vmem:[%s4711 + $0x28] sm:$0xff]
      %v4718 = vld [vmem:[%s4711 + $0x30] sm:$0xff]
      %v4719 = vld [vmem:[%s4711 + $0x38] sm:$0xff]
      %v4720 = vld [vmem:[%s4711 + $0x40] sm:$0xff]
      %v4721 = vld [vmem:[%s4711 + $0x48] sm:$0xff]
      %v4722 = vld [vmem:[%s4711 + $0x50] sm:$0xff]
      %v4723 = vld [vmem:[%s4711 + $0x58] sm:$0xff]
      %v4724 = vld [vmem:[%s4711 + $0x60] sm:$0xff]
      %v4725 = vld [vmem:[%s4711 + $0x68] sm:$0xff]
      %v4726 = vld [vmem:[%s4711 + $0x70] sm:$0xff]
      %v4727 = vld [vmem:[%s4711 + $0x78] sm:$0xff]
      %v4728 = vld [vmem:[%s4711 + $0x80] sm:$0xff]
      %v4729 = vld [vmem:[%s4711 + $0x88] sm:$0xff]
      %v4730 = vld [vmem:[%s4711 + $0x90] sm:$0xff]
      %v4731 = vld [vmem:[%s4711 + $0x98] sm:$0xff]
      %v4732 = vld [vmem:[%s4711 + $0xa0] sm:$0xff]
      %v4733 = vld [vmem:[%s4711 + $0xa8] sm:$0xff]
      %v4734 = vld [vmem:[%s4711 + $0xb0] sm:$0xff]
      %v4735 = vld [vmem:[%s4711 + $0xb8] sm:$0xff]
      %v4736 = vld [vmem:[%s4711 + $0xc0] sm:$0xff]
      %v4737 = vld [vmem:[%s4711 + $0xc8] sm:$0xff]
      %v4738 = vld [vmem:[%s4711 + $0xd0] sm:$0xff]
      %v4739 = vld [vmem:[%s4711 + $0xd8] sm:$0xff]
      %v4740 = vld [vmem:[%s4711 + $0xe0] sm:$0xff]
      %v4741 = vld [vmem:[%s4711 + $0xe8] sm:$0xff]
      %v4742 = vld [vmem:[%s4711 + $0xf0] sm:$0xff]
      %v4743 = vld [vmem:[%s4711 + $0xf8] sm:$0xff]
      %s4744 = scalar_lea.vmem %s1, 1920
      %v4745 = vld [vmem:[%s4744] sm:$0xff]
      %v4746 = vld [vmem:[%s4744 + $0x8] sm:$0xff]
      %v4747 = vld [vmem:[%s4744 + $0x10] sm:$0xff]
      %v4748 = vld [vmem:[%s4744 + $0x18] sm:$0xff]
      %v4749 = vld [vmem:[%s4744 + $0x20] sm:$0xff]
      %v4750 = vld [vmem:[%s4744 + $0x28] sm:$0xff]
      %v4751 = vld [vmem:[%s4744 + $0x30] sm:$0xff]
      %v4752 = vld [vmem:[%s4744 + $0x38] sm:$0xff]
      %v4753 = vld [vmem:[%s4744 + $0x40] sm:$0xff]
      %v4754 = vld [vmem:[%s4744 + $0x48] sm:$0xff]
      %v4755 = vld [vmem:[%s4744 + $0x50] sm:$0xff]
      %v4756 = vld [vmem:[%s4744 + $0x58] sm:$0xff]
      %v4757 = vld [vmem:[%s4744 + $0x60] sm:$0xff]
      %v4758 = vld [vmem:[%s4744 + $0x68] sm:$0xff]
      %v4759 = vld [vmem:[%s4744 + $0x70] sm:$0xff]
      %v4760 = vld [vmem:[%s4744 + $0x78] sm:$0xff]
      %4761 = vmatprep.subr.mxu0 0.0
      %4762 = vmatpush1.msra.mxu0 %v4745
      %4763 = vmatprep.subr.mxu0 0.0
      %4764 = vmatpush1.msra.mxu0 %v4746
      %4765 = vmatprep.subr.mxu0 0.0
      %4766 = vmatpush1.msra.mxu0 %v4747
      %4767 = vmatprep.subr.mxu0 0.0
      %4768 = vmatpush1.msra.mxu0 %v4748
      %4769 = vmatprep.subr.mxu0 0.0
      %4770 = vmatpush1.msra.mxu0 %v4749
      %4771 = vmatprep.subr.mxu0 0.0
      %4772 = vmatpush1.msra.mxu0 %v4750
      %4773 = vmatprep.subr.mxu0 0.0
      %4774 = vmatpush1.msra.mxu0 %v4751
      %4775 = vmatprep.subr.mxu0 0.0
      %4776 = vmatpush1.msra.mxu0 %v4752
      %4777 = vmatprep.subr.mxu0 0.0
      %4778 = vmatpush1.msra.mxu0 %v4753
      %4779 = vmatprep.subr.mxu0 0.0
      %4780 = vmatpush1.msra.mxu0 %v4754
      %4781 = vmatprep.subr.mxu0 0.0
      %4782 = vmatpush1.msra.mxu0 %v4755
      %4783 = vmatprep.subr.mxu0 0.0
      %4784 = vmatpush1.msra.mxu0 %v4756
      %4785 = vmatprep.subr.mxu0 0.0
      %4786 = vmatpush1.msra.mxu0 %v4757
      %4787 = vmatprep.subr.mxu0 0.0
      %4788 = vmatpush1.msra.mxu0 %v4758
      %4789 = vmatprep.subr.mxu0 0.0
      %4790 = vmatpush1.msra.mxu0 %v4759
      %4791 = vmatprep.subr.mxu0 0.0
      %4792 = vmatpush1.msra.mxu0 %v4760
      %4793 = vmatprep.subr.mxu0 0.0
      %4794 = vmatpush1.msra.mxu0 0.0
      %4795 = vmatprep.subr.mxu0 0.0
      %4796 = vmatpush1.msra.mxu0 0.0
      %4797 = vmatprep.subr.mxu0 0.0
      %4798 = vmatpush1.msra.mxu0 0.0
      %4799 = vmatprep.subr.mxu0 0.0
      %4800 = vmatpush1.msra.mxu0 0.0
      %4801 = vmatprep.subr.mxu0 0.0
      %4802 = vmatpush1.msra.mxu0 0.0
      %4803 = vmatprep.subr.mxu0 0.0
      %4804 = vmatpush1.msra.mxu0 0.0
      %4805 = vmatprep.subr.mxu0 0.0
      %4806 = vmatpush1.msra.mxu0 0.0
      %4807 = vmatprep.subr.mxu0 0.0
      %4808 = vmatpush1.msra.mxu0 0.0
      %4809 = vmatprep.subr.mxu0 0.0
      %4810 = vmatpush1.msra.mxu0 0.0
      %4811 = vmatprep.subr.mxu0 0.0
      %4812 = vmatpush1.msra.mxu0 0.0
      %4813 = vmatprep.subr.mxu0 0.0
      %4814 = vmatpush1.msra.mxu0 0.0
      %4815 = vmatprep.subr.mxu0 0.0
      %4816 = vmatpush1.msra.mxu0 0.0
      %4817 = vmatprep.subr.mxu0 0.0
      %4818 = vmatpush1.msra.mxu0 0.0
      %4819 = vmatprep.subr.mxu0 0.0
      %4820 = vmatpush1.msra.mxu0 0.0
      %4821 = vmatprep.subr.mxu0 0.0
      %4822 = vmatpush1.msra.mxu0 0.0
      %4823 = vmatprep.subr.mxu0 0.0
      %4824 = vmatpush1.msra.mxu0 0.0
      %4825 = vmatprep.mubr.f32.mxu0 0.0
      %4826 = vmatmul.mubr.f32.gmra.mrb[0].mxu0 %v4712
      %v4827 = vpop.f32.mrb[0].mxu0
      %v4828 = vadd.f32 0.0, %v4827
      %v4829 = vpop.f32.mrb[0].mxu0
      %4830 = vmatprep.mubr.f32.mxu0 0.0
      %4831 = vmatmul.mubr.f32.gmra.mrb[0].mxu0 %v4713
      %v4832 = vpop.f32.mrb[0].mxu0
      %v4833 = vadd.f32 0.0, %v4832
      %v4834 = vpop.f32.mrb[0].mxu0
      %4835 = vmatprep.mubr.f32.mxu0 0.0
      %4836 = vmatmul.mubr.f32.gmra.mrb[0].mxu0 %v4714
      %v4837 = vpop.f32.mrb[0].mxu0
      %v4838 = vadd.f32 0.0, %v4837
      %v4839 = vpop.f32.mrb[0].mxu0
      %4840 = vmatprep.mubr.f32.mxu0 0.0
      %4841 = vmatmul.mubr.f32.gmra.mrb[0].mxu0 %v4715
      %v4842 = vpop.f32.mrb[0].mxu0
      %v4843 = vadd.f32 0.0, %v4842
      %v4844 = vpop.f32.mrb[0].mxu0
      %4845 = vmatprep.mubr.f32.mxu0 0.0
      %4846 = vmatmul.mubr.f32.gmra.mrb[0].mxu0 %v4716
      %v4847 = vpop.f32.mrb[0].mxu0
      %v4848 = vadd.f32 0.0, %v4847
      %v4849 = vpop.f32.mrb[0].mxu0
      %4850 = vmatprep.mubr.f32.mxu0 0.0
      %4851 = vmatmul.mubr.f32.gmra.mrb[0].mxu0 %v4717
      %v4852 = vpop.f32.mrb[0].mxu0
      %v4853 = vadd.f32 0.0, %v4852
      %v4854 = vpop.f32.mrb[0].mxu0
      %4855 = vmatprep.mubr.f32.mxu0 0.0
      %4856 = vmatmul.mubr.f32.gmra.mrb[0].mxu0 %v4718
      %v4857 = vpop.f32.mrb[0].mxu0
      %v4858 = vadd.f32 0.0, %v4857
      %v4859 = vpop.f32.mrb[0].mxu0
      %4860 = vmatprep.mubr.f32.mxu0 0.0
      %4861 = vmatmul.mubr.f32.gmra.mrb[0].mxu0 %v4719
      %v4862 = vpop.f32.mrb[0].mxu0
      %v4863 = vadd.f32 0.0, %v4862
      %v4864 = vpop.f32.mrb[0].mxu0
      %4865 = vmatprep.mubr.f32.mxu0 0.0
      %4866 = vmatmul.mubr.f32.gmra.mrb[0].mxu0 %v4720
      %v4867 = vpop.f32.mrb[0].mxu0
      %v4868 = vadd.f32 0.0, %v4867
      %v4869 = vpop.f32.mrb[0].mxu0
      %4870 = vmatprep.mubr.f32.mxu0 0.0
      %4871 = vmatmul.mubr.f32.gmra.mrb[0].mxu0 %v4721
      %v4872 = vpop.f32.mrb[0].mxu0
      %v4873 = vadd.f32 0.0, %v4872
      %v4874 = vpop.f32.mrb[0].mxu0
      %4875 = vmatprep.mubr.f32.mxu0 0.0
      %4876 = vmatmul.mubr.f32.gmra.mrb[0].mxu0 %v4722
      %v4877 = vpop.f32.mrb[0].mxu0
      %v4878 = vadd.f32 0.0, %v4877
      %v4879 = vpop.f32.mrb[0].mxu0
      %4880 = vmatprep.mubr.f32.mxu0 0.0
      %4881 = vmatmul.mubr.f32.gmra.mrb[0].mxu0 %v4723
      %v4882 = vpop.f32.mrb[0].mxu0
      %v4883 = vadd.f32 0.0, %v4882
      %v4884 = vpop.f32.mrb[0].mxu0
      %4885 = vmatprep.mubr.f32.mxu0 0.0
      %4886 = vmatmul.mubr.f32.gmra.mrb[0].mxu0 %v4724
      %v4887 = vpop.f32.mrb[0].mxu0
      %v4888 = vadd.f32 0.0, %v4887
      %v4889 = vpop.f32.mrb[0].mxu0
      %4890 = vmatprep.mubr.f32.mxu0 0.0
      %4891 = vmatmul.mubr.f32.gmra.mrb[0].mxu0 %v4725
      %v4892 = vpop.f32.mrb[0].mxu0
      %v4893 = vadd.f32 0.0, %v4892
      %v4894 = vpop.f32.mrb[0].mxu0
      %4895 = vmatprep.mubr.f32.mxu0 0.0
      %4896 = vmatmul.mubr.f32.gmra.mrb[0].mxu0 %v4726
      %v4897 = vpop.f32.mrb[0].mxu0
      %v4898 = vadd.f32 0.0, %v4897
      %v4899 = vpop.f32.mrb[0].mxu0
      %4900 = vmatprep.mubr.f32.mxu0 0.0
      %4901 = vmatmul.mubr.f32.gmra.mrb[0].mxu0 %v4727
      %v4902 = vpop.f32.mrb[0].mxu0
      %v4903 = vadd.f32 0.0, %v4902
      %v4904 = vpop.f32.mrb[0].mxu0
      %4905 = vmatprep.mubr.f32.mxu0 0.0
      %4906 = vmatmul.mubr.f32.gmra.mrb[0].mxu0 %v4728
      %v4907 = vpop.f32.mrb[0].mxu0
      %v4908 = vadd.f32 0.0, %v4907
      %v4909 = vpop.f32.mrb[0].mxu0
      %4910 = vmatprep.mubr.f32.mxu0 0.0
      %4911 = vmatmul.mubr.f32.gmra.mrb[0].mxu0 %v4729
      %v4912 = vpop.f32.mrb[0].mxu0
      %v4913 = vadd.f32 0.0, %v4912
      %v4914 = vpop.f32.mrb[0].mxu0
      %4915 = vmatprep.mubr.f32.mxu0 0.0
      %4916 = vmatmul.mubr.f32.gmra.mrb[0].mxu0 %v4730
      %v4917 = vpop.f32.mrb[0].mxu0
      %v4918 = vadd.f32 0.0, %v4917
      %v4919 = vpop.f32.mrb[0].mxu0
      %4920 = vmatprep.mubr.f32.mxu0 0.0
      %4921 = vmatmul.mubr.f32.gmra.mrb[0].mxu0 %v4731
      %v4922 = vpop.f32.mrb[0].mxu0
      %v4923 = vadd.f32 0.0, %v4922
      %v4924 = vpop.f32.mrb[0].mxu0
      %4925 = vmatprep.mubr.f32.mxu0 0.0
      %4926 = vmatmul.mubr.f32.gmra.mrb[0].mxu0 %v4732
      %v4927 = vpop.f32.mrb[0].mxu0
      %v4928 = vadd.f32 0.0, %v4927
      %v4929 = vpop.f32.mrb[0].mxu0
      %4930 = vmatprep.mubr.f32.mxu0 0.0
      %4931 = vmatmul.mubr.f32.gmra.mrb[0].mxu0 %v4733
      %v4932 = vpop.f32.mrb[0].mxu0
      %v4933 = vadd.f32 0.0, %v4932
      %v4934 = vpop.f32.mrb[0].mxu0
      %4935 = vmatprep.mubr.f32.mxu0 0.0
      %4936 = vmatmul.mubr.f32.gmra.mrb[0].mxu0 %v4734
      %v4937 = vpop.f32.mrb[0].mxu0
      %v4938 = vadd.f32 0.0, %v4937
      %v4939 = vpop.f32.mrb[0].mxu0
      %4940 = vmatprep.mubr.f32.mxu0 0.0
      %4941 = vmatmul.mubr.f32.gmra.mrb[0].mxu0 %v4735
      %v4942 = vpop.f32.mrb[0].mxu0
      %v4943 = vadd.f32 0.0, %v4942
      %v4944 = vpop.f32.mrb[0].mxu0
      %4945 = vmatprep.mubr.f32.mxu0 0.0
      %4946 = vmatmul.mubr.f32.gmra.mrb[0].mxu0 %v4736
      %v4947 = vpop.f32.mrb[0].mxu0
      %v4948 = vadd.f32 0.0, %v4947
      %v4949 = vpop.f32.mrb[0].mxu0
      %4950 = vmatprep.mubr.f32.mxu0 0.0
      %4951 = vmatmul.mubr.f32.gmra.mrb[0].mxu0 %v4737
      %v4952 = vpop.f32.mrb[0].mxu0
      %v4953 = vadd.f32 0.0, %v4952
      %v4954 = vpop.f32.mrb[0].mxu0
      %4955 = vmatprep.mubr.f32.mxu0 0.0
      %4956 = vmatmul.mubr.f32.gmra.mrb[0].mxu0 %v4738
      %v4957 = vpop.f32.mrb[0].mxu0
      %v4958 = vadd.f32 0.0, %v4957
      %v4959 = vpop.f32.mrb[0].mxu0
      %4960 = vmatprep.mubr.f32.mxu0 0.0
      %4961 = vmatmul.mubr.f32.gmra.mrb[0].mxu0 %v4739
      %v4962 = vpop.f32.mrb[0].mxu0
      %v4963 = vadd.f32 0.0, %v4962
      %v4964 = vpop.f32.mrb[0].mxu0
      %4965 = vmatprep.mubr.f32.mxu0 0.0
      %4966 = vmatmul.mubr.f32.gmra.mrb[0].mxu0 %v4740
      %v4967 = vpop.f32.mrb[0].mxu0
      %v4968 = vadd.f32 0.0, %v4967
      %v4969 = vpop.f32.mrb[0].mxu0
      %4970 = vmatprep.mubr.f32.mxu0 0.0
      %4971 = vmatmul.mubr.f32.gmra.mrb[0].mxu0 %v4741
      %v4972 = vpop.f32.mrb[0].mxu0
      %v4973 = vadd.f32 0.0, %v4972
      %v4974 = vpop.f32.mrb[0].mxu0
      %4975 = vmatprep.mubr.f32.mxu0 0.0
      %4976 = vmatmul.mubr.f32.gmra.mrb[0].mxu0 %v4742
      %v4977 = vpop.f32.mrb[0].mxu0
      %v4978 = vadd.f32 0.0, %v4977
      %v4979 = vpop.f32.mrb[0].mxu0
      %4980 = vmatprep.mubr.f32.mxu0 0.0
      %4981 = vmatmul.mubr.f32.gmra.mrb[0].mxu0 %v4743
      %v4982 = vpop.f32.mrb[0].mxu0
      %v4983 = vadd.f32 0.0, %v4982
      %v4984 = vpop.f32.mrb[0].mxu0
      %4985 = vdwg.mxu0
      %v4986 = vadd.f32 %v4679, %v4828
      %v4987 = vadd.f32 %v4680, %v4833
      %v4988 = vadd.f32 %v4681, %v4838
      %v4989 = vadd.f32 %v4682, %v4843
      %v4990 = vadd.f32 %v4683, %v4848
      %v4991 = vadd.f32 %v4684, %v4853
      %v4992 = vadd.f32 %v4685, %v4858
      %v4993 = vadd.f32 %v4686, %v4863
      %v4994 = vadd.f32 %v4687, %v4868
      %v4995 = vadd.f32 %v4688, %v4873
      %v4996 = vadd.f32 %v4689, %v4878
      %v4997 = vadd.f32 %v4690, %v4883
      %v4998 = vadd.f32 %v4691, %v4888
      %v4999 = vadd.f32 %v4692, %v4893
      %v5000 = vadd.f32 %v4693, %v4898
      %v5001 = vadd.f32 %v4694, %v4903
      %v5002 = vadd.f32 %v4695, %v4908
      %v5003 = vadd.f32 %v4696, %v4913
      %v5004 = vadd.f32 %v4697, %v4918
      %v5005 = vadd.f32 %v4698, %v4923
      %v5006 = vadd.f32 %v4699, %v4928
      %v5007 = vadd.f32 %v4700, %v4933
      %v5008 = vadd.f32 %v4701, %v4938
      %v5009 = vadd.f32 %v4702, %v4943
      %v5010 = vadd.f32 %v4703, %v4948
      %v5011 = vadd.f32 %v4704, %v4953
      %v5012 = vadd.f32 %v4705, %v4958
      %v5013 = vadd.f32 %v4706, %v4963
      %v5014 = vadd.f32 %v4707, %v4968
      %v5015 = vadd.f32 %v4708, %v4973
      %v5016 = vadd.f32 %v4709, %v4978
      %v5017 = vadd.f32 %v4710, %v4983
      %v5018 = vadd.f32 %v4986, %v1338
      %v5019 = vadd.f32 %v4987, %v1338
      %v5020 = vadd.f32 %v4988, %v1338
      %v5021 = vadd.f32 %v4989, %v1338
      %v5022 = vadd.f32 %v4990, %v1338
      %v5023 = vadd.f32 %v4991, %v1338
      %v5024 = vadd.f32 %v4992, %v1338
      %v5025 = vadd.f32 %v4993, %v1338
      %v5026 = vadd.f32 %v4994, %v1338
      %v5027 = vadd.f32 %v4995, %v1338
      %v5028 = vadd.f32 %v4996, %v1338
      %v5029 = vadd.f32 %v4997, %v1338
      %v5030 = vadd.f32 %v4998, %v1338
      %v5031 = vadd.f32 %v4999, %v1338
      %v5032 = vadd.f32 %v5000, %v1338
      %v5033 = vadd.f32 %v5001, %v1338
      %v5034 = vadd.f32 %v5002, %v1338
      %v5035 = vadd.f32 %v5003, %v1338
      %v5036 = vadd.f32 %v5004, %v1338
      %v5037 = vadd.f32 %v5005, %v1338
      %v5038 = vadd.f32 %v5006, %v1338
      %v5039 = vadd.f32 %v5007, %v1338
      %v5040 = vadd.f32 %v5008, %v1338
      %v5041 = vadd.f32 %v5009, %v1338
      %v5042 = vadd.f32 %v5010, %v1338
      %v5043 = vadd.f32 %v5011, %v1338
      %v5044 = vadd.f32 %v5012, %v1338
      %v5045 = vadd.f32 %v5013, %v1338
      %v5046 = vadd.f32 %v5014, %v1338
      %v5047 = vadd.f32 %v5015, %v1338
      %v5048 = vadd.f32 %v5016, %v1338
      %v5049 = vadd.f32 %v5017, %v1338
      %5050 = vst [vmem:[%s3824 + $0x8] sm:$0xff] %v5018
      %5051 = vst [vmem:[%s3824 + $0x18] sm:$0xff] %v5019
      %5052 = vst [vmem:[%s3824 + $0x48] sm:$0xff] %v5020
      %5053 = vst [vmem:[%s3824 + $0x58] sm:$0xff] %v5021
      %5054 = vst [vmem:[%s3824 + $0x88] sm:$0xff] %v5022
      %5055 = vst [vmem:[%s3824 + $0x98] sm:$0xff] %v5023
      %5056 = vst [vmem:[%s3824 + $0xc8] sm:$0xff] %v5024
      %5057 = vst [vmem:[%s3824 + $0xd8] sm:$0xff] %v5025
      %5058 = vst [vmem:[%s3824 + $0x108] sm:$0xff] %v5026
      %5059 = vst [vmem:[%s3824 + $0x118] sm:$0xff] %v5027
      %5060 = vst [vmem:[%s3824 + $0x148] sm:$0xff] %v5028
      %5061 = vst [vmem:[%s3824 + $0x158] sm:$0xff] %v5029
      %5062 = vst [vmem:[%s3824 + $0x188] sm:$0xff] %v5030
      %5063 = vst [vmem:[%s3824 + $0x198] sm:$0xff] %v5031
      %5064 = vst [vmem:[%s3824 + $0x1c8] sm:$0xff] %v5032
      %5065 = vst [vmem:[%s3824 + $0x1d8] sm:$0xff] %v5033
      %5066 = vst [vmem:[%s3824 + $0x208] sm:$0xff] %v5034
      %5067 = vst [vmem:[%s3824 + $0x218] sm:$0xff] %v5035
      %5068 = vst [vmem:[%s3824 + $0x248] sm:$0xff] %v5036
      %5069 = vst [vmem:[%s3824 + $0x258] sm:$0xff] %v5037
      %5070 = vst [vmem:[%s3824 + $0x288] sm:$0xff] %v5038
      %5071 = vst [vmem:[%s3824 + $0x298] sm:$0xff] %v5039
      %5072 = vst [vmem:[%s3824 + $0x2c8] sm:$0xff] %v5040
      %5073 = vst [vmem:[%s3824 + $0x2d8] sm:$0xff] %v5041
      %5074 = vst [vmem:[%s3824 + $0x308] sm:$0xff] %v5042
      %5075 = vst [vmem:[%s3824 + $0x318] sm:$0xff] %v5043
      %5076 = vst [vmem:[%s3824 + $0x348] sm:$0xff] %v5044
      %5077 = vst [vmem:[%s3824 + $0x358] sm:$0xff] %v5045
      %5078 = vst [vmem:[%s3824 + $0x388] sm:$0xff] %v5046
      %5079 = vst [vmem:[%s3824 + $0x398] sm:$0xff] %v5047
      %5080 = vst [vmem:[%s3824 + $0x3c8] sm:$0xff] %v5048
      %5081 = vst [vmem:[%s3824 + $0x3d8] sm:$0xff] %v5049
      %p5082 = scmp.lt.s32.totalorder %s14, 1
      %s5083 = scalar_select %p5082, %s14, 1
      %s5084 = smul.addr %s5083, 128
      %s5085 = smul.addr %s5084, 8
      %s5086 = scalar_lea.vmem %s3, %s5085
      // Predicated region
      $region33: #{_upsample_apply.1} parent=31 // pred_check
        %p5087 = pneg %p100
      $region34: #{_upsample_apply.1} parent=31 // pred_check_branch
        %5089 = sbr.rel (%p5087) target = $region36
      $region35: #{_upsample_apply.1} parent=31 // pred_region
        _
      $region36: #{_upsample_apply.1} parent=31 // pred_fallthru
        _
    $region32: #{_upsample_apply.1} parent=5 // pred_fallthru
      _
    %p5090 = scmp.le.s32.totalorder 2, %s9
    // Predicated region
    $region37: #{_upsample_apply.1} parent=5 // pred_check
      %p5091 = pneg %p5090
    $region38: #{_upsample_apply.1} parent=5 // pred_check_branch
      %5093 = sbr.rel (%p5091) target = $region40
    $region39: #{_upsample_apply.1} parent=5 // pred_region
      %s5094 = ssub.s32 %s9, 2
      // Predicated region
      $region41: #{_upsample_apply.1} parent=39 // pred_check
        %p5095 = pneg %p106
      $region42: #{_upsample_apply.1} parent=39 // pred_check_branch
        %5097 = sbr.rel (%p5095) target = $region44
      $region43: #{_upsample_apply.1} parent=39 // pred_region
        %p5098 = scmp.lt.s32.totalorder %s15, 1
        %s5099 = scalar_select %p5098, %s15, 1
        %s5100 = smul.addr %s5099, 128
        %s5101 = smul.addr %s5100, 8
        %s5102 = scalar_lea.vmem %s3, %s5101
      $region44: #{_upsample_apply.1} parent=39 // pred_fallthru
        _
    $region40: #{_upsample_apply.1} parent=5 // pred_fallthru
      _
  $region6: #{_upsample_apply.1} parent=0 // loop_footer
    %s13 = sadd.s32 1, %s9
  $region7: #{_upsample_apply.1} parent=0 // loop_footer_branch
    %8 = sbr.rel target = $region3
  $region8: #{_upsample_apply.1} parent=0 // loop_exit
    _

</llo_original>
